<compile_context>
chip_gen: v5e
topology: v5e:2x2
jax: 0.10.0
libtpu: 0.0.40
codegen_flags: <defaults>
</compile_context>

<pallas_src>
import jax
import jax.numpy as jnp
from jax.experimental import pallas as pl
from jax.experimental.pallas import tpu as pltpu


# ------------------------------ kernel pieces -------------------------------

def _input_proj(x_all, w_ih_ref, b_ih_ref):
    """Hoisted input projection for all timesteps.

    x_all: (T*B, Din) value; w_ih_ref: (3, Din, H); b_ih_ref: (3, 1, H).
    Returns three (T*B, H) gate pre-activations (r, z, n).
    """
    return tuple(
        jnp.dot(x_all, w_ih_ref[g], preferred_element_type=jnp.float32) + b_ih_ref[g]
        for g in range(3)
    )


def _gru_cell(h, gi_r, gi_z, gi_n, w_hh_ref, b_hh_ref):
    """One GRU cell update (PyTorch gate order r, z, n); all math in f32."""
    gh_r = jnp.dot(h, w_hh_ref[0], preferred_element_type=jnp.float32) + b_hh_ref[0]
    gh_z = jnp.dot(h, w_hh_ref[1], preferred_element_type=jnp.float32) + b_hh_ref[1]
    gh_n = jnp.dot(h, w_hh_ref[2], preferred_element_type=jnp.float32) + b_hh_ref[2]
    r = jax.nn.sigmoid(gi_r + gh_r)
    z = jax.nn.sigmoid(gi_z + gh_z)
    n = jnp.tanh(gi_n + r * gh_n)
    return (1.0 - z) * n + z * h


def make_fused_gru_fc_kernel(num_layers):
    """Builds the fused kernel: num_layers GRU layers + FC head, one invocation.

    Ref layout (positional):
      x_ref,
      [w_ih, w_hh, b_ih, b_hh] * num_layers,
      fc_w_ref, fc_b_ref,
      out_ref,
      seq_scratch_ref (VMEM, (T*B, H))
    """
    def kernel(*refs):
        x_ref = refs[0]
        layer_refs = [refs[1 + 4 * l: 1 + 4 * (l + 1)] for l in range(num_layers)]
        fc_w_ref = refs[1 + 4 * num_layers]
        fc_b_ref = refs[2 + 4 * num_layers]
        out_ref = refs[3 + 4 * num_layers]
        seq_ref = refs[4 + 4 * num_layers]   # VMEM scratch: (T*B, H)

        T, B, D = x_ref.shape
        H = layer_refs[0][1].shape[-1]

        # Current layer input, flattened time-major: (T*B, Din).
        x_all = x_ref[...].reshape(T * B, D)

        h_last = None
        for l, (w_ih_ref, w_hh_ref, b_ih_ref, b_hh_ref) in enumerate(layer_refs):
            is_last_layer = (l == num_layers - 1)

            # ---- hoisted input projection (no dependence on h) ----
            gi_r, gi_z, gi_n = _input_proj(x_all, w_ih_ref, b_ih_ref)

            # ---- sequential recurrence (fully unrolled; T is small/static) ----
            h = jnp.zeros((B, H), jnp.float32)
            for t in range(T):
                sl = slice(t * B, (t + 1) * B)
                h = _gru_cell(h, gi_r[sl], gi_z[sl], gi_n[sl], w_hh_ref, b_hh_ref)
                if not is_last_layer:
                    seq_ref[sl, :] = h       # stage this layer's output sequence

            if not is_last_layer:
                x_all = seq_ref[...]          # (T*B, H) -> next layer's input
            h_last = h

        # ---- FC head on the final hidden state only; single HBM store ----
        out_ref[...] = (
            jnp.dot(h_last, fc_w_ref[...], preferred_element_type=jnp.float32)
            + fc_b_ref[...]
        )

    return kernel


# ------------------------------- model wrapper -------------------------------

def gru_model(x_btd, params):
    """Matches GRU.forward: x (B, T, D) -> (B, output_dim)."""
    x_tbd = jnp.transpose(x_btd, (1, 0, 2)).astype(jnp.float32)   # time-major
    T, B, _ = x_tbd.shape
    num_layers = len(params["gru"])
    H = params["gru"][0][1].shape[-1]
    O = params["fc_w"].shape[-1]

    flat_args = [x_tbd]
    for layer_params in params["gru"]:
        flat_args.extend(layer_params)
    flat_args.extend([params["fc_w"], params["fc_b"]])

    vmem_spec = lambda: pl.BlockSpec(memory_space=pltpu.MemorySpace.VMEM)
    return pl.pallas_call(
        make_fused_gru_fc_kernel(num_layers),
        out_shape=jax.ShapeDtypeStruct((B, O), jnp.float32),
        in_specs=[vmem_spec() for _ in flat_args],
        out_specs=vmem_spec(),
        scratch_shapes=[pltpu.VMEM((T * B, H), jnp.float32)],
    )(*flat_args)


# ----------------------------- pure-JAX reference ----------------------------

def gru_layer_ref(x_tbd, w_ih, w_hh, b_ih, b_hh):
    H = w_hh.shape[-1]
    B = x_tbd.shape[1]

    def step(h, x_t):
        gi = [x_t @ w_ih[g] + b_ih[g] for g in range(3)]
        gh = [h @ w_hh[g] + b_hh[g] for g in range(3)]
        r = jax.nn.sigmoid(gi[0] + gh[0])
        z = jax.nn.sigmoid(gi[1] + gh[1])
        n = jnp.tanh(gi[2] + r * gh[2])
        h_new = (1.0 - z) * n + z * h
        return h_new, h_new

    h0 = jnp.zeros((B, H), jnp.float32)
    _, ys = jax.lax.scan(step, h0, x_tbd)
    return ys


def gru_model_ref(x_btd, params):
    x_tbd = jnp.transpose(x_btd, (1, 0, 2))
    h_seq = x_tbd
    for layer_params in params["gru"]:
        h_seq = gru_layer_ref(h_seq, *layer_params)
    return h_seq[-1] @ params["fc_w"] + params["fc_b"]


# -------------------------------- parameters ---------------------------------

def init_params(key, input_dim, hidden_dim, num_layers, output_dim):
    """Deterministic init mimicking PyTorch's U(-1/sqrt(H), 1/sqrt(H)).

    Weights are stored gate-major: w_ih (3, Din, H), w_hh (3, H, H),
    biases (3, 1, H); gate order (r, z, n) as in PyTorch.
    """
    bound = 1.0 / float(hidden_dim) ** 0.5
    params = {"gru": []}
    for layer in range(num_layers):
        in_dim = input_dim if layer == 0 else hidden_dim
        key, k1, k2, k3, k4 = jax.random.split(key, 5)
        w_ih = jax.random.uniform(k1, (3, in_dim, hidden_dim), jnp.float32, -bound, bound)
        w_hh = jax.random.uniform(k2, (3, hidden_dim, hidden_dim), jnp.float32, -bound, bound)
        b_ih = jax.random.uniform(k3, (3, 1, hidden_dim), jnp.float32, -bound, bound)
        b_hh = jax.random.uniform(k4, (3, 1, hidden_dim), jnp.float32, -bound, bound)
        params["gru"].append((w_ih, w_hh, b_ih, b_hh))
    key, k5, k6 = jax.random.split(key, 3)
    params["fc_w"] = jax.random.uniform(k5, (hidden_dim, output_dim), jnp.float32, -bound, bound)
    params["fc_b"] = jax.random.uniform(k6, (1, output_dim), jnp.float32, -bound, bound)
    return params


# ----------------------------------- main -------------------------------------

if __name__ == "__main__":
    B, T, D, H, L, O = 2, 8, 1, 32, 2, 1

    key = jax.random.PRNGKey(0)
    key, kx, kp = jax.random.split(key, 3)
    x = jax.random.normal(kx, (B, T, D), dtype=jnp.float32)
    params = init_params(kp, D, H, L, O)

    out = jax.block_until_ready(gru_model(x, params))
    ref = gru_model_ref(x, params)

    assert out.shape == (B, O), out.shape
    assert jnp.allclose(out, ref, atol=1e-4, rtol=1e-4), (out, ref)

    print("KERNEL_OK")
</pallas_src>

<mosaic_0001>
module attributes {stable_mosaic.version = 11 : i64} {
  func.func @kernel(%arg0: memref<8x2x1xf32, #tpu.memory_space<vmem>>, %arg1: memref<3x1x32xf32, #tpu.memory_space<vmem>>, %arg2: memref<3x32x32xf32, #tpu.memory_space<vmem>>, %arg3: memref<3x1x32xf32, #tpu.memory_space<vmem>>, %arg4: memref<3x1x32xf32, #tpu.memory_space<vmem>>, %arg5: memref<3x32x32xf32, #tpu.memory_space<vmem>>, %arg6: memref<3x32x32xf32, #tpu.memory_space<vmem>>, %arg7: memref<3x1x32xf32, #tpu.memory_space<vmem>>, %arg8: memref<3x1x32xf32, #tpu.memory_space<vmem>>, %arg9: memref<32x1xf32, #tpu.memory_space<vmem>>, %arg10: memref<1x1xf32, #tpu.memory_space<vmem>>, %arg11: memref<2x1xf32, #tpu.memory_space<vmem>>, %arg12: memref<16x32xf32, #tpu.memory_space<vmem>>) attributes {dimension_semantics = [], scalar_prefetch = 0 : i64, scratch_operands = 1 : i64, tpu.core_type = #tpu.core_type<tc>} {
    %c0 = arith.constant 0 : index
    %c0_0 = arith.constant 0 : index
    %c0_1 = arith.constant 0 : index
    %0 = vector.load %arg0[%c0, %c0_0, %c0_1] : memref<8x2x1xf32, #tpu.memory_space<vmem>>, vector<8x2x1xf32>
    %1 = vector.shape_cast %0 : vector<8x2x1xf32> to vector<16x1xf32>
    %c0_2 = arith.constant 0 : index
    %c0_3 = arith.constant 0 : index
    %c0_4 = arith.constant 0 : index
    %2 = vector.load %arg1[%c0_2, %c0_3, %c0_4] : memref<3x1x32xf32, #tpu.memory_space<vmem>>, vector<1x1x32xf32>
    %3 = vector.shape_cast %2 : vector<1x1x32xf32> to vector<1x32xf32>
    %cst = arith.constant dense<0.000000e+00> : vector<16x32xf32>
    %4 = tpu.matmul %1, %3, %cst {dimension_numbers = #tpu.dot_dimension_numbers<[1], [0], [0], [1], [0, 0, 1, 1], [], []>} : vector<16x1xf32>, vector<1x32xf32>, vector<16x32xf32> -> vector<16x32xf32>
    %c0_5 = arith.constant 0 : index
    %c0_6 = arith.constant 0 : index
    %c0_7 = arith.constant 0 : index
    %5 = vector.load %arg3[%c0_5, %c0_6, %c0_7] : memref<3x1x32xf32, #tpu.memory_space<vmem>>, vector<1x1x32xf32>
    %6 = vector.shape_cast %5 : vector<1x1x32xf32> to vector<1x32xf32>
    %7 = vector.broadcast %6 : vector<1x32xf32> to vector<16x32xf32>
    %8 = arith.addf %4, %7 : vector<16x32xf32>
    %c1 = arith.constant 1 : index
    %c0_8 = arith.constant 0 : index
    %c0_9 = arith.constant 0 : index
    %9 = vector.load %arg1[%c1, %c0_8, %c0_9] : memref<3x1x32xf32, #tpu.memory_space<vmem>>, vector<1x1x32xf32>
    %10 = vector.shape_cast %9 : vector<1x1x32xf32> to vector<1x32xf32>
    %cst_10 = arith.constant dense<0.000000e+00> : vector<16x32xf32>
    %11 = tpu.matmul %1, %10, %cst_10 {dimension_numbers = #tpu.dot_dimension_numbers<[1], [0], [0], [1], [0, 0, 1, 1], [], []>} : vector<16x1xf32>, vector<1x32xf32>, vector<16x32xf32> -> vector<16x32xf32>
    %c1_11 = arith.constant 1 : index
    %c0_12 = arith.constant 0 : index
    %c0_13 = arith.constant 0 : index
    %12 = vector.load %arg3[%c1_11, %c0_12, %c0_13] : memref<3x1x32xf32, #tpu.memory_space<vmem>>, vector<1x1x32xf32>
    %13 = vector.shape_cast %12 : vector<1x1x32xf32> to vector<1x32xf32>
    %14 = vector.broadcast %13 : vector<1x32xf32> to vector<16x32xf32>
    %15 = arith.addf %11, %14 : vector<16x32xf32>
    %c2 = arith.constant 2 : index
    %c0_14 = arith.constant 0 : index
    %c0_15 = arith.constant 0 : index
    %16 = vector.load %arg1[%c2, %c0_14, %c0_15] : memref<3x1x32xf32, #tpu.memory_space<vmem>>, vector<1x1x32xf32>
    %17 = vector.shape_cast %16 : vector<1x1x32xf32> to vector<1x32xf32>
    %cst_16 = arith.constant dense<0.000000e+00> : vector<16x32xf32>
    %18 = tpu.matmul %1, %17, %cst_16 {dimension_numbers = #tpu.dot_dimension_numbers<[1], [0], [0], [1], [0, 0, 1, 1], [], []>} : vector<16x1xf32>, vector<1x32xf32>, vector<16x32xf32> -> vector<16x32xf32>
    %c2_17 = arith.constant 2 : index
    %c0_18 = arith.constant 0 : index
    %c0_19 = arith.constant 0 : index
    %19 = vector.load %arg3[%c2_17, %c0_18, %c0_19] : memref<3x1x32xf32, #tpu.memory_space<vmem>>, vector<1x1x32xf32>
    %20 = vector.shape_cast %19 : vector<1x1x32xf32> to vector<1x32xf32>
    %21 = vector.broadcast %20 : vector<1x32xf32> to vector<16x32xf32>
    %22 = arith.addf %18, %21 : vector<16x32xf32>
    %cst_20 = arith.constant 0.000000e+00 : f32
    %23 = vector.broadcast %cst_20 : f32 to vector<2x32xf32>
    %24 = vector.extract_strided_slice %8 {offsets = [0, 0], sizes = [2, 32], strides = [1, 1]} : vector<16x32xf32> to vector<2x32xf32>
    %25 = vector.extract_strided_slice %15 {offsets = [0, 0], sizes = [2, 32], strides = [1, 1]} : vector<16x32xf32> to vector<2x32xf32>
    %26 = vector.extract_strided_slice %22 {offsets = [0, 0], sizes = [2, 32], strides = [1, 1]} : vector<16x32xf32> to vector<2x32xf32>
    %c0_21 = arith.constant 0 : index
    %c0_22 = arith.constant 0 : index
    %c0_23 = arith.constant 0 : index
    %27 = vector.load %arg2[%c0_21, %c0_22, %c0_23] : memref<3x32x32xf32, #tpu.memory_space<vmem>>, vector<1x32x32xf32>
    %28 = vector.shape_cast %27 : vector<1x32x32xf32> to vector<32x32xf32>
    %cst_24 = arith.constant dense<0.000000e+00> : vector<2x32xf32>
    %29 = tpu.matmul %23, %28, %cst_24 {dimension_numbers = #tpu.dot_dimension_numbers<[1], [0], [0], [1], [0, 0, 1, 1], [], []>} : vector<2x32xf32>, vector<32x32xf32>, vector<2x32xf32> -> vector<2x32xf32>
    %c0_25 = arith.constant 0 : index
    %c0_26 = arith.constant 0 : index
    %c0_27 = arith.constant 0 : index
    %30 = vector.load %arg4[%c0_25, %c0_26, %c0_27] : memref<3x1x32xf32, #tpu.memory_space<vmem>>, vector<1x1x32xf32>
    %31 = vector.shape_cast %30 : vector<1x1x32xf32> to vector<1x32xf32>
    %32 = vector.broadcast %31 : vector<1x32xf32> to vector<2x32xf32>
    %33 = arith.addf %29, %32 : vector<2x32xf32>
    %c1_28 = arith.constant 1 : index
    %c0_29 = arith.constant 0 : index
    %c0_30 = arith.constant 0 : index
    %34 = vector.load %arg2[%c1_28, %c0_29, %c0_30] : memref<3x32x32xf32, #tpu.memory_space<vmem>>, vector<1x32x32xf32>
    %35 = vector.shape_cast %34 : vector<1x32x32xf32> to vector<32x32xf32>
    %cst_31 = arith.constant dense<0.000000e+00> : vector<2x32xf32>
    %36 = tpu.matmul %23, %35, %cst_31 {dimension_numbers = #tpu.dot_dimension_numbers<[1], [0], [0], [1], [0, 0, 1, 1], [], []>} : vector<2x32xf32>, vector<32x32xf32>, vector<2x32xf32> -> vector<2x32xf32>
    %c1_32 = arith.constant 1 : index
    %c0_33 = arith.constant 0 : index
    %c0_34 = arith.constant 0 : index
    %37 = vector.load %arg4[%c1_32, %c0_33, %c0_34] : memref<3x1x32xf32, #tpu.memory_space<vmem>>, vector<1x1x32xf32>
    %38 = vector.shape_cast %37 : vector<1x1x32xf32> to vector<1x32xf32>
    %39 = vector.broadcast %38 : vector<1x32xf32> to vector<2x32xf32>
    %40 = arith.addf %36, %39 : vector<2x32xf32>
    %c2_35 = arith.constant 2 : index
    %c0_36 = arith.constant 0 : index
    %c0_37 = arith.constant 0 : index
    %41 = vector.load %arg2[%c2_35, %c0_36, %c0_37] : memref<3x32x32xf32, #tpu.memory_space<vmem>>, vector<1x32x32xf32>
    %42 = vector.shape_cast %41 : vector<1x32x32xf32> to vector<32x32xf32>
    %cst_38 = arith.constant dense<0.000000e+00> : vector<2x32xf32>
    %43 = tpu.matmul %23, %42, %cst_38 {dimension_numbers = #tpu.dot_dimension_numbers<[1], [0], [0], [1], [0, 0, 1, 1], [], []>} : vector<2x32xf32>, vector<32x32xf32>, vector<2x32xf32> -> vector<2x32xf32>
    %c2_39 = arith.constant 2 : index
    %c0_40 = arith.constant 0 : index
    %c0_41 = arith.constant 0 : index
    %44 = vector.load %arg4[%c2_39, %c0_40, %c0_41] : memref<3x1x32xf32, #tpu.memory_space<vmem>>, vector<1x1x32xf32>
    %45 = vector.shape_cast %44 : vector<1x1x32xf32> to vector<1x32xf32>
    %46 = vector.broadcast %45 : vector<1x32xf32> to vector<2x32xf32>
    %47 = arith.addf %43, %46 : vector<2x32xf32>
    %48 = arith.addf %24, %33 : vector<2x32xf32>
    %49 = arith.negf %48 : vector<2x32xf32>
    %50 = math.exp %49 : vector<2x32xf32>
    %cst_42 = arith.constant 1.000000e+00 : f32
    %51 = vector.broadcast %cst_42 : f32 to vector<2x32xf32>
    %52 = arith.addf %51, %50 : vector<2x32xf32>
    %53 = arith.divf %51, %52 : vector<2x32xf32>
    %54 = arith.addf %25, %40 : vector<2x32xf32>
    %55 = arith.negf %54 : vector<2x32xf32>
    %56 = math.exp %55 : vector<2x32xf32>
    %cst_43 = arith.constant 1.000000e+00 : f32
    %57 = vector.broadcast %cst_43 : f32 to vector<2x32xf32>
    %58 = arith.addf %57, %56 : vector<2x32xf32>
    %59 = arith.divf %57, %58 : vector<2x32xf32>
    %60 = arith.mulf %53, %47 : vector<2x32xf32>
    %61 = arith.addf %26, %60 : vector<2x32xf32>
    %62 = math.tanh %61 : vector<2x32xf32>
    %cst_44 = arith.constant 1.000000e+00 : f32
    %63 = vector.broadcast %cst_44 : f32 to vector<2x32xf32>
    %64 = arith.subf %63, %59 : vector<2x32xf32>
    %65 = arith.mulf %64, %62 : vector<2x32xf32>
    %66 = arith.mulf %59, %23 : vector<2x32xf32>
    %67 = arith.addf %65, %66 : vector<2x32xf32>
    %c0_45 = arith.constant 0 : index
    %c0_46 = arith.constant 0 : index
    %68 = vector.load %arg12[%c0_45, %c0_46] : memref<16x32xf32, #tpu.memory_space<vmem>>, vector<2x32xf32>
    tpu.vector_store %arg12[%c0_45, %c0_46], %67 {strides = array<i32>} : memref<16x32xf32, #tpu.memory_space<vmem>>, vector<2x32xf32>,
    %69 = vector.extract_strided_slice %8 {offsets = [2, 0], sizes = [2, 32], strides = [1, 1]} : vector<16x32xf32> to vector<2x32xf32>
    %70 = vector.extract_strided_slice %15 {offsets = [2, 0], sizes = [2, 32], strides = [1, 1]} : vector<16x32xf32> to vector<2x32xf32>
    %71 = vector.extract_strided_slice %22 {offsets = [2, 0], sizes = [2, 32], strides = [1, 1]} : vector<16x32xf32> to vector<2x32xf32>
    %c0_47 = arith.constant 0 : index
    %c0_48 = arith.constant 0 : index
    %c0_49 = arith.constant 0 : index
    %72 = vector.load %arg2[%c0_47, %c0_48, %c0_49] : memref<3x32x32xf32, #tpu.memory_space<vmem>>, vector<1x32x32xf32>
    %73 = vector.shape_cast %72 : vector<1x32x32xf32> to vector<32x32xf32>
    %cst_50 = arith.constant dense<0.000000e+00> : vector<2x32xf32>
    %74 = tpu.matmul %67, %73, %cst_50 {dimension_numbers = #tpu.dot_dimension_numbers<[1], [0], [0], [1], [0, 0, 1, 1], [], []>} : vector<2x32xf32>, vector<32x32xf32>, vector<2x32xf32> -> vector<2x32xf32>
    %c0_51 = arith.constant 0 : index
    %c0_52 = arith.constant 0 : index
    %c0_53 = arith.constant 0 : index
    %75 = vector.load %arg4[%c0_51, %c0_52, %c0_53] : memref<3x1x32xf32, #tpu.memory_space<vmem>>, vector<1x1x32xf32>
    %76 = vector.shape_cast %75 : vector<1x1x32xf32> to vector<1x32xf32>
    %77 = vector.broadcast %76 : vector<1x32xf32> to vector<2x32xf32>
    %78 = arith.addf %74, %77 : vector<2x32xf32>
    %c1_54 = arith.constant 1 : index
    %c0_55 = arith.constant 0 : index
    %c0_56 = arith.constant 0 : index
    %79 = vector.load %arg2[%c1_54, %c0_55, %c0_56] : memref<3x32x32xf32, #tpu.memory_space<vmem>>, vector<1x32x32xf32>
    %80 = vector.shape_cast %79 : vector<1x32x32xf32> to vector<32x32xf32>
    %cst_57 = arith.constant dense<0.000000e+00> : vector<2x32xf32>
    %81 = tpu.matmul %67, %80, %cst_57 {dimension_numbers = #tpu.dot_dimension_numbers<[1], [0], [0], [1], [0, 0, 1, 1], [], []>} : vector<2x32xf32>, vector<32x32xf32>, vector<2x32xf32> -> vector<2x32xf32>
    %c1_58 = arith.constant 1 : index
    %c0_59 = arith.constant 0 : index
    %c0_60 = arith.constant 0 : index
    %82 = vector.load %arg4[%c1_58, %c0_59, %c0_60] : memref<3x1x32xf32, #tpu.memory_space<vmem>>, vector<1x1x32xf32>
    %83 = vector.shape_cast %82 : vector<1x1x32xf32> to vector<1x32xf32>
    %84 = vector.broadcast %83 : vector<1x32xf32> to vector<2x32xf32>
    %85 = arith.addf %81, %84 : vector<2x32xf32>
    %c2_61 = arith.constant 2 : index
    %c0_62 = arith.constant 0 : index
    %c0_63 = arith.constant 0 : index
    %86 = vector.load %arg2[%c2_61, %c0_62, %c0_63] : memref<3x32x32xf32, #tpu.memory_space<vmem>>, vector<1x32x32xf32>
    %87 = vector.shape_cast %86 : vector<1x32x32xf32> to vector<32x32xf32>
    %cst_64 = arith.constant dense<0.000000e+00> : vector<2x32xf32>
    %88 = tpu.matmul %67, %87, %cst_64 {dimension_numbers = #tpu.dot_dimension_numbers<[1], [0], [0], [1], [0, 0, 1, 1], [], []>} : vector<2x32xf32>, vector<32x32xf32>, vector<2x32xf32> -> vector<2x32xf32>
    %c2_65 = arith.constant 2 : index
    %c0_66 = arith.constant 0 : index
    %c0_67 = arith.constant 0 : index
    %89 = vector.load %arg4[%c2_65, %c0_66, %c0_67] : memref<3x1x32xf32, #tpu.memory_space<vmem>>, vector<1x1x32xf32>
    %90 = vector.shape_cast %89 : vector<1x1x32xf32> to vector<1x32xf32>
    %91 = vector.broadcast %90 : vector<1x32xf32> to vector<2x32xf32>
    %92 = arith.addf %88, %91 : vector<2x32xf32>
    %93 = arith.addf %69, %78 : vector<2x32xf32>
    %94 = arith.negf %93 : vector<2x32xf32>
    %95 = math.exp %94 : vector<2x32xf32>
    %cst_68 = arith.constant 1.000000e+00 : f32
    %96 = vector.broadcast %cst_68 : f32 to vector<2x32xf32>
    %97 = arith.addf %96, %95 : vector<2x32xf32>
    %98 = arith.divf %96, %97 : vector<2x32xf32>
    %99 = arith.addf %70, %85 : vector<2x32xf32>
    %100 = arith.negf %99 : vector<2x32xf32>
    %101 = math.exp %100 : vector<2x32xf32>
    %cst_69 = arith.constant 1.000000e+00 : f32
    %102 = vector.broadcast %cst_69 : f32 to vector<2x32xf32>
    %103 = arith.addf %102, %101 : vector<2x32xf32>
    %104 = arith.divf %102, %103 : vector<2x32xf32>
    %105 = arith.mulf %98, %92 : vector<2x32xf32>
    %106 = arith.addf %71, %105 : vector<2x32xf32>
    %107 = math.tanh %106 : vector<2x32xf32>
    %cst_70 = arith.constant 1.000000e+00 : f32
    %108 = vector.broadcast %cst_70 : f32 to vector<2x32xf32>
    %109 = arith.subf %108, %104 : vector<2x32xf32>
    %110 = arith.mulf %109, %107 : vector<2x32xf32>
    %111 = arith.mulf %104, %67 : vector<2x32xf32>
    %112 = arith.addf %110, %111 : vector<2x32xf32>
    %c2_71 = arith.constant 2 : index
    %c0_72 = arith.constant 0 : index
    %113 = vector.load %arg12[%c2_71, %c0_72] : memref<16x32xf32, #tpu.memory_space<vmem>>, vector<2x32xf32>
    tpu.vector_store %arg12[%c2_71, %c0_72], %112 {strides = array<i32>} : memref<16x32xf32, #tpu.memory_space<vmem>>, vector<2x32xf32>,
    %114 = vector.extract_strided_slice %8 {offsets = [4, 0], sizes = [2, 32], strides = [1, 1]} : vector<16x32xf32> to vector<2x32xf32>
    %115 = vector.extract_strided_slice %15 {offsets = [4, 0], sizes = [2, 32], strides = [1, 1]} : vector<16x32xf32> to vector<2x32xf32>
    %116 = vector.extract_strided_slice %22 {offsets = [4, 0], sizes = [2, 32], strides = [1, 1]} : vector<16x32xf32> to vector<2x32xf32>
    %c0_73 = arith.constant 0 : index
    %c0_74 = arith.constant 0 : index
    %c0_75 = arith.constant 0 : index
    %117 = vector.load %arg2[%c0_73, %c0_74, %c0_75] : memref<3x32x32xf32, #tpu.memory_space<vmem>>, vector<1x32x32xf32>
    %118 = vector.shape_cast %117 : vector<1x32x32xf32> to vector<32x32xf32>
    %cst_76 = arith.constant dense<0.000000e+00> : vector<2x32xf32>
    %119 = tpu.matmul %112, %118, %cst_76 {dimension_numbers = #tpu.dot_dimension_numbers<[1], [0], [0], [1], [0, 0, 1, 1], [], []>} : vector<2x32xf32>, vector<32x32xf32>, vector<2x32xf32> -> vector<2x32xf32>
    %c0_77 = arith.constant 0 : index
    %c0_78 = arith.constant 0 : index
    %c0_79 = arith.constant 0 : index
    %120 = vector.load %arg4[%c0_77, %c0_78, %c0_79] : memref<3x1x32xf32, #tpu.memory_space<vmem>>, vector<1x1x32xf32>
    %121 = vector.shape_cast %120 : vector<1x1x32xf32> to vector<1x32xf32>
    %122 = vector.broadcast %121 : vector<1x32xf32> to vector<2x32xf32>
    %123 = arith.addf %119, %122 : vector<2x32xf32>
    %c1_80 = arith.constant 1 : index
    %c0_81 = arith.constant 0 : index
    %c0_82 = arith.constant 0 : index
    %124 = vector.load %arg2[%c1_80, %c0_81, %c0_82] : memref<3x32x32xf32, #tpu.memory_space<vmem>>, vector<1x32x32xf32>
    %125 = vector.shape_cast %124 : vector<1x32x32xf32> to vector<32x32xf32>
    %cst_83 = arith.constant dense<0.000000e+00> : vector<2x32xf32>
    %126 = tpu.matmul %112, %125, %cst_83 {dimension_numbers = #tpu.dot_dimension_numbers<[1], [0], [0], [1], [0, 0, 1, 1], [], []>} : vector<2x32xf32>, vector<32x32xf32>, vector<2x32xf32> -> vector<2x32xf32>
    %c1_84 = arith.constant 1 : index
    %c0_85 = arith.constant 0 : index
    %c0_86 = arith.constant 0 : index
    %127 = vector.load %arg4[%c1_84, %c0_85, %c0_86] : memref<3x1x32xf32, #tpu.memory_space<vmem>>, vector<1x1x32xf32>
    %128 = vector.shape_cast %127 : vector<1x1x32xf32> to vector<1x32xf32>
    %129 = vector.broadcast %128 : vector<1x32xf32> to vector<2x32xf32>
    %130 = arith.addf %126, %129 : vector<2x32xf32>
    %c2_87 = arith.constant 2 : index
    %c0_88 = arith.constant 0 : index
    %c0_89 = arith.constant 0 : index
    %131 = vector.load %arg2[%c2_87, %c0_88, %c0_89] : memref<3x32x32xf32, #tpu.memory_space<vmem>>, vector<1x32x32xf32>
    %132 = vector.shape_cast %131 : vector<1x32x32xf32> to vector<32x32xf32>
    %cst_90 = arith.constant dense<0.000000e+00> : vector<2x32xf32>
    %133 = tpu.matmul %112, %132, %cst_90 {dimension_numbers = #tpu.dot_dimension_numbers<[1], [0], [0], [1], [0, 0, 1, 1], [], []>} : vector<2x32xf32>, vector<32x32xf32>, vector<2x32xf32> -> vector<2x32xf32>
    %c2_91 = arith.constant 2 : index
    %c0_92 = arith.constant 0 : index
    %c0_93 = arith.constant 0 : index
    %134 = vector.load %arg4[%c2_91, %c0_92, %c0_93] : memref<3x1x32xf32, #tpu.memory_space<vmem>>, vector<1x1x32xf32>
    %135 = vector.shape_cast %134 : vector<1x1x32xf32> to vector<1x32xf32>
    %136 = vector.broadcast %135 : vector<1x32xf32> to vector<2x32xf32>
    %137 = arith.addf %133, %136 : vector<2x32xf32>
    %138 = arith.addf %114, %123 : vector<2x32xf32>
    %139 = arith.negf %138 : vector<2x32xf32>
    %140 = math.exp %139 : vector<2x32xf32>
    %cst_94 = arith.constant 1.000000e+00 : f32
    %141 = vector.broadcast %cst_94 : f32 to vector<2x32xf32>
    %142 = arith.addf %141, %140 : vector<2x32xf32>
    %143 = arith.divf %141, %142 : vector<2x32xf32>
    %144 = arith.addf %115, %130 : vector<2x32xf32>
    %145 = arith.negf %144 : vector<2x32xf32>
    %146 = math.exp %145 : vector<2x32xf32>
    %cst_95 = arith.constant 1.000000e+00 : f32
    %147 = vector.broadcast %cst_95 : f32 to vector<2x32xf32>
    %148 = arith.addf %147, %146 : vector<2x32xf32>
    %149 = arith.divf %147, %148 : vector<2x32xf32>
    %150 = arith.mulf %143, %137 : vector<2x32xf32>
    %151 = arith.addf %116, %150 : vector<2x32xf32>
    %152 = math.tanh %151 : vector<2x32xf32>
    %cst_96 = arith.constant 1.000000e+00 : f32
    %153 = vector.broadcast %cst_96 : f32 to vector<2x32xf32>
    %154 = arith.subf %153, %149 : vector<2x32xf32>
    %155 = arith.mulf %154, %152 : vector<2x32xf32>
    %156 = arith.mulf %149, %112 : vector<2x32xf32>
    %157 = arith.addf %155, %156 : vector<2x32xf32>
    %c4 = arith.constant 4 : index
    %c0_97 = arith.constant 0 : index
    %158 = vector.load %arg12[%c4, %c0_97] : memref<16x32xf32, #tpu.memory_space<vmem>>, vector<2x32xf32>
    tpu.vector_store %arg12[%c4, %c0_97], %157 {strides = array<i32>} : memref<16x32xf32, #tpu.memory_space<vmem>>, vector<2x32xf32>,
    %159 = vector.extract_strided_slice %8 {offsets = [6, 0], sizes = [2, 32], strides = [1, 1]} : vector<16x32xf32> to vector<2x32xf32>
    %160 = vector.extract_strided_slice %15 {offsets = [6, 0], sizes = [2, 32], strides = [1, 1]} : vector<16x32xf32> to vector<2x32xf32>
    %161 = vector.extract_strided_slice %22 {offsets = [6, 0], sizes = [2, 32], strides = [1, 1]} : vector<16x32xf32> to vector<2x32xf32>
    %c0_98 = arith.constant 0 : index
    %c0_99 = arith.constant 0 : index
    %c0_100 = arith.constant 0 : index
    %162 = vector.load %arg2[%c0_98, %c0_99, %c0_100] : memref<3x32x32xf32, #tpu.memory_space<vmem>>, vector<1x32x32xf32>
    %163 = vector.shape_cast %162 : vector<1x32x32xf32> to vector<32x32xf32>
    %cst_101 = arith.constant dense<0.000000e+00> : vector<2x32xf32>
    %164 = tpu.matmul %157, %163, %cst_101 {dimension_numbers = #tpu.dot_dimension_numbers<[1], [0], [0], [1], [0, 0, 1, 1], [], []>} : vector<2x32xf32>, vector<32x32xf32>, vector<2x32xf32> -> vector<2x32xf32>
    %c0_102 = arith.constant 0 : index
    %c0_103 = arith.constant 0 : index
    %c0_104 = arith.constant 0 : index
    %165 = vector.load %arg4[%c0_102, %c0_103, %c0_104] : memref<3x1x32xf32, #tpu.memory_space<vmem>>, vector<1x1x32xf32>
    %166 = vector.shape_cast %165 : vector<1x1x32xf32> to vector<1x32xf32>
    %167 = vector.broadcast %166 : vector<1x32xf32> to vector<2x32xf32>
    %168 = arith.addf %164, %167 : vector<2x32xf32>
    %c1_105 = arith.constant 1 : index
    %c0_106 = arith.constant 0 : index
    %c0_107 = arith.constant 0 : index
    %169 = vector.load %arg2[%c1_105, %c0_106, %c0_107] : memref<3x32x32xf32, #tpu.memory_space<vmem>>, vector<1x32x32xf32>
    %170 = vector.shape_cast %169 : vector<1x32x32xf32> to vector<32x32xf32>
    %cst_108 = arith.constant dense<0.000000e+00> : vector<2x32xf32>
    %171 = tpu.matmul %157, %170, %cst_108 {dimension_numbers = #tpu.dot_dimension_numbers<[1], [0], [0], [1], [0, 0, 1, 1], [], []>} : vector<2x32xf32>, vector<32x32xf32>, vector<2x32xf32> -> vector<2x32xf32>
    %c1_109 = arith.constant 1 : index
    %c0_110 = arith.constant 0 : index
    %c0_111 = arith.constant 0 : index
    %172 = vector.load %arg4[%c1_109, %c0_110, %c0_111] : memref<3x1x32xf32, #tpu.memory_space<vmem>>, vector<1x1x32xf32>
    %173 = vector.shape_cast %172 : vector<1x1x32xf32> to vector<1x32xf32>
    %174 = vector.broadcast %173 : vector<1x32xf32> to vector<2x32xf32>
    %175 = arith.addf %171, %174 : vector<2x32xf32>
    %c2_112 = arith.constant 2 : index
    %c0_113 = arith.constant 0 : index
    %c0_114 = arith.constant 0 : index
    %176 = vector.load %arg2[%c2_112, %c0_113, %c0_114] : memref<3x32x32xf32, #tpu.memory_space<vmem>>, vector<1x32x32xf32>
    %177 = vector.shape_cast %176 : vector<1x32x32xf32> to vector<32x32xf32>
    %cst_115 = arith.constant dense<0.000000e+00> : vector<2x32xf32>
    %178 = tpu.matmul %157, %177, %cst_115 {dimension_numbers = #tpu.dot_dimension_numbers<[1], [0], [0], [1], [0, 0, 1, 1], [], []>} : vector<2x32xf32>, vector<32x32xf32>, vector<2x32xf32> -> vector<2x32xf32>
    %c2_116 = arith.constant 2 : index
    %c0_117 = arith.constant 0 : index
    %c0_118 = arith.constant 0 : index
    %179 = vector.load %arg4[%c2_116, %c0_117, %c0_118] : memref<3x1x32xf32, #tpu.memory_space<vmem>>, vector<1x1x32xf32>
    %180 = vector.shape_cast %179 : vector<1x1x32xf32> to vector<1x32xf32>
    %181 = vector.broadcast %180 : vector<1x32xf32> to vector<2x32xf32>
    %182 = arith.addf %178, %181 : vector<2x32xf32>
    %183 = arith.addf %159, %168 : vector<2x32xf32>
    %184 = arith.negf %183 : vector<2x32xf32>
    %185 = math.exp %184 : vector<2x32xf32>
    %cst_119 = arith.constant 1.000000e+00 : f32
    %186 = vector.broadcast %cst_119 : f32 to vector<2x32xf32>
    %187 = arith.addf %186, %185 : vector<2x32xf32>
    %188 = arith.divf %186, %187 : vector<2x32xf32>
    %189 = arith.addf %160, %175 : vector<2x32xf32>
    %190 = arith.negf %189 : vector<2x32xf32>
    %191 = math.exp %190 : vector<2x32xf32>
    %cst_120 = arith.constant 1.000000e+00 : f32
    %192 = vector.broadcast %cst_120 : f32 to vector<2x32xf32>
    %193 = arith.addf %192, %191 : vector<2x32xf32>
    %194 = arith.divf %192, %193 : vector<2x32xf32>
    %195 = arith.mulf %188, %182 : vector<2x32xf32>
    %196 = arith.addf %161, %195 : vector<2x32xf32>
    %197 = math.tanh %196 : vector<2x32xf32>
    %cst_121 = arith.constant 1.000000e+00 : f32
    %198 = vector.broadcast %cst_121 : f32 to vector<2x32xf32>
    %199 = arith.subf %198, %194 : vector<2x32xf32>
    %200 = arith.mulf %199, %197 : vector<2x32xf32>
    %201 = arith.mulf %194, %157 : vector<2x32xf32>
    %202 = arith.addf %200, %201 : vector<2x32xf32>
    %c6 = arith.constant 6 : index
    %c0_122 = arith.constant 0 : index
    %203 = vector.load %arg12[%c6, %c0_122] : memref<16x32xf32, #tpu.memory_space<vmem>>, vector<2x32xf32>
    tpu.vector_store %arg12[%c6, %c0_122], %202 {strides = array<i32>} : memref<16x32xf32, #tpu.memory_space<vmem>>, vector<2x32xf32>,
    %204 = vector.extract_strided_slice %8 {offsets = [8, 0], sizes = [2, 32], strides = [1, 1]} : vector<16x32xf32> to vector<2x32xf32>
    %205 = vector.extract_strided_slice %15 {offsets = [8, 0], sizes = [2, 32], strides = [1, 1]} : vector<16x32xf32> to vector<2x32xf32>
    %206 = vector.extract_strided_slice %22 {offsets = [8, 0], sizes = [2, 32], strides = [1, 1]} : vector<16x32xf32> to vector<2x32xf32>
    %c0_123 = arith.constant 0 : index
    %c0_124 = arith.constant 0 : index
    %c0_125 = arith.constant 0 : index
    %207 = vector.load %arg2[%c0_123, %c0_124, %c0_125] : memref<3x32x32xf32, #tpu.memory_space<vmem>>, vector<1x32x32xf32>
    %208 = vector.shape_cast %207 : vector<1x32x32xf32> to vector<32x32xf32>
    %cst_126 = arith.constant dense<0.000000e+00> : vector<2x32xf32>
    %209 = tpu.matmul %202, %208, %cst_126 {dimension_numbers = #tpu.dot_dimension_numbers<[1], [0], [0], [1], [0, 0, 1, 1], [], []>} : vector<2x32xf32>, vector<32x32xf32>, vector<2x32xf32> -> vector<2x32xf32>
    %c0_127 = arith.constant 0 : index
    %c0_128 = arith.constant 0 : index
    %c0_129 = arith.constant 0 : index
    %210 = vector.load %arg4[%c0_127, %c0_128, %c0_129] : memref<3x1x32xf32, #tpu.memory_space<vmem>>, vector<1x1x32xf32>
    %211 = vector.shape_cast %210 : vector<1x1x32xf32> to vector<1x32xf32>
    %212 = vector.broadcast %211 : vector<1x32xf32> to vector<2x32xf32>
    %213 = arith.addf %209, %212 : vector<2x32xf32>
    %c1_130 = arith.constant 1 : index
    %c0_131 = arith.constant 0 : index
    %c0_132 = arith.constant 0 : index
    %214 = vector.load %arg2[%c1_130, %c0_131, %c0_132] : memref<3x32x32xf32, #tpu.memory_space<vmem>>, vector<1x32x32xf32>
    %215 = vector.shape_cast %214 : vector<1x32x32xf32> to vector<32x32xf32>
    %cst_133 = arith.constant dense<0.000000e+00> : vector<2x32xf32>
    %216 = tpu.matmul %202, %215, %cst_133 {dimension_numbers = #tpu.dot_dimension_numbers<[1], [0], [0], [1], [0, 0, 1, 1], [], []>} : vector<2x32xf32>, vector<32x32xf32>, vector<2x32xf32> -> vector<2x32xf32>
    %c1_134 = arith.constant 1 : index
    %c0_135 = arith.constant 0 : index
    %c0_136 = arith.constant 0 : index
    %217 = vector.load %arg4[%c1_134, %c0_135, %c0_136] : memref<3x1x32xf32, #tpu.memory_space<vmem>>, vector<1x1x32xf32>
    %218 = vector.shape_cast %217 : vector<1x1x32xf32> to vector<1x32xf32>
    %219 = vector.broadcast %218 : vector<1x32xf32> to vector<2x32xf32>
    %220 = arith.addf %216, %219 : vector<2x32xf32>
    %c2_137 = arith.constant 2 : index
    %c0_138 = arith.constant 0 : index
    %c0_139 = arith.constant 0 : index
    %221 = vector.load %arg2[%c2_137, %c0_138, %c0_139] : memref<3x32x32xf32, #tpu.memory_space<vmem>>, vector<1x32x32xf32>
    %222 = vector.shape_cast %221 : vector<1x32x32xf32> to vector<32x32xf32>
    %cst_140 = arith.constant dense<0.000000e+00> : vector<2x32xf32>
    %223 = tpu.matmul %202, %222, %cst_140 {dimension_numbers = #tpu.dot_dimension_numbers<[1], [0], [0], [1], [0, 0, 1, 1], [], []>} : vector<2x32xf32>, vector<32x32xf32>, vector<2x32xf32> -> vector<2x32xf32>
    %c2_141 = arith.constant 2 : index
    %c0_142 = arith.constant 0 : index
    %c0_143 = arith.constant 0 : index
    %224 = vector.load %arg4[%c2_141, %c0_142, %c0_143] : memref<3x1x32xf32, #tpu.memory_space<vmem>>, vector<1x1x32xf32>
    %225 = vector.shape_cast %224 : vector<1x1x32xf32> to vector<1x32xf32>
    %226 = vector.broadcast %225 : vector<1x32xf32> to vector<2x32xf32>
    %227 = arith.addf %223, %226 : vector<2x32xf32>
    %228 = arith.addf %204, %213 : vector<2x32xf32>
    %229 = arith.negf %228 : vector<2x32xf32>
    %230 = math.exp %229 : vector<2x32xf32>
    %cst_144 = arith.constant 1.000000e+00 : f32
    %231 = vector.broadcast %cst_144 : f32 to vector<2x32xf32>
    %232 = arith.addf %231, %230 : vector<2x32xf32>
    %233 = arith.divf %231, %232 : vector<2x32xf32>
    %234 = arith.addf %205, %220 : vector<2x32xf32>
    %235 = arith.negf %234 : vector<2x32xf32>
    %236 = math.exp %235 : vector<2x32xf32>
    %cst_145 = arith.constant 1.000000e+00 : f32
    %237 = vector.broadcast %cst_145 : f32 to vector<2x32xf32>
    %238 = arith.addf %237, %236 : vector<2x32xf32>
    %239 = arith.divf %237, %238 : vector<2x32xf32>
    %240 = arith.mulf %233, %227 : vector<2x32xf32>
    %241 = arith.addf %206, %240 : vector<2x32xf32>
    %242 = math.tanh %241 : vector<2x32xf32>
    %cst_146 = arith.constant 1.000000e+00 : f32
    %243 = vector.broadcast %cst_146 : f32 to vector<2x32xf32>
    %244 = arith.subf %243, %239 : vector<2x32xf32>
    %245 = arith.mulf %244, %242 : vector<2x32xf32>
    %246 = arith.mulf %239, %202 : vector<2x32xf32>
    %247 = arith.addf %245, %246 : vector<2x32xf32>
    %c8 = arith.constant 8 : index
    %c0_147 = arith.constant 0 : index
    %248 = vector.load %arg12[%c8, %c0_147] : memref<16x32xf32, #tpu.memory_space<vmem>>, vector<2x32xf32>
    tpu.vector_store %arg12[%c8, %c0_147], %247 {strides = array<i32>} : memref<16x32xf32, #tpu.memory_space<vmem>>, vector<2x32xf32>,
    %249 = vector.extract_strided_slice %8 {offsets = [10, 0], sizes = [2, 32], strides = [1, 1]} : vector<16x32xf32> to vector<2x32xf32>
    %250 = vector.extract_strided_slice %15 {offsets = [10, 0], sizes = [2, 32], strides = [1, 1]} : vector<16x32xf32> to vector<2x32xf32>
    %251 = vector.extract_strided_slice %22 {offsets = [10, 0], sizes = [2, 32], strides = [1, 1]} : vector<16x32xf32> to vector<2x32xf32>
    %c0_148 = arith.constant 0 : index
    %c0_149 = arith.constant 0 : index
    %c0_150 = arith.constant 0 : index
    %252 = vector.load %arg2[%c0_148, %c0_149, %c0_150] : memref<3x32x32xf32, #tpu.memory_space<vmem>>, vector<1x32x32xf32>
    %253 = vector.shape_cast %252 : vector<1x32x32xf32> to vector<32x32xf32>
    %cst_151 = arith.constant dense<0.000000e+00> : vector<2x32xf32>
    %254 = tpu.matmul %247, %253, %cst_151 {dimension_numbers = #tpu.dot_dimension_numbers<[1], [0], [0], [1], [0, 0, 1, 1], [], []>} : vector<2x32xf32>, vector<32x32xf32>, vector<2x32xf32> -> vector<2x32xf32>
    %c0_152 = arith.constant 0 : index
    %c0_153 = arith.constant 0 : index
    %c0_154 = arith.constant 0 : index
    %255 = vector.load %arg4[%c0_152, %c0_153, %c0_154] : memref<3x1x32xf32, #tpu.memory_space<vmem>>, vector<1x1x32xf32>
    %256 = vector.shape_cast %255 : vector<1x1x32xf32> to vector<1x32xf32>
    %257 = vector.broadcast %256 : vector<1x32xf32> to vector<2x32xf32>
    %258 = arith.addf %254, %257 : vector<2x32xf32>
    %c1_155 = arith.constant 1 : index
    %c0_156 = arith.constant 0 : index
    %c0_157 = arith.constant 0 : index
    %259 = vector.load %arg2[%c1_155, %c0_156, %c0_157] : memref<3x32x32xf32, #tpu.memory_space<vmem>>, vector<1x32x32xf32>
    %260 = vector.shape_cast %259 : vector<1x32x32xf32> to vector<32x32xf32>
    %cst_158 = arith.constant dense<0.000000e+00> : vector<2x32xf32>
    %261 = tpu.matmul %247, %260, %cst_158 {dimension_numbers = #tpu.dot_dimension_numbers<[1], [0], [0], [1], [0, 0, 1, 1], [], []>} : vector<2x32xf32>, vector<32x32xf32>, vector<2x32xf32> -> vector<2x32xf32>
    %c1_159 = arith.constant 1 : index
    %c0_160 = arith.constant 0 : index
    %c0_161 = arith.constant 0 : index
    %262 = vector.load %arg4[%c1_159, %c0_160, %c0_161] : memref<3x1x32xf32, #tpu.memory_space<vmem>>, vector<1x1x32xf32>
    %263 = vector.shape_cast %262 : vector<1x1x32xf32> to vector<1x32xf32>
    %264 = vector.broadcast %263 : vector<1x32xf32> to vector<2x32xf32>
    %265 = arith.addf %261, %264 : vector<2x32xf32>
    %c2_162 = arith.constant 2 : index
    %c0_163 = arith.constant 0 : index
    %c0_164 = arith.constant 0 : index
    %266 = vector.load %arg2[%c2_162, %c0_163, %c0_164] : memref<3x32x32xf32, #tpu.memory_space<vmem>>, vector<1x32x32xf32>
    %267 = vector.shape_cast %266 : vector<1x32x32xf32> to vector<32x32xf32>
    %cst_165 = arith.constant dense<0.000000e+00> : vector<2x32xf32>
    %268 = tpu.matmul %247, %267, %cst_165 {dimension_numbers = #tpu.dot_dimension_numbers<[1], [0], [0], [1], [0, 0, 1, 1], [], []>} : vector<2x32xf32>, vector<32x32xf32>, vector<2x32xf32> -> vector<2x32xf32>
    %c2_166 = arith.constant 2 : index
    %c0_167 = arith.constant 0 : index
    %c0_168 = arith.constant 0 : index
    %269 = vector.load %arg4[%c2_166, %c0_167, %c0_168] : memref<3x1x32xf32, #tpu.memory_space<vmem>>, vector<1x1x32xf32>
    %270 = vector.shape_cast %269 : vector<1x1x32xf32> to vector<1x32xf32>
    %271 = vector.broadcast %270 : vector<1x32xf32> to vector<2x32xf32>
    %272 = arith.addf %268, %271 : vector<2x32xf32>
    %273 = arith.addf %249, %258 : vector<2x32xf32>
    %274 = arith.negf %273 : vector<2x32xf32>
    %275 = math.exp %274 : vector<2x32xf32>
    %cst_169 = arith.constant 1.000000e+00 : f32
    %276 = vector.broadcast %cst_169 : f32 to vector<2x32xf32>
    %277 = arith.addf %276, %275 : vector<2x32xf32>
    %278 = arith.divf %276, %277 : vector<2x32xf32>
    %279 = arith.addf %250, %265 : vector<2x32xf32>
    %280 = arith.negf %279 : vector<2x32xf32>
    %281 = math.exp %280 : vector<2x32xf32>
    %cst_170 = arith.constant 1.000000e+00 : f32
    %282 = vector.broadcast %cst_170 : f32 to vector<2x32xf32>
    %283 = arith.addf %282, %281 : vector<2x32xf32>
    %284 = arith.divf %282, %283 : vector<2x32xf32>
    %285 = arith.mulf %278, %272 : vector<2x32xf32>
    %286 = arith.addf %251, %285 : vector<2x32xf32>
    %287 = math.tanh %286 : vector<2x32xf32>
    %cst_171 = arith.constant 1.000000e+00 : f32
    %288 = vector.broadcast %cst_171 : f32 to vector<2x32xf32>
    %289 = arith.subf %288, %284 : vector<2x32xf32>
    %290 = arith.mulf %289, %287 : vector<2x32xf32>
    %291 = arith.mulf %284, %247 : vector<2x32xf32>
    %292 = arith.addf %290, %291 : vector<2x32xf32>
    %c10 = arith.constant 10 : index
    %c0_172 = arith.constant 0 : index
    %293 = vector.load %arg12[%c10, %c0_172] : memref<16x32xf32, #tpu.memory_space<vmem>>, vector<2x32xf32>
    tpu.vector_store %arg12[%c10, %c0_172], %292 {strides = array<i32>} : memref<16x32xf32, #tpu.memory_space<vmem>>, vector<2x32xf32>,
    %294 = vector.extract_strided_slice %8 {offsets = [12, 0], sizes = [2, 32], strides = [1, 1]} : vector<16x32xf32> to vector<2x32xf32>
    %295 = vector.extract_strided_slice %15 {offsets = [12, 0], sizes = [2, 32], strides = [1, 1]} : vector<16x32xf32> to vector<2x32xf32>
    %296 = vector.extract_strided_slice %22 {offsets = [12, 0], sizes = [2, 32], strides = [1, 1]} : vector<16x32xf32> to vector<2x32xf32>
    %c0_173 = arith.constant 0 : index
    %c0_174 = arith.constant 0 : index
    %c0_175 = arith.constant 0 : index
    %297 = vector.load %arg2[%c0_173, %c0_174, %c0_175] : memref<3x32x32xf32, #tpu.memory_space<vmem>>, vector<1x32x32xf32>
    %298 = vector.shape_cast %297 : vector<1x32x32xf32> to vector<32x32xf32>
    %cst_176 = arith.constant dense<0.000000e+00> : vector<2x32xf32>
    %299 = tpu.matmul %292, %298, %cst_176 {dimension_numbers = #tpu.dot_dimension_numbers<[1], [0], [0], [1], [0, 0, 1, 1], [], []>} : vector<2x32xf32>, vector<32x32xf32>, vector<2x32xf32> -> vector<2x32xf32>
    %c0_177 = arith.constant 0 : index
    %c0_178 = arith.constant 0 : index
    %c0_179 = arith.constant 0 : index
    %300 = vector.load %arg4[%c0_177, %c0_178, %c0_179] : memref<3x1x32xf32, #tpu.memory_space<vmem>>, vector<1x1x32xf32>
    %301 = vector.shape_cast %300 : vector<1x1x32xf32> to vector<1x32xf32>
    %302 = vector.broadcast %301 : vector<1x32xf32> to vector<2x32xf32>
    %303 = arith.addf %299, %302 : vector<2x32xf32>
    %c1_180 = arith.constant 1 : index
    %c0_181 = arith.constant 0 : index
    %c0_182 = arith.constant 0 : index
    %304 = vector.load %arg2[%c1_180, %c0_181, %c0_182] : memref<3x32x32xf32, #tpu.memory_space<vmem>>, vector<1x32x32xf32>
    %305 = vector.shape_cast %304 : vector<1x32x32xf32> to vector<32x32xf32>
    %cst_183 = arith.constant dense<0.000000e+00> : vector<2x32xf32>
    %306 = tpu.matmul %292, %305, %cst_183 {dimension_numbers = #tpu.dot_dimension_numbers<[1], [0], [0], [1], [0, 0, 1, 1], [], []>} : vector<2x32xf32>, vector<32x32xf32>, vector<2x32xf32> -> vector<2x32xf32>
    %c1_184 = arith.constant 1 : index
    %c0_185 = arith.constant 0 : index
    %c0_186 = arith.constant 0 : index
    %307 = vector.load %arg4[%c1_184, %c0_185, %c0_186] : memref<3x1x32xf32, #tpu.memory_space<vmem>>, vector<1x1x32xf32>
    %308 = vector.shape_cast %307 : vector<1x1x32xf32> to vector<1x32xf32>
    %309 = vector.broadcast %308 : vector<1x32xf32> to vector<2x32xf32>
    %310 = arith.addf %306, %309 : vector<2x32xf32>
    %c2_187 = arith.constant 2 : index
    %c0_188 = arith.constant 0 : index
    %c0_189 = arith.constant 0 : index
    %311 = vector.load %arg2[%c2_187, %c0_188, %c0_189] : memref<3x32x32xf32, #tpu.memory_space<vmem>>, vector<1x32x32xf32>
    %312 = vector.shape_cast %311 : vector<1x32x32xf32> to vector<32x32xf32>
    %cst_190 = arith.constant dense<0.000000e+00> : vector<2x32xf32>
    %313 = tpu.matmul %292, %312, %cst_190 {dimension_numbers = #tpu.dot_dimension_numbers<[1], [0], [0], [1], [0, 0, 1, 1], [], []>} : vector<2x32xf32>, vector<32x32xf32>, vector<2x32xf32> -> vector<2x32xf32>
    %c2_191 = arith.constant 2 : index
    %c0_192 = arith.constant 0 : index
    %c0_193 = arith.constant 0 : index
    %314 = vector.load %arg4[%c2_191, %c0_192, %c0_193] : memref<3x1x32xf32, #tpu.memory_space<vmem>>, vector<1x1x32xf32>
    %315 = vector.shape_cast %314 : vector<1x1x32xf32> to vector<1x32xf32>
    %316 = vector.broadcast %315 : vector<1x32xf32> to vector<2x32xf32>
    %317 = arith.addf %313, %316 : vector<2x32xf32>
    %318 = arith.addf %294, %303 : vector<2x32xf32>
    %319 = arith.negf %318 : vector<2x32xf32>
    %320 = math.exp %319 : vector<2x32xf32>
    %cst_194 = arith.constant 1.000000e+00 : f32
    %321 = vector.broadcast %cst_194 : f32 to vector<2x32xf32>
    %322 = arith.addf %321, %320 : vector<2x32xf32>
    %323 = arith.divf %321, %322 : vector<2x32xf32>
    %324 = arith.addf %295, %310 : vector<2x32xf32>
    %325 = arith.negf %324 : vector<2x32xf32>
    %326 = math.exp %325 : vector<2x32xf32>
    %cst_195 = arith.constant 1.000000e+00 : f32
    %327 = vector.broadcast %cst_195 : f32 to vector<2x32xf32>
    %328 = arith.addf %327, %326 : vector<2x32xf32>
    %329 = arith.divf %327, %328 : vector<2x32xf32>
    %330 = arith.mulf %323, %317 : vector<2x32xf32>
    %331 = arith.addf %296, %330 : vector<2x32xf32>
    %332 = math.tanh %331 : vector<2x32xf32>
    %cst_196 = arith.constant 1.000000e+00 : f32
    %333 = vector.broadcast %cst_196 : f32 to vector<2x32xf32>
    %334 = arith.subf %333, %329 : vector<2x32xf32>
    %335 = arith.mulf %334, %332 : vector<2x32xf32>
    %336 = arith.mulf %329, %292 : vector<2x32xf32>
    %337 = arith.addf %335, %336 : vector<2x32xf32>
    %c12 = arith.constant 12 : index
    %c0_197 = arith.constant 0 : index
    %338 = vector.load %arg12[%c12, %c0_197] : memref<16x32xf32, #tpu.memory_space<vmem>>, vector<2x32xf32>
    tpu.vector_store %arg12[%c12, %c0_197], %337 {strides = array<i32>} : memref<16x32xf32, #tpu.memory_space<vmem>>, vector<2x32xf32>,
    %339 = vector.extract_strided_slice %8 {offsets = [14, 0], sizes = [2, 32], strides = [1, 1]} : vector<16x32xf32> to vector<2x32xf32>
    %340 = vector.extract_strided_slice %15 {offsets = [14, 0], sizes = [2, 32], strides = [1, 1]} : vector<16x32xf32> to vector<2x32xf32>
    %341 = vector.extract_strided_slice %22 {offsets = [14, 0], sizes = [2, 32], strides = [1, 1]} : vector<16x32xf32> to vector<2x32xf32>
    %c0_198 = arith.constant 0 : index
    %c0_199 = arith.constant 0 : index
    %c0_200 = arith.constant 0 : index
    %342 = vector.load %arg2[%c0_198, %c0_199, %c0_200] : memref<3x32x32xf32, #tpu.memory_space<vmem>>, vector<1x32x32xf32>
    %343 = vector.shape_cast %342 : vector<1x32x32xf32> to vector<32x32xf32>
    %cst_201 = arith.constant dense<0.000000e+00> : vector<2x32xf32>
    %344 = tpu.matmul %337, %343, %cst_201 {dimension_numbers = #tpu.dot_dimension_numbers<[1], [0], [0], [1], [0, 0, 1, 1], [], []>} : vector<2x32xf32>, vector<32x32xf32>, vector<2x32xf32> -> vector<2x32xf32>
    %c0_202 = arith.constant 0 : index
    %c0_203 = arith.constant 0 : index
    %c0_204 = arith.constant 0 : index
    %345 = vector.load %arg4[%c0_202, %c0_203, %c0_204] : memref<3x1x32xf32, #tpu.memory_space<vmem>>, vector<1x1x32xf32>
    %346 = vector.shape_cast %345 : vector<1x1x32xf32> to vector<1x32xf32>
    %347 = vector.broadcast %346 : vector<1x32xf32> to vector<2x32xf32>
    %348 = arith.addf %344, %347 : vector<2x32xf32>
    %c1_205 = arith.constant 1 : index
    %c0_206 = arith.constant 0 : index
    %c0_207 = arith.constant 0 : index
    %349 = vector.load %arg2[%c1_205, %c0_206, %c0_207] : memref<3x32x32xf32, #tpu.memory_space<vmem>>, vector<1x32x32xf32>
    %350 = vector.shape_cast %349 : vector<1x32x32xf32> to vector<32x32xf32>
    %cst_208 = arith.constant dense<0.000000e+00> : vector<2x32xf32>
    %351 = tpu.matmul %337, %350, %cst_208 {dimension_numbers = #tpu.dot_dimension_numbers<[1], [0], [0], [1], [0, 0, 1, 1], [], []>} : vector<2x32xf32>, vector<32x32xf32>, vector<2x32xf32> -> vector<2x32xf32>
    %c1_209 = arith.constant 1 : index
    %c0_210 = arith.constant 0 : index
    %c0_211 = arith.constant 0 : index
    %352 = vector.load %arg4[%c1_209, %c0_210, %c0_211] : memref<3x1x32xf32, #tpu.memory_space<vmem>>, vector<1x1x32xf32>
    %353 = vector.shape_cast %352 : vector<1x1x32xf32> to vector<1x32xf32>
    %354 = vector.broadcast %353 : vector<1x32xf32> to vector<2x32xf32>
    %355 = arith.addf %351, %354 : vector<2x32xf32>
    %c2_212 = arith.constant 2 : index
    %c0_213 = arith.constant 0 : index
    %c0_214 = arith.constant 0 : index
    %356 = vector.load %arg2[%c2_212, %c0_213, %c0_214] : memref<3x32x32xf32, #tpu.memory_space<vmem>>, vector<1x32x32xf32>
    %357 = vector.shape_cast %356 : vector<1x32x32xf32> to vector<32x32xf32>
    %cst_215 = arith.constant dense<0.000000e+00> : vector<2x32xf32>
    %358 = tpu.matmul %337, %357, %cst_215 {dimension_numbers = #tpu.dot_dimension_numbers<[1], [0], [0], [1], [0, 0, 1, 1], [], []>} : vector<2x32xf32>, vector<32x32xf32>, vector<2x32xf32> -> vector<2x32xf32>
    %c2_216 = arith.constant 2 : index
    %c0_217 = arith.constant 0 : index
    %c0_218 = arith.constant 0 : index
    %359 = vector.load %arg4[%c2_216, %c0_217, %c0_218] : memref<3x1x32xf32, #tpu.memory_space<vmem>>, vector<1x1x32xf32>
    %360 = vector.shape_cast %359 : vector<1x1x32xf32> to vector<1x32xf32>
    %361 = vector.broadcast %360 : vector<1x32xf32> to vector<2x32xf32>
    %362 = arith.addf %358, %361 : vector<2x32xf32>
    %363 = arith.addf %339, %348 : vector<2x32xf32>
    %364 = arith.negf %363 : vector<2x32xf32>
    %365 = math.exp %364 : vector<2x32xf32>
    %cst_219 = arith.constant 1.000000e+00 : f32
    %366 = vector.broadcast %cst_219 : f32 to vector<2x32xf32>
    %367 = arith.addf %366, %365 : vector<2x32xf32>
    %368 = arith.divf %366, %367 : vector<2x32xf32>
    %369 = arith.addf %340, %355 : vector<2x32xf32>
    %370 = arith.negf %369 : vector<2x32xf32>
    %371 = math.exp %370 : vector<2x32xf32>
    %cst_220 = arith.constant 1.000000e+00 : f32
    %372 = vector.broadcast %cst_220 : f32 to vector<2x32xf32>
    %373 = arith.addf %372, %371 : vector<2x32xf32>
    %374 = arith.divf %372, %373 : vector<2x32xf32>
    %375 = arith.mulf %368, %362 : vector<2x32xf32>
    %376 = arith.addf %341, %375 : vector<2x32xf32>
    %377 = math.tanh %376 : vector<2x32xf32>
    %cst_221 = arith.constant 1.000000e+00 : f32
    %378 = vector.broadcast %cst_221 : f32 to vector<2x32xf32>
    %379 = arith.subf %378, %374 : vector<2x32xf32>
    %380 = arith.mulf %379, %377 : vector<2x32xf32>
    %381 = arith.mulf %374, %337 : vector<2x32xf32>
    %382 = arith.addf %380, %381 : vector<2x32xf32>
    %c14 = arith.constant 14 : index
    %c0_222 = arith.constant 0 : index
    %383 = vector.load %arg12[%c14, %c0_222] : memref<16x32xf32, #tpu.memory_space<vmem>>, vector<2x32xf32>
    tpu.vector_store %arg12[%c14, %c0_222], %382 {strides = array<i32>} : memref<16x32xf32, #tpu.memory_space<vmem>>, vector<2x32xf32>,
    %c0_223 = arith.constant 0 : index
    %c0_224 = arith.constant 0 : index
    %384 = vector.load %arg12[%c0_223, %c0_224] : memref<16x32xf32, #tpu.memory_space<vmem>>, vector<16x32xf32>
    %c0_225 = arith.constant 0 : index
    %c0_226 = arith.constant 0 : index
    %c0_227 = arith.constant 0 : index
    %385 = vector.load %arg5[%c0_225, %c0_226, %c0_227] : memref<3x32x32xf32, #tpu.memory_space<vmem>>, vector<1x32x32xf32>
    %386 = vector.shape_cast %385 : vector<1x32x32xf32> to vector<32x32xf32>
    %cst_228 = arith.constant dense<0.000000e+00> : vector<16x32xf32>
    %387 = tpu.matmul %384, %386, %cst_228 {dimension_numbers = #tpu.dot_dimension_numbers<[1], [0], [0], [1], [0, 0, 1, 1], [], []>} : vector<16x32xf32>, vector<32x32xf32>, vector<16x32xf32> -> vector<16x32xf32>
    %c0_229 = arith.constant 0 : index
    %c0_230 = arith.constant 0 : index
    %c0_231 = arith.constant 0 : index
    %388 = vector.load %arg7[%c0_229, %c0_230, %c0_231] : memref<3x1x32xf32, #tpu.memory_space<vmem>>, vector<1x1x32xf32>
    %389 = vector.shape_cast %388 : vector<1x1x32xf32> to vector<1x32xf32>
    %390 = vector.broadcast %389 : vector<1x32xf32> to vector<16x32xf32>
    %391 = arith.addf %387, %390 : vector<16x32xf32>
    %c1_232 = arith.constant 1 : index
    %c0_233 = arith.constant 0 : index
    %c0_234 = arith.constant 0 : index
    %392 = vector.load %arg5[%c1_232, %c0_233, %c0_234] : memref<3x32x32xf32, #tpu.memory_space<vmem>>, vector<1x32x32xf32>
    %393 = vector.shape_cast %392 : vector<1x32x32xf32> to vector<32x32xf32>
    %cst_235 = arith.constant dense<0.000000e+00> : vector<16x32xf32>
    %394 = tpu.matmul %384, %393, %cst_235 {dimension_numbers = #tpu.dot_dimension_numbers<[1], [0], [0], [1], [0, 0, 1, 1], [], []>} : vector<16x32xf32>, vector<32x32xf32>, vector<16x32xf32> -> vector<16x32xf32>
    %c1_236 = arith.constant 1 : index
    %c0_237 = arith.constant 0 : index
    %c0_238 = arith.constant 0 : index
    %395 = vector.load %arg7[%c1_236, %c0_237, %c0_238] : memref<3x1x32xf32, #tpu.memory_space<vmem>>, vector<1x1x32xf32>
    %396 = vector.shape_cast %395 : vector<1x1x32xf32> to vector<1x32xf32>
    %397 = vector.broadcast %396 : vector<1x32xf32> to vector<16x32xf32>
    %398 = arith.addf %394, %397 : vector<16x32xf32>
    %c2_239 = arith.constant 2 : index
    %c0_240 = arith.constant 0 : index
    %c0_241 = arith.constant 0 : index
    %399 = vector.load %arg5[%c2_239, %c0_240, %c0_241] : memref<3x32x32xf32, #tpu.memory_space<vmem>>, vector<1x32x32xf32>
    %400 = vector.shape_cast %399 : vector<1x32x32xf32> to vector<32x32xf32>
    %cst_242 = arith.constant dense<0.000000e+00> : vector<16x32xf32>
    %401 = tpu.matmul %384, %400, %cst_242 {dimension_numbers = #tpu.dot_dimension_numbers<[1], [0], [0], [1], [0, 0, 1, 1], [], []>} : vector<16x32xf32>, vector<32x32xf32>, vector<16x32xf32> -> vector<16x32xf32>
    %c2_243 = arith.constant 2 : index
    %c0_244 = arith.constant 0 : index
    %c0_245 = arith.constant 0 : index
    %402 = vector.load %arg7[%c2_243, %c0_244, %c0_245] : memref<3x1x32xf32, #tpu.memory_space<vmem>>, vector<1x1x32xf32>
    %403 = vector.shape_cast %402 : vector<1x1x32xf32> to vector<1x32xf32>
    %404 = vector.broadcast %403 : vector<1x32xf32> to vector<16x32xf32>
    %405 = arith.addf %401, %404 : vector<16x32xf32>
    %cst_246 = arith.constant 0.000000e+00 : f32
    %406 = vector.broadcast %cst_246 : f32 to vector<2x32xf32>
    %407 = vector.extract_strided_slice %391 {offsets = [0, 0], sizes = [2, 32], strides = [1, 1]} : vector<16x32xf32> to vector<2x32xf32>
    %408 = vector.extract_strided_slice %398 {offsets = [0, 0], sizes = [2, 32], strides = [1, 1]} : vector<16x32xf32> to vector<2x32xf32>
    %409 = vector.extract_strided_slice %405 {offsets = [0, 0], sizes = [2, 32], strides = [1, 1]} : vector<16x32xf32> to vector<2x32xf32>
    %c0_247 = arith.constant 0 : index
    %c0_248 = arith.constant 0 : index
    %c0_249 = arith.constant 0 : index
    %410 = vector.load %arg6[%c0_247, %c0_248, %c0_249] : memref<3x32x32xf32, #tpu.memory_space<vmem>>, vector<1x32x32xf32>
    %411 = vector.shape_cast %410 : vector<1x32x32xf32> to vector<32x32xf32>
    %cst_250 = arith.constant dense<0.000000e+00> : vector<2x32xf32>
    %412 = tpu.matmul %406, %411, %cst_250 {dimension_numbers = #tpu.dot_dimension_numbers<[1], [0], [0], [1], [0, 0, 1, 1], [], []>} : vector<2x32xf32>, vector<32x32xf32>, vector<2x32xf32> -> vector<2x32xf32>
    %c0_251 = arith.constant 0 : index
    %c0_252 = arith.constant 0 : index
    %c0_253 = arith.constant 0 : index
    %413 = vector.load %arg8[%c0_251, %c0_252, %c0_253] : memref<3x1x32xf32, #tpu.memory_space<vmem>>, vector<1x1x32xf32>
    %414 = vector.shape_cast %413 : vector<1x1x32xf32> to vector<1x32xf32>
    %415 = vector.broadcast %414 : vector<1x32xf32> to vector<2x32xf32>
    %416 = arith.addf %412, %415 : vector<2x32xf32>
    %c1_254 = arith.constant 1 : index
    %c0_255 = arith.constant 0 : index
    %c0_256 = arith.constant 0 : index
    %417 = vector.load %arg6[%c1_254, %c0_255, %c0_256] : memref<3x32x32xf32, #tpu.memory_space<vmem>>, vector<1x32x32xf32>
    %418 = vector.shape_cast %417 : vector<1x32x32xf32> to vector<32x32xf32>
    %cst_257 = arith.constant dense<0.000000e+00> : vector<2x32xf32>
    %419 = tpu.matmul %406, %418, %cst_257 {dimension_numbers = #tpu.dot_dimension_numbers<[1], [0], [0], [1], [0, 0, 1, 1], [], []>} : vector<2x32xf32>, vector<32x32xf32>, vector<2x32xf32> -> vector<2x32xf32>
    %c1_258 = arith.constant 1 : index
    %c0_259 = arith.constant 0 : index
    %c0_260 = arith.constant 0 : index
    %420 = vector.load %arg8[%c1_258, %c0_259, %c0_260] : memref<3x1x32xf32, #tpu.memory_space<vmem>>, vector<1x1x32xf32>
    %421 = vector.shape_cast %420 : vector<1x1x32xf32> to vector<1x32xf32>
    %422 = vector.broadcast %421 : vector<1x32xf32> to vector<2x32xf32>
    %423 = arith.addf %419, %422 : vector<2x32xf32>
    %c2_261 = arith.constant 2 : index
    %c0_262 = arith.constant 0 : index
    %c0_263 = arith.constant 0 : index
    %424 = vector.load %arg6[%c2_261, %c0_262, %c0_263] : memref<3x32x32xf32, #tpu.memory_space<vmem>>, vector<1x32x32xf32>
    %425 = vector.shape_cast %424 : vector<1x32x32xf32> to vector<32x32xf32>
    %cst_264 = arith.constant dense<0.000000e+00> : vector<2x32xf32>
    %426 = tpu.matmul %406, %425, %cst_264 {dimension_numbers = #tpu.dot_dimension_numbers<[1], [0], [0], [1], [0, 0, 1, 1], [], []>} : vector<2x32xf32>, vector<32x32xf32>, vector<2x32xf32> -> vector<2x32xf32>
    %c2_265 = arith.constant 2 : index
    %c0_266 = arith.constant 0 : index
    %c0_267 = arith.constant 0 : index
    %427 = vector.load %arg8[%c2_265, %c0_266, %c0_267] : memref<3x1x32xf32, #tpu.memory_space<vmem>>, vector<1x1x32xf32>
    %428 = vector.shape_cast %427 : vector<1x1x32xf32> to vector<1x32xf32>
    %429 = vector.broadcast %428 : vector<1x32xf32> to vector<2x32xf32>
    %430 = arith.addf %426, %429 : vector<2x32xf32>
    %431 = arith.addf %407, %416 : vector<2x32xf32>
    %432 = arith.negf %431 : vector<2x32xf32>
    %433 = math.exp %432 : vector<2x32xf32>
    %cst_268 = arith.constant 1.000000e+00 : f32
    %434 = vector.broadcast %cst_268 : f32 to vector<2x32xf32>
    %435 = arith.addf %434, %433 : vector<2x32xf32>
    %436 = arith.divf %434, %435 : vector<2x32xf32>
    %437 = arith.addf %408, %423 : vector<2x32xf32>
    %438 = arith.negf %437 : vector<2x32xf32>
    %439 = math.exp %438 : vector<2x32xf32>
    %cst_269 = arith.constant 1.000000e+00 : f32
    %440 = vector.broadcast %cst_269 : f32 to vector<2x32xf32>
    %441 = arith.addf %440, %439 : vector<2x32xf32>
    %442 = arith.divf %440, %441 : vector<2x32xf32>
    %443 = arith.mulf %436, %430 : vector<2x32xf32>
    %444 = arith.addf %409, %443 : vector<2x32xf32>
    %445 = math.tanh %444 : vector<2x32xf32>
    %cst_270 = arith.constant 1.000000e+00 : f32
    %446 = vector.broadcast %cst_270 : f32 to vector<2x32xf32>
    %447 = arith.subf %446, %442 : vector<2x32xf32>
    %448 = arith.mulf %447, %445 : vector<2x32xf32>
    %449 = arith.mulf %442, %406 : vector<2x32xf32>
    %450 = arith.addf %448, %449 : vector<2x32xf32>
    %451 = vector.extract_strided_slice %391 {offsets = [2, 0], sizes = [2, 32], strides = [1, 1]} : vector<16x32xf32> to vector<2x32xf32>
    %452 = vector.extract_strided_slice %398 {offsets = [2, 0], sizes = [2, 32], strides = [1, 1]} : vector<16x32xf32> to vector<2x32xf32>
    %453 = vector.extract_strided_slice %405 {offsets = [2, 0], sizes = [2, 32], strides = [1, 1]} : vector<16x32xf32> to vector<2x32xf32>
    %c0_271 = arith.constant 0 : index
    %c0_272 = arith.constant 0 : index
    %c0_273 = arith.constant 0 : index
    %454 = vector.load %arg6[%c0_271, %c0_272, %c0_273] : memref<3x32x32xf32, #tpu.memory_space<vmem>>, vector<1x32x32xf32>
    %455 = vector.shape_cast %454 : vector<1x32x32xf32> to vector<32x32xf32>
    %cst_274 = arith.constant dense<0.000000e+00> : vector<2x32xf32>
    %456 = tpu.matmul %450, %455, %cst_274 {dimension_numbers = #tpu.dot_dimension_numbers<[1], [0], [0], [1], [0, 0, 1, 1], [], []>} : vector<2x32xf32>, vector<32x32xf32>, vector<2x32xf32> -> vector<2x32xf32>
    %c0_275 = arith.constant 0 : index
    %c0_276 = arith.constant 0 : index
    %c0_277 = arith.constant 0 : index
    %457 = vector.load %arg8[%c0_275, %c0_276, %c0_277] : memref<3x1x32xf32, #tpu.memory_space<vmem>>, vector<1x1x32xf32>
    %458 = vector.shape_cast %457 : vector<1x1x32xf32> to vector<1x32xf32>
    %459 = vector.broadcast %458 : vector<1x32xf32> to vector<2x32xf32>
    %460 = arith.addf %456, %459 : vector<2x32xf32>
    %c1_278 = arith.constant 1 : index
    %c0_279 = arith.constant 0 : index
    %c0_280 = arith.constant 0 : index
    %461 = vector.load %arg6[%c1_278, %c0_279, %c0_280] : memref<3x32x32xf32, #tpu.memory_space<vmem>>, vector<1x32x32xf32>
    %462 = vector.shape_cast %461 : vector<1x32x32xf32> to vector<32x32xf32>
    %cst_281 = arith.constant dense<0.000000e+00> : vector<2x32xf32>
    %463 = tpu.matmul %450, %462, %cst_281 {dimension_numbers = #tpu.dot_dimension_numbers<[1], [0], [0], [1], [0, 0, 1, 1], [], []>} : vector<2x32xf32>, vector<32x32xf32>, vector<2x32xf32> -> vector<2x32xf32>
    %c1_282 = arith.constant 1 : index
    %c0_283 = arith.constant 0 : index
    %c0_284 = arith.constant 0 : index
    %464 = vector.load %arg8[%c1_282, %c0_283, %c0_284] : memref<3x1x32xf32, #tpu.memory_space<vmem>>, vector<1x1x32xf32>
    %465 = vector.shape_cast %464 : vector<1x1x32xf32> to vector<1x32xf32>
    %466 = vector.broadcast %465 : vector<1x32xf32> to vector<2x32xf32>
    %467 = arith.addf %463, %466 : vector<2x32xf32>
    %c2_285 = arith.constant 2 : index
    %c0_286 = arith.constant 0 : index
    %c0_287 = arith.constant 0 : index
    %468 = vector.load %arg6[%c2_285, %c0_286, %c0_287] : memref<3x32x32xf32, #tpu.memory_space<vmem>>, vector<1x32x32xf32>
    %469 = vector.shape_cast %468 : vector<1x32x32xf32> to vector<32x32xf32>
    %cst_288 = arith.constant dense<0.000000e+00> : vector<2x32xf32>
    %470 = tpu.matmul %450, %469, %cst_288 {dimension_numbers = #tpu.dot_dimension_numbers<[1], [0], [0], [1], [0, 0, 1, 1], [], []>} : vector<2x32xf32>, vector<32x32xf32>, vector<2x32xf32> -> vector<2x32xf32>
    %c2_289 = arith.constant 2 : index
    %c0_290 = arith.constant 0 : index
    %c0_291 = arith.constant 0 : index
    %471 = vector.load %arg8[%c2_289, %c0_290, %c0_291] : memref<3x1x32xf32, #tpu.memory_space<vmem>>, vector<1x1x32xf32>
    %472 = vector.shape_cast %471 : vector<1x1x32xf32> to vector<1x32xf32>
    %473 = vector.broadcast %472 : vector<1x32xf32> to vector<2x32xf32>
    %474 = arith.addf %470, %473 : vector<2x32xf32>
    %475 = arith.addf %451, %460 : vector<2x32xf32>
    %476 = arith.negf %475 : vector<2x32xf32>
    %477 = math.exp %476 : vector<2x32xf32>
    %cst_292 = arith.constant 1.000000e+00 : f32
    %478 = vector.broadcast %cst_292 : f32 to vector<2x32xf32>
    %479 = arith.addf %478, %477 : vector<2x32xf32>
    %480 = arith.divf %478, %479 : vector<2x32xf32>
    %481 = arith.addf %452, %467 : vector<2x32xf32>
    %482 = arith.negf %481 : vector<2x32xf32>
    %483 = math.exp %482 : vector<2x32xf32>
    %cst_293 = arith.constant 1.000000e+00 : f32
    %484 = vector.broadcast %cst_293 : f32 to vector<2x32xf32>
    %485 = arith.addf %484, %483 : vector<2x32xf32>
    %486 = arith.divf %484, %485 : vector<2x32xf32>
    %487 = arith.mulf %480, %474 : vector<2x32xf32>
    %488 = arith.addf %453, %487 : vector<2x32xf32>
    %489 = math.tanh %488 : vector<2x32xf32>
    %cst_294 = arith.constant 1.000000e+00 : f32
    %490 = vector.broadcast %cst_294 : f32 to vector<2x32xf32>
    %491 = arith.subf %490, %486 : vector<2x32xf32>
    %492 = arith.mulf %491, %489 : vector<2x32xf32>
    %493 = arith.mulf %486, %450 : vector<2x32xf32>
    %494 = arith.addf %492, %493 : vector<2x32xf32>
    %495 = vector.extract_strided_slice %391 {offsets = [4, 0], sizes = [2, 32], strides = [1, 1]} : vector<16x32xf32> to vector<2x32xf32>
    %496 = vector.extract_strided_slice %398 {offsets = [4, 0], sizes = [2, 32], strides = [1, 1]} : vector<16x32xf32> to vector<2x32xf32>
    %497 = vector.extract_strided_slice %405 {offsets = [4, 0], sizes = [2, 32], strides = [1, 1]} : vector<16x32xf32> to vector<2x32xf32>
    %c0_295 = arith.constant 0 : index
    %c0_296 = arith.constant 0 : index
    %c0_297 = arith.constant 0 : index
    %498 = vector.load %arg6[%c0_295, %c0_296, %c0_297] : memref<3x32x32xf32, #tpu.memory_space<vmem>>, vector<1x32x32xf32>
    %499 = vector.shape_cast %498 : vector<1x32x32xf32> to vector<32x32xf32>
    %cst_298 = arith.constant dense<0.000000e+00> : vector<2x32xf32>
    %500 = tpu.matmul %494, %499, %cst_298 {dimension_numbers = #tpu.dot_dimension_numbers<[1], [0], [0], [1], [0, 0, 1, 1], [], []>} : vector<2x32xf32>, vector<32x32xf32>, vector<2x32xf32> -> vector<2x32xf32>
    %c0_299 = arith.constant 0 : index
    %c0_300 = arith.constant 0 : index
    %c0_301 = arith.constant 0 : index
    %501 = vector.load %arg8[%c0_299, %c0_300, %c0_301] : memref<3x1x32xf32, #tpu.memory_space<vmem>>, vector<1x1x32xf32>
    %502 = vector.shape_cast %501 : vector<1x1x32xf32> to vector<1x32xf32>
    %503 = vector.broadcast %502 : vector<1x32xf32> to vector<2x32xf32>
    %504 = arith.addf %500, %503 : vector<2x32xf32>
    %c1_302 = arith.constant 1 : index
    %c0_303 = arith.constant 0 : index
    %c0_304 = arith.constant 0 : index
    %505 = vector.load %arg6[%c1_302, %c0_303, %c0_304] : memref<3x32x32xf32, #tpu.memory_space<vmem>>, vector<1x32x32xf32>
    %506 = vector.shape_cast %505 : vector<1x32x32xf32> to vector<32x32xf32>
    %cst_305 = arith.constant dense<0.000000e+00> : vector<2x32xf32>
    %507 = tpu.matmul %494, %506, %cst_305 {dimension_numbers = #tpu.dot_dimension_numbers<[1], [0], [0], [1], [0, 0, 1, 1], [], []>} : vector<2x32xf32>, vector<32x32xf32>, vector<2x32xf32> -> vector<2x32xf32>
    %c1_306 = arith.constant 1 : index
    %c0_307 = arith.constant 0 : index
    %c0_308 = arith.constant 0 : index
    %508 = vector.load %arg8[%c1_306, %c0_307, %c0_308] : memref<3x1x32xf32, #tpu.memory_space<vmem>>, vector<1x1x32xf32>
    %509 = vector.shape_cast %508 : vector<1x1x32xf32> to vector<1x32xf32>
    %510 = vector.broadcast %509 : vector<1x32xf32> to vector<2x32xf32>
    %511 = arith.addf %507, %510 : vector<2x32xf32>
    %c2_309 = arith.constant 2 : index
    %c0_310 = arith.constant 0 : index
    %c0_311 = arith.constant 0 : index
    %512 = vector.load %arg6[%c2_309, %c0_310, %c0_311] : memref<3x32x32xf32, #tpu.memory_space<vmem>>, vector<1x32x32xf32>
    %513 = vector.shape_cast %512 : vector<1x32x32xf32> to vector<32x32xf32>
    %cst_312 = arith.constant dense<0.000000e+00> : vector<2x32xf32>
    %514 = tpu.matmul %494, %513, %cst_312 {dimension_numbers = #tpu.dot_dimension_numbers<[1], [0], [0], [1], [0, 0, 1, 1], [], []>} : vector<2x32xf32>, vector<32x32xf32>, vector<2x32xf32> -> vector<2x32xf32>
    %c2_313 = arith.constant 2 : index
    %c0_314 = arith.constant 0 : index
    %c0_315 = arith.constant 0 : index
    %515 = vector.load %arg8[%c2_313, %c0_314, %c0_315] : memref<3x1x32xf32, #tpu.memory_space<vmem>>, vector<1x1x32xf32>
    %516 = vector.shape_cast %515 : vector<1x1x32xf32> to vector<1x32xf32>
    %517 = vector.broadcast %516 : vector<1x32xf32> to vector<2x32xf32>
    %518 = arith.addf %514, %517 : vector<2x32xf32>
    %519 = arith.addf %495, %504 : vector<2x32xf32>
    %520 = arith.negf %519 : vector<2x32xf32>
    %521 = math.exp %520 : vector<2x32xf32>
    %cst_316 = arith.constant 1.000000e+00 : f32
    %522 = vector.broadcast %cst_316 : f32 to vector<2x32xf32>
    %523 = arith.addf %522, %521 : vector<2x32xf32>
    %524 = arith.divf %522, %523 : vector<2x32xf32>
    %525 = arith.addf %496, %511 : vector<2x32xf32>
    %526 = arith.negf %525 : vector<2x32xf32>
    %527 = math.exp %526 : vector<2x32xf32>
    %cst_317 = arith.constant 1.000000e+00 : f32
    %528 = vector.broadcast %cst_317 : f32 to vector<2x32xf32>
    %529 = arith.addf %528, %527 : vector<2x32xf32>
    %530 = arith.divf %528, %529 : vector<2x32xf32>
    %531 = arith.mulf %524, %518 : vector<2x32xf32>
    %532 = arith.addf %497, %531 : vector<2x32xf32>
    %533 = math.tanh %532 : vector<2x32xf32>
    %cst_318 = arith.constant 1.000000e+00 : f32
    %534 = vector.broadcast %cst_318 : f32 to vector<2x32xf32>
    %535 = arith.subf %534, %530 : vector<2x32xf32>
    %536 = arith.mulf %535, %533 : vector<2x32xf32>
    %537 = arith.mulf %530, %494 : vector<2x32xf32>
    %538 = arith.addf %536, %537 : vector<2x32xf32>
    %539 = vector.extract_strided_slice %391 {offsets = [6, 0], sizes = [2, 32], strides = [1, 1]} : vector<16x32xf32> to vector<2x32xf32>
    %540 = vector.extract_strided_slice %398 {offsets = [6, 0], sizes = [2, 32], strides = [1, 1]} : vector<16x32xf32> to vector<2x32xf32>
    %541 = vector.extract_strided_slice %405 {offsets = [6, 0], sizes = [2, 32], strides = [1, 1]} : vector<16x32xf32> to vector<2x32xf32>
    %c0_319 = arith.constant 0 : index
    %c0_320 = arith.constant 0 : index
    %c0_321 = arith.constant 0 : index
    %542 = vector.load %arg6[%c0_319, %c0_320, %c0_321] : memref<3x32x32xf32, #tpu.memory_space<vmem>>, vector<1x32x32xf32>
    %543 = vector.shape_cast %542 : vector<1x32x32xf32> to vector<32x32xf32>
    %cst_322 = arith.constant dense<0.000000e+00> : vector<2x32xf32>
    %544 = tpu.matmul %538, %543, %cst_322 {dimension_numbers = #tpu.dot_dimension_numbers<[1], [0], [0], [1], [0, 0, 1, 1], [], []>} : vector<2x32xf32>, vector<32x32xf32>, vector<2x32xf32> -> vector<2x32xf32>
    %c0_323 = arith.constant 0 : index
    %c0_324 = arith.constant 0 : index
    %c0_325 = arith.constant 0 : index
    %545 = vector.load %arg8[%c0_323, %c0_324, %c0_325] : memref<3x1x32xf32, #tpu.memory_space<vmem>>, vector<1x1x32xf32>
    %546 = vector.shape_cast %545 : vector<1x1x32xf32> to vector<1x32xf32>
    %547 = vector.broadcast %546 : vector<1x32xf32> to vector<2x32xf32>
    %548 = arith.addf %544, %547 : vector<2x32xf32>
    %c1_326 = arith.constant 1 : index
    %c0_327 = arith.constant 0 : index
    %c0_328 = arith.constant 0 : index
    %549 = vector.load %arg6[%c1_326, %c0_327, %c0_328] : memref<3x32x32xf32, #tpu.memory_space<vmem>>, vector<1x32x32xf32>
    %550 = vector.shape_cast %549 : vector<1x32x32xf32> to vector<32x32xf32>
    %cst_329 = arith.constant dense<0.000000e+00> : vector<2x32xf32>
    %551 = tpu.matmul %538, %550, %cst_329 {dimension_numbers = #tpu.dot_dimension_numbers<[1], [0], [0], [1], [0, 0, 1, 1], [], []>} : vector<2x32xf32>, vector<32x32xf32>, vector<2x32xf32> -> vector<2x32xf32>
    %c1_330 = arith.constant 1 : index
    %c0_331 = arith.constant 0 : index
    %c0_332 = arith.constant 0 : index
    %552 = vector.load %arg8[%c1_330, %c0_331, %c0_332] : memref<3x1x32xf32, #tpu.memory_space<vmem>>, vector<1x1x32xf32>
    %553 = vector.shape_cast %552 : vector<1x1x32xf32> to vector<1x32xf32>
    %554 = vector.broadcast %553 : vector<1x32xf32> to vector<2x32xf32>
    %555 = arith.addf %551, %554 : vector<2x32xf32>
    %c2_333 = arith.constant 2 : index
    %c0_334 = arith.constant 0 : index
    %c0_335 = arith.constant 0 : index
    %556 = vector.load %arg6[%c2_333, %c0_334, %c0_335] : memref<3x32x32xf32, #tpu.memory_space<vmem>>, vector<1x32x32xf32>
    %557 = vector.shape_cast %556 : vector<1x32x32xf32> to vector<32x32xf32>
    %cst_336 = arith.constant dense<0.000000e+00> : vector<2x32xf32>
    %558 = tpu.matmul %538, %557, %cst_336 {dimension_numbers = #tpu.dot_dimension_numbers<[1], [0], [0], [1], [0, 0, 1, 1], [], []>} : vector<2x32xf32>, vector<32x32xf32>, vector<2x32xf32> -> vector<2x32xf32>
    %c2_337 = arith.constant 2 : index
    %c0_338 = arith.constant 0 : index
    %c0_339 = arith.constant 0 : index
    %559 = vector.load %arg8[%c2_337, %c0_338, %c0_339] : memref<3x1x32xf32, #tpu.memory_space<vmem>>, vector<1x1x32xf32>
    %560 = vector.shape_cast %559 : vector<1x1x32xf32> to vector<1x32xf32>
    %561 = vector.broadcast %560 : vector<1x32xf32> to vector<2x32xf32>
    %562 = arith.addf %558, %561 : vector<2x32xf32>
    %563 = arith.addf %539, %548 : vector<2x32xf32>
    %564 = arith.negf %563 : vector<2x32xf32>
    %565 = math.exp %564 : vector<2x32xf32>
    %cst_340 = arith.constant 1.000000e+00 : f32
    %566 = vector.broadcast %cst_340 : f32 to vector<2x32xf32>
    %567 = arith.addf %566, %565 : vector<2x32xf32>
    %568 = arith.divf %566, %567 : vector<2x32xf32>
    %569 = arith.addf %540, %555 : vector<2x32xf32>
    %570 = arith.negf %569 : vector<2x32xf32>
    %571 = math.exp %570 : vector<2x32xf32>
    %cst_341 = arith.constant 1.000000e+00 : f32
    %572 = vector.broadcast %cst_341 : f32 to vector<2x32xf32>
    %573 = arith.addf %572, %571 : vector<2x32xf32>
    %574 = arith.divf %572, %573 : vector<2x32xf32>
    %575 = arith.mulf %568, %562 : vector<2x32xf32>
    %576 = arith.addf %541, %575 : vector<2x32xf32>
    %577 = math.tanh %576 : vector<2x32xf32>
    %cst_342 = arith.constant 1.000000e+00 : f32
    %578 = vector.broadcast %cst_342 : f32 to vector<2x32xf32>
    %579 = arith.subf %578, %574 : vector<2x32xf32>
    %580 = arith.mulf %579, %577 : vector<2x32xf32>
    %581 = arith.mulf %574, %538 : vector<2x32xf32>
    %582 = arith.addf %580, %581 : vector<2x32xf32>
    %583 = vector.extract_strided_slice %391 {offsets = [8, 0], sizes = [2, 32], strides = [1, 1]} : vector<16x32xf32> to vector<2x32xf32>
    %584 = vector.extract_strided_slice %398 {offsets = [8, 0], sizes = [2, 32], strides = [1, 1]} : vector<16x32xf32> to vector<2x32xf32>
    %585 = vector.extract_strided_slice %405 {offsets = [8, 0], sizes = [2, 32], strides = [1, 1]} : vector<16x32xf32> to vector<2x32xf32>
    %c0_343 = arith.constant 0 : index
    %c0_344 = arith.constant 0 : index
    %c0_345 = arith.constant 0 : index
    %586 = vector.load %arg6[%c0_343, %c0_344, %c0_345] : memref<3x32x32xf32, #tpu.memory_space<vmem>>, vector<1x32x32xf32>
    %587 = vector.shape_cast %586 : vector<1x32x32xf32> to vector<32x32xf32>
    %cst_346 = arith.constant dense<0.000000e+00> : vector<2x32xf32>
    %588 = tpu.matmul %582, %587, %cst_346 {dimension_numbers = #tpu.dot_dimension_numbers<[1], [0], [0], [1], [0, 0, 1, 1], [], []>} : vector<2x32xf32>, vector<32x32xf32>, vector<2x32xf32> -> vector<2x32xf32>
    %c0_347 = arith.constant 0 : index
    %c0_348 = arith.constant 0 : index
    %c0_349 = arith.constant 0 : index
    %589 = vector.load %arg8[%c0_347, %c0_348, %c0_349] : memref<3x1x32xf32, #tpu.memory_space<vmem>>, vector<1x1x32xf32>
    %590 = vector.shape_cast %589 : vector<1x1x32xf32> to vector<1x32xf32>
    %591 = vector.broadcast %590 : vector<1x32xf32> to vector<2x32xf32>
    %592 = arith.addf %588, %591 : vector<2x32xf32>
    %c1_350 = arith.constant 1 : index
    %c0_351 = arith.constant 0 : index
    %c0_352 = arith.constant 0 : index
    %593 = vector.load %arg6[%c1_350, %c0_351, %c0_352] : memref<3x32x32xf32, #tpu.memory_space<vmem>>, vector<1x32x32xf32>
    %594 = vector.shape_cast %593 : vector<1x32x32xf32> to vector<32x32xf32>
    %cst_353 = arith.constant dense<0.000000e+00> : vector<2x32xf32>
    %595 = tpu.matmul %582, %594, %cst_353 {dimension_numbers = #tpu.dot_dimension_numbers<[1], [0], [0], [1], [0, 0, 1, 1], [], []>} : vector<2x32xf32>, vector<32x32xf32>, vector<2x32xf32> -> vector<2x32xf32>
    %c1_354 = arith.constant 1 : index
    %c0_355 = arith.constant 0 : index
    %c0_356 = arith.constant 0 : index
    %596 = vector.load %arg8[%c1_354, %c0_355, %c0_356] : memref<3x1x32xf32, #tpu.memory_space<vmem>>, vector<1x1x32xf32>
    %597 = vector.shape_cast %596 : vector<1x1x32xf32> to vector<1x32xf32>
    %598 = vector.broadcast %597 : vector<1x32xf32> to vector<2x32xf32>
    %599 = arith.addf %595, %598 : vector<2x32xf32>
    %c2_357 = arith.constant 2 : index
    %c0_358 = arith.constant 0 : index
    %c0_359 = arith.constant 0 : index
    %600 = vector.load %arg6[%c2_357, %c0_358, %c0_359] : memref<3x32x32xf32, #tpu.memory_space<vmem>>, vector<1x32x32xf32>
    %601 = vector.shape_cast %600 : vector<1x32x32xf32> to vector<32x32xf32>
    %cst_360 = arith.constant dense<0.000000e+00> : vector<2x32xf32>
    %602 = tpu.matmul %582, %601, %cst_360 {dimension_numbers = #tpu.dot_dimension_numbers<[1], [0], [0], [1], [0, 0, 1, 1], [], []>} : vector<2x32xf32>, vector<32x32xf32>, vector<2x32xf32> -> vector<2x32xf32>
    %c2_361 = arith.constant 2 : index
    %c0_362 = arith.constant 0 : index
    %c0_363 = arith.constant 0 : index
    %603 = vector.load %arg8[%c2_361, %c0_362, %c0_363] : memref<3x1x32xf32, #tpu.memory_space<vmem>>, vector<1x1x32xf32>
    %604 = vector.shape_cast %603 : vector<1x1x32xf32> to vector<1x32xf32>
    %605 = vector.broadcast %604 : vector<1x32xf32> to vector<2x32xf32>
    %606 = arith.addf %602, %605 : vector<2x32xf32>
    %607 = arith.addf %583, %592 : vector<2x32xf32>
    %608 = arith.negf %607 : vector<2x32xf32>
    %609 = math.exp %608 : vector<2x32xf32>
    %cst_364 = arith.constant 1.000000e+00 : f32
    %610 = vector.broadcast %cst_364 : f32 to vector<2x32xf32>
    %611 = arith.addf %610, %609 : vector<2x32xf32>
    %612 = arith.divf %610, %611 : vector<2x32xf32>
    %613 = arith.addf %584, %599 : vector<2x32xf32>
    %614 = arith.negf %613 : vector<2x32xf32>
    %615 = math.exp %614 : vector<2x32xf32>
    %cst_365 = arith.constant 1.000000e+00 : f32
    %616 = vector.broadcast %cst_365 : f32 to vector<2x32xf32>
    %617 = arith.addf %616, %615 : vector<2x32xf32>
    %618 = arith.divf %616, %617 : vector<2x32xf32>
    %619 = arith.mulf %612, %606 : vector<2x32xf32>
    %620 = arith.addf %585, %619 : vector<2x32xf32>
    %621 = math.tanh %620 : vector<2x32xf32>
    %cst_366 = arith.constant 1.000000e+00 : f32
    %622 = vector.broadcast %cst_366 : f32 to vector<2x32xf32>
    %623 = arith.subf %622, %618 : vector<2x32xf32>
    %624 = arith.mulf %623, %621 : vector<2x32xf32>
    %625 = arith.mulf %618, %582 : vector<2x32xf32>
    %626 = arith.addf %624, %625 : vector<2x32xf32>
    %627 = vector.extract_strided_slice %391 {offsets = [10, 0], sizes = [2, 32], strides = [1, 1]} : vector<16x32xf32> to vector<2x32xf32>
    %628 = vector.extract_strided_slice %398 {offsets = [10, 0], sizes = [2, 32], strides = [1, 1]} : vector<16x32xf32> to vector<2x32xf32>
    %629 = vector.extract_strided_slice %405 {offsets = [10, 0], sizes = [2, 32], strides = [1, 1]} : vector<16x32xf32> to vector<2x32xf32>
    %c0_367 = arith.constant 0 : index
    %c0_368 = arith.constant 0 : index
    %c0_369 = arith.constant 0 : index
    %630 = vector.load %arg6[%c0_367, %c0_368, %c0_369] : memref<3x32x32xf32, #tpu.memory_space<vmem>>, vector<1x32x32xf32>
    %631 = vector.shape_cast %630 : vector<1x32x32xf32> to vector<32x32xf32>
    %cst_370 = arith.constant dense<0.000000e+00> : vector<2x32xf32>
    %632 = tpu.matmul %626, %631, %cst_370 {dimension_numbers = #tpu.dot_dimension_numbers<[1], [0], [0], [1], [0, 0, 1, 1], [], []>} : vector<2x32xf32>, vector<32x32xf32>, vector<2x32xf32> -> vector<2x32xf32>
    %c0_371 = arith.constant 0 : index
    %c0_372 = arith.constant 0 : index
    %c0_373 = arith.constant 0 : index
    %633 = vector.load %arg8[%c0_371, %c0_372, %c0_373] : memref<3x1x32xf32, #tpu.memory_space<vmem>>, vector<1x1x32xf32>
    %634 = vector.shape_cast %633 : vector<1x1x32xf32> to vector<1x32xf32>
    %635 = vector.broadcast %634 : vector<1x32xf32> to vector<2x32xf32>
    %636 = arith.addf %632, %635 : vector<2x32xf32>
    %c1_374 = arith.constant 1 : index
    %c0_375 = arith.constant 0 : index
    %c0_376 = arith.constant 0 : index
    %637 = vector.load %arg6[%c1_374, %c0_375, %c0_376] : memref<3x32x32xf32, #tpu.memory_space<vmem>>, vector<1x32x32xf32>
    %638 = vector.shape_cast %637 : vector<1x32x32xf32> to vector<32x32xf32>
    %cst_377 = arith.constant dense<0.000000e+00> : vector<2x32xf32>
    %639 = tpu.matmul %626, %638, %cst_377 {dimension_numbers = #tpu.dot_dimension_numbers<[1], [0], [0], [1], [0, 0, 1, 1], [], []>} : vector<2x32xf32>, vector<32x32xf32>, vector<2x32xf32> -> vector<2x32xf32>
    %c1_378 = arith.constant 1 : index
    %c0_379 = arith.constant 0 : index
    %c0_380 = arith.constant 0 : index
    %640 = vector.load %arg8[%c1_378, %c0_379, %c0_380] : memref<3x1x32xf32, #tpu.memory_space<vmem>>, vector<1x1x32xf32>
    %641 = vector.shape_cast %640 : vector<1x1x32xf32> to vector<1x32xf32>
    %642 = vector.broadcast %641 : vector<1x32xf32> to vector<2x32xf32>
    %643 = arith.addf %639, %642 : vector<2x32xf32>
    %c2_381 = arith.constant 2 : index
    %c0_382 = arith.constant 0 : index
    %c0_383 = arith.constant 0 : index
    %644 = vector.load %arg6[%c2_381, %c0_382, %c0_383] : memref<3x32x32xf32, #tpu.memory_space<vmem>>, vector<1x32x32xf32>
    %645 = vector.shape_cast %644 : vector<1x32x32xf32> to vector<32x32xf32>
    %cst_384 = arith.constant dense<0.000000e+00> : vector<2x32xf32>
    %646 = tpu.matmul %626, %645, %cst_384 {dimension_numbers = #tpu.dot_dimension_numbers<[1], [0], [0], [1], [0, 0, 1, 1], [], []>} : vector<2x32xf32>, vector<32x32xf32>, vector<2x32xf32> -> vector<2x32xf32>
    %c2_385 = arith.constant 2 : index
    %c0_386 = arith.constant 0 : index
    %c0_387 = arith.constant 0 : index
    %647 = vector.load %arg8[%c2_385, %c0_386, %c0_387] : memref<3x1x32xf32, #tpu.memory_space<vmem>>, vector<1x1x32xf32>
    %648 = vector.shape_cast %647 : vector<1x1x32xf32> to vector<1x32xf32>
    %649 = vector.broadcast %648 : vector<1x32xf32> to vector<2x32xf32>
    %650 = arith.addf %646, %649 : vector<2x32xf32>
    %651 = arith.addf %627, %636 : vector<2x32xf32>
    %652 = arith.negf %651 : vector<2x32xf32>
    %653 = math.exp %652 : vector<2x32xf32>
    %cst_388 = arith.constant 1.000000e+00 : f32
    %654 = vector.broadcast %cst_388 : f32 to vector<2x32xf32>
    %655 = arith.addf %654, %653 : vector<2x32xf32>
    %656 = arith.divf %654, %655 : vector<2x32xf32>
    %657 = arith.addf %628, %643 : vector<2x32xf32>
    %658 = arith.negf %657 : vector<2x32xf32>
    %659 = math.exp %658 : vector<2x32xf32>
    %cst_389 = arith.constant 1.000000e+00 : f32
    %660 = vector.broadcast %cst_389 : f32 to vector<2x32xf32>
    %661 = arith.addf %660, %659 : vector<2x32xf32>
    %662 = arith.divf %660, %661 : vector<2x32xf32>
    %663 = arith.mulf %656, %650 : vector<2x32xf32>
    %664 = arith.addf %629, %663 : vector<2x32xf32>
    %665 = math.tanh %664 : vector<2x32xf32>
    %cst_390 = arith.constant 1.000000e+00 : f32
    %666 = vector.broadcast %cst_390 : f32 to vector<2x32xf32>
    %667 = arith.subf %666, %662 : vector<2x32xf32>
    %668 = arith.mulf %667, %665 : vector<2x32xf32>
    %669 = arith.mulf %662, %626 : vector<2x32xf32>
    %670 = arith.addf %668, %669 : vector<2x32xf32>
    %671 = vector.extract_strided_slice %391 {offsets = [12, 0], sizes = [2, 32], strides = [1, 1]} : vector<16x32xf32> to vector<2x32xf32>
    %672 = vector.extract_strided_slice %398 {offsets = [12, 0], sizes = [2, 32], strides = [1, 1]} : vector<16x32xf32> to vector<2x32xf32>
    %673 = vector.extract_strided_slice %405 {offsets = [12, 0], sizes = [2, 32], strides = [1, 1]} : vector<16x32xf32> to vector<2x32xf32>
    %c0_391 = arith.constant 0 : index
    %c0_392 = arith.constant 0 : index
    %c0_393 = arith.constant 0 : index
    %674 = vector.load %arg6[%c0_391, %c0_392, %c0_393] : memref<3x32x32xf32, #tpu.memory_space<vmem>>, vector<1x32x32xf32>
    %675 = vector.shape_cast %674 : vector<1x32x32xf32> to vector<32x32xf32>
    %cst_394 = arith.constant dense<0.000000e+00> : vector<2x32xf32>
    %676 = tpu.matmul %670, %675, %cst_394 {dimension_numbers = #tpu.dot_dimension_numbers<[1], [0], [0], [1], [0, 0, 1, 1], [], []>} : vector<2x32xf32>, vector<32x32xf32>, vector<2x32xf32> -> vector<2x32xf32>
    %c0_395 = arith.constant 0 : index
    %c0_396 = arith.constant 0 : index
    %c0_397 = arith.constant 0 : index
    %677 = vector.load %arg8[%c0_395, %c0_396, %c0_397] : memref<3x1x32xf32, #tpu.memory_space<vmem>>, vector<1x1x32xf32>
    %678 = vector.shape_cast %677 : vector<1x1x32xf32> to vector<1x32xf32>
    %679 = vector.broadcast %678 : vector<1x32xf32> to vector<2x32xf32>
    %680 = arith.addf %676, %679 : vector<2x32xf32>
    %c1_398 = arith.constant 1 : index
    %c0_399 = arith.constant 0 : index
    %c0_400 = arith.constant 0 : index
    %681 = vector.load %arg6[%c1_398, %c0_399, %c0_400] : memref<3x32x32xf32, #tpu.memory_space<vmem>>, vector<1x32x32xf32>
    %682 = vector.shape_cast %681 : vector<1x32x32xf32> to vector<32x32xf32>
    %cst_401 = arith.constant dense<0.000000e+00> : vector<2x32xf32>
    %683 = tpu.matmul %670, %682, %cst_401 {dimension_numbers = #tpu.dot_dimension_numbers<[1], [0], [0], [1], [0, 0, 1, 1], [], []>} : vector<2x32xf32>, vector<32x32xf32>, vector<2x32xf32> -> vector<2x32xf32>
    %c1_402 = arith.constant 1 : index
    %c0_403 = arith.constant 0 : index
    %c0_404 = arith.constant 0 : index
    %684 = vector.load %arg8[%c1_402, %c0_403, %c0_404] : memref<3x1x32xf32, #tpu.memory_space<vmem>>, vector<1x1x32xf32>
    %685 = vector.shape_cast %684 : vector<1x1x32xf32> to vector<1x32xf32>
    %686 = vector.broadcast %685 : vector<1x32xf32> to vector<2x32xf32>
    %687 = arith.addf %683, %686 : vector<2x32xf32>
    %c2_405 = arith.constant 2 : index
    %c0_406 = arith.constant 0 : index
    %c0_407 = arith.constant 0 : index
    %688 = vector.load %arg6[%c2_405, %c0_406, %c0_407] : memref<3x32x32xf32, #tpu.memory_space<vmem>>, vector<1x32x32xf32>
    %689 = vector.shape_cast %688 : vector<1x32x32xf32> to vector<32x32xf32>
    %cst_408 = arith.constant dense<0.000000e+00> : vector<2x32xf32>
    %690 = tpu.matmul %670, %689, %cst_408 {dimension_numbers = #tpu.dot_dimension_numbers<[1], [0], [0], [1], [0, 0, 1, 1], [], []>} : vector<2x32xf32>, vector<32x32xf32>, vector<2x32xf32> -> vector<2x32xf32>
    %c2_409 = arith.constant 2 : index
    %c0_410 = arith.constant 0 : index
    %c0_411 = arith.constant 0 : index
    %691 = vector.load %arg8[%c2_409, %c0_410, %c0_411] : memref<3x1x32xf32, #tpu.memory_space<vmem>>, vector<1x1x32xf32>
    %692 = vector.shape_cast %691 : vector<1x1x32xf32> to vector<1x32xf32>
    %693 = vector.broadcast %692 : vector<1x32xf32> to vector<2x32xf32>
    %694 = arith.addf %690, %693 : vector<2x32xf32>
    %695 = arith.addf %671, %680 : vector<2x32xf32>
    %696 = arith.negf %695 : vector<2x32xf32>
    %697 = math.exp %696 : vector<2x32xf32>
    %cst_412 = arith.constant 1.000000e+00 : f32
    %698 = vector.broadcast %cst_412 : f32 to vector<2x32xf32>
    %699 = arith.addf %698, %697 : vector<2x32xf32>
    %700 = arith.divf %698, %699 : vector<2x32xf32>
    %701 = arith.addf %672, %687 : vector<2x32xf32>
    %702 = arith.negf %701 : vector<2x32xf32>
    %703 = math.exp %702 : vector<2x32xf32>
    %cst_413 = arith.constant 1.000000e+00 : f32
    %704 = vector.broadcast %cst_413 : f32 to vector<2x32xf32>
    %705 = arith.addf %704, %703 : vector<2x32xf32>
    %706 = arith.divf %704, %705 : vector<2x32xf32>
    %707 = arith.mulf %700, %694 : vector<2x32xf32>
    %708 = arith.addf %673, %707 : vector<2x32xf32>
    %709 = math.tanh %708 : vector<2x32xf32>
    %cst_414 = arith.constant 1.000000e+00 : f32
    %710 = vector.broadcast %cst_414 : f32 to vector<2x32xf32>
    %711 = arith.subf %710, %706 : vector<2x32xf32>
    %712 = arith.mulf %711, %709 : vector<2x32xf32>
    %713 = arith.mulf %706, %670 : vector<2x32xf32>
    %714 = arith.addf %712, %713 : vector<2x32xf32>
    %715 = vector.extract_strided_slice %391 {offsets = [14, 0], sizes = [2, 32], strides = [1, 1]} : vector<16x32xf32> to vector<2x32xf32>
    %716 = vector.extract_strided_slice %398 {offsets = [14, 0], sizes = [2, 32], strides = [1, 1]} : vector<16x32xf32> to vector<2x32xf32>
    %717 = vector.extract_strided_slice %405 {offsets = [14, 0], sizes = [2, 32], strides = [1, 1]} : vector<16x32xf32> to vector<2x32xf32>
    %c0_415 = arith.constant 0 : index
    %c0_416 = arith.constant 0 : index
    %c0_417 = arith.constant 0 : index
    %718 = vector.load %arg6[%c0_415, %c0_416, %c0_417] : memref<3x32x32xf32, #tpu.memory_space<vmem>>, vector<1x32x32xf32>
    %719 = vector.shape_cast %718 : vector<1x32x32xf32> to vector<32x32xf32>
    %cst_418 = arith.constant dense<0.000000e+00> : vector<2x32xf32>
    %720 = tpu.matmul %714, %719, %cst_418 {dimension_numbers = #tpu.dot_dimension_numbers<[1], [0], [0], [1], [0, 0, 1, 1], [], []>} : vector<2x32xf32>, vector<32x32xf32>, vector<2x32xf32> -> vector<2x32xf32>
    %c0_419 = arith.constant 0 : index
    %c0_420 = arith.constant 0 : index
    %c0_421 = arith.constant 0 : index
    %721 = vector.load %arg8[%c0_419, %c0_420, %c0_421] : memref<3x1x32xf32, #tpu.memory_space<vmem>>, vector<1x1x32xf32>
    %722 = vector.shape_cast %721 : vector<1x1x32xf32> to vector<1x32xf32>
    %723 = vector.broadcast %722 : vector<1x32xf32> to vector<2x32xf32>
    %724 = arith.addf %720, %723 : vector<2x32xf32>
    %c1_422 = arith.constant 1 : index
    %c0_423 = arith.constant 0 : index
    %c0_424 = arith.constant 0 : index
    %725 = vector.load %arg6[%c1_422, %c0_423, %c0_424] : memref<3x32x32xf32, #tpu.memory_space<vmem>>, vector<1x32x32xf32>
    %726 = vector.shape_cast %725 : vector<1x32x32xf32> to vector<32x32xf32>
    %cst_425 = arith.constant dense<0.000000e+00> : vector<2x32xf32>
    %727 = tpu.matmul %714, %726, %cst_425 {dimension_numbers = #tpu.dot_dimension_numbers<[1], [0], [0], [1], [0, 0, 1, 1], [], []>} : vector<2x32xf32>, vector<32x32xf32>, vector<2x32xf32> -> vector<2x32xf32>
    %c1_426 = arith.constant 1 : index
    %c0_427 = arith.constant 0 : index
    %c0_428 = arith.constant 0 : index
    %728 = vector.load %arg8[%c1_426, %c0_427, %c0_428] : memref<3x1x32xf32, #tpu.memory_space<vmem>>, vector<1x1x32xf32>
    %729 = vector.shape_cast %728 : vector<1x1x32xf32> to vector<1x32xf32>
    %730 = vector.broadcast %729 : vector<1x32xf32> to vector<2x32xf32>
    %731 = arith.addf %727, %730 : vector<2x32xf32>
    %c2_429 = arith.constant 2 : index
    %c0_430 = arith.constant 0 : index
    %c0_431 = arith.constant 0 : index
    %732 = vector.load %arg6[%c2_429, %c0_430, %c0_431] : memref<3x32x32xf32, #tpu.memory_space<vmem>>, vector<1x32x32xf32>
    %733 = vector.shape_cast %732 : vector<1x32x32xf32> to vector<32x32xf32>
    %cst_432 = arith.constant dense<0.000000e+00> : vector<2x32xf32>
    %734 = tpu.matmul %714, %733, %cst_432 {dimension_numbers = #tpu.dot_dimension_numbers<[1], [0], [0], [1], [0, 0, 1, 1], [], []>} : vector<2x32xf32>, vector<32x32xf32>, vector<2x32xf32> -> vector<2x32xf32>
    %c2_433 = arith.constant 2 : index
    %c0_434 = arith.constant 0 : index
    %c0_435 = arith.constant 0 : index
    %735 = vector.load %arg8[%c2_433, %c0_434, %c0_435] : memref<3x1x32xf32, #tpu.memory_space<vmem>>, vector<1x1x32xf32>
    %736 = vector.shape_cast %735 : vector<1x1x32xf32> to vector<1x32xf32>
    %737 = vector.broadcast %736 : vector<1x32xf32> to vector<2x32xf32>
    %738 = arith.addf %734, %737 : vector<2x32xf32>
    %739 = arith.addf %715, %724 : vector<2x32xf32>
    %740 = arith.negf %739 : vector<2x32xf32>
    %741 = math.exp %740 : vector<2x32xf32>
    %cst_436 = arith.constant 1.000000e+00 : f32
    %742 = vector.broadcast %cst_436 : f32 to vector<2x32xf32>
    %743 = arith.addf %742, %741 : vector<2x32xf32>
    %744 = arith.divf %742, %743 : vector<2x32xf32>
    %745 = arith.addf %716, %731 : vector<2x32xf32>
    %746 = arith.negf %745 : vector<2x32xf32>
    %747 = math.exp %746 : vector<2x32xf32>
    %cst_437 = arith.constant 1.000000e+00 : f32
    %748 = vector.broadcast %cst_437 : f32 to vector<2x32xf32>
    %749 = arith.addf %748, %747 : vector<2x32xf32>
    %750 = arith.divf %748, %749 : vector<2x32xf32>
    %751 = arith.mulf %744, %738 : vector<2x32xf32>
    %752 = arith.addf %717, %751 : vector<2x32xf32>
    %753 = math.tanh %752 : vector<2x32xf32>
    %cst_438 = arith.constant 1.000000e+00 : f32
    %754 = vector.broadcast %cst_438 : f32 to vector<2x32xf32>
    %755 = arith.subf %754, %750 : vector<2x32xf32>
    %756 = arith.mulf %755, %753 : vector<2x32xf32>
    %757 = arith.mulf %750, %714 : vector<2x32xf32>
    %758 = arith.addf %756, %757 : vector<2x32xf32>
    %c0_439 = arith.constant 0 : index
    %c0_440 = arith.constant 0 : index
    %759 = vector.load %arg9[%c0_439, %c0_440] : memref<32x1xf32, #tpu.memory_space<vmem>>, vector<32x1xf32>
    %cst_441 = arith.constant dense<0.000000e+00> : vector<2x1xf32>
    %760 = tpu.matmul %758, %759, %cst_441 {dimension_numbers = #tpu.dot_dimension_numbers<[1], [0], [0], [1], [0, 0, 1, 1], [], []>} : vector<2x32xf32>, vector<32x1xf32>, vector<2x1xf32> -> vector<2x1xf32>
    %c0_442 = arith.constant 0 : index
    %c0_443 = arith.constant 0 : index
    %761 = vector.load %arg10[%c0_442, %c0_443] : memref<1x1xf32, #tpu.memory_space<vmem>>, vector<1x1xf32>
    %762 = vector.broadcast %761 : vector<1x1xf32> to vector<2x1xf32>
    %763 = arith.addf %760, %762 : vector<2x1xf32>
    %c0_444 = arith.constant 0 : index
    %c0_445 = arith.constant 0 : index
    %764 = vector.load %arg11[%c0_444, %c0_445] : memref<2x1xf32, #tpu.memory_space<vmem>>, vector<2x1xf32>
    tpu.vector_store %arg11[%c0_444, %c0_445], %763 {strides = array<i32>} : memref<2x1xf32, #tpu.memory_space<vmem>>, vector<2x1xf32>,
    return
  }
}

</mosaic_0001>

<llo_original>
// kernel: tpu_custom_call.1
$region0: #{tpu_custom_call.1}
  #allocation0 [shape = 'u32[]', space=smem, size = 0x4, offset = 0x4, fixed_abs, tag = 'smem constant byte address 0x4 - core index']
  #allocation1 [shape = 'u32[72,128]{1,0:T(1,128)}', space=vmem, size = 0x9000, scoped, tag = 'internal scratch']
  #allocation2 [shape = 'f32[16,32]{1,0:T(8,128)}', space=vmem, size = 0x2000, scoped, tag = 'scratch operand']
  #allocation3 [shape = 'f32[1,1]{1,0:T(1,128)S(1)}', space=vmem, size = 0x200, scoped, tag = 'scoped memory for tpu_custom_call.1']
  %s0 = inlined_call_operand.vmem [shape: f32[8,2,1], index: 0, kind: input, shape index: {}]
  %s1 = inlined_call_operand.vmem [shape: f32[3,1,32], index: 1, kind: input, shape index: {}]
  %s2 = inlined_call_operand.hbm [shape: f32[3,32,32], index: 2, kind: input, shape index: {}]
  %s3 = inlined_call_operand.vmem [shape: f32[3,1,32], index: 3, kind: input, shape index: {}]
  %s4 = inlined_call_operand.vmem [shape: f32[3,1,32], index: 4, kind: input, shape index: {}]
  %s5 = inlined_call_operand.hbm [shape: f32[3,32,32], index: 5, kind: input, shape index: {}]
  %s6 = inlined_call_operand.hbm [shape: f32[3,32,32], index: 6, kind: input, shape index: {}]
  %s7 = inlined_call_operand.vmem [shape: f32[3,1,32], index: 7, kind: input, shape index: {}]
  %s8 = inlined_call_operand.vmem [shape: f32[3,1,32], index: 8, kind: input, shape index: {}]
  %s9 = inlined_call_operand.vmem [shape: f32[32,1], index: 9, kind: input, shape index: {}]
  %s10 = inlined_call_operand.<no memory space> [shape: f32[1,1], index: 10, kind: input, shape index: {}]
  %s11 = inlined_call_operand.vmem [shape: f32[2,1], index: 11, kind: output, shape index: {}]
  %s12 = sld [smem:[#allocation0]]
  $region66: #{tpu_custom_call.1} parent=0
    _
  %s14 = ssub.s32 1, %s12
  %s15 = scalar_select 0, %s14, %s12
  %v16 = vstv %s10
  %17 = vst [vmem:[#allocation3] sm:$0x1] %v16
  $region1: #{tpu_custom_call.1} parent=0
    #allocation4 [shape = 'u8[49152]{0}', space=vmem, size = 0xc000, scoped, tag = 'input window, operand 2, single buffered']
    #allocation5 [shape = 's32[1]{0}', space=sflag, size = 0x4, scoped, tag = 'scoped memory for tpu_custom_call.1']
    #allocation6 [shape = 'u8[49152]{0}', space=vmem, size = 0xc000, scoped, tag = 'input window, operand 5, single buffered']
    #allocation7 [shape = 's32[1]{0}', space=sflag, size = 0x4, scoped, tag = 'scoped memory for tpu_custom_call.1']
    #allocation8 [shape = 'u8[49152]{0}', space=vmem, size = 0xc000, scoped, tag = 'input window, operand 6, single buffered']
    %18 = vsyncpa [#allocation5], 0
    %19 = vsyncpa [#allocation7], 0
    // Predicated region
    $region2: #{tpu_custom_call.1} parent=1 // pred_check
      _
    $region3: #{tpu_custom_call.1} parent=1 // pred_check_branch
      %21 = sbr.rel (0) target = $region5
    $region4: #{tpu_custom_call.1} parent=1 // pred_region
      _
    $region5: #{tpu_custom_call.1} parent=1 // pred_fallthru
      _
    // Predicated region
    $region6: #{tpu_custom_call.1} parent=1 // pred_check
      _
    $region7: #{tpu_custom_call.1} parent=1 // pred_check_branch
      %23 = sbr.rel (0) target = $region9
    $region8: #{tpu_custom_call.1} parent=1 // pred_region
      _
    $region9: #{tpu_custom_call.1} parent=1 // pred_fallthru
      _
    // Predicated region
    $region10: #{tpu_custom_call.1} parent=1 // pred_check
      _
    $region11: #{tpu_custom_call.1} parent=1 // pred_check_branch
      %25 = sbr.rel (0) target = $region13
    $region12: #{tpu_custom_call.1} parent=1 // pred_region
      %27 = vsyncadd [#allocation5], 0
      %s28 = sshll.u32 %s2, 4
      %s29 = int_to_ptr.hbm [resolvable:$true] %s28
      %s30 = sshll.u32 [#allocation4], 4
      %s31 = int_to_ptr.vmem [resolvable:$true] %s30
      %36 = dma.hbm_to_vmem [thread:$0]  %s29, 1536, %s31, [#allocation5], 128, 128, 8
    $region13: #{tpu_custom_call.1} parent=1 // pred_fallthru
      _
    // Predicated region
    $region14: #{tpu_custom_call.1} parent=1 // pred_check
      _
    $region15: #{tpu_custom_call.1} parent=1 // pred_check_branch
      %38 = sbr.rel (0) target = $region17
    $region16: #{tpu_custom_call.1} parent=1 // pred_region
      _
    $region17: #{tpu_custom_call.1} parent=1 // pred_fallthru
      _
    // Predicated region
    $region18: #{tpu_custom_call.1} parent=1 // pred_check
      _
    $region19: #{tpu_custom_call.1} parent=1 // pred_check_branch
      %40 = sbr.rel (0) target = $region21
    $region20: #{tpu_custom_call.1} parent=1 // pred_region
      _
    $region21: #{tpu_custom_call.1} parent=1 // pred_fallthru
      _
    // Predicated region
    $region22: #{tpu_custom_call.1} parent=1 // pred_check
      _
    $region23: #{tpu_custom_call.1} parent=1 // pred_check_branch
      %42 = sbr.rel (0) target = $region25
    $region24: #{tpu_custom_call.1} parent=1 // pred_region
      %44 = vsyncadd [#allocation7], 0
      %s45 = sshll.u32 %s5, 4
      %s46 = int_to_ptr.hbm [resolvable:$true] %s45
      %s47 = sshll.u32 [#allocation6], 4
      %s48 = int_to_ptr.vmem [resolvable:$true] %s47
      %53 = dma.hbm_to_vmem [thread:$0]  %s46, 1536, %s48, [#allocation7], 128, 128, 8
    $region25: #{tpu_custom_call.1} parent=1 // pred_fallthru
      _
    // Predicated region
    $region26: #{tpu_custom_call.1} parent=1 // pred_check
      _
    $region27: #{tpu_custom_call.1} parent=1 // pred_check_branch
      %55 = sbr.rel (0) target = $region29
    $region28: #{tpu_custom_call.1} parent=1 // pred_region
      %57 = vsyncadd [#allocation7], 0
      %s58 = sshll.u32 %s6, 4
      %s59 = int_to_ptr.hbm [resolvable:$true] %s58
      %s60 = sshll.u32 [#allocation8], 4
      %s61 = int_to_ptr.vmem [resolvable:$true] %s60
      %66 = dma.hbm_to_vmem [thread:$0]  %s59, 1536, %s61, [#allocation7], 128, 128, 8
    $region29: #{tpu_custom_call.1} parent=1 // pred_fallthru
      _
    // Predicated region
    $region30: #{tpu_custom_call.1} parent=1 // pred_check
      _
    $region31: #{tpu_custom_call.1} parent=1 // pred_check_branch
      %68 = sbr.rel (0) target = $region33
    $region32: #{tpu_custom_call.1} parent=1 // pred_region
      _
    $region33: #{tpu_custom_call.1} parent=1 // pred_fallthru
      _
    // Predicated region
    $region34: #{tpu_custom_call.1} parent=1 // pred_check
      _
    $region35: #{tpu_custom_call.1} parent=1 // pred_check_branch
      %70 = sbr.rel (0) target = $region37
    $region36: #{tpu_custom_call.1} parent=1 // pred_region
      _
    $region37: #{tpu_custom_call.1} parent=1 // pred_fallthru
      _
    // Predicated region
    $region38: #{tpu_custom_call.1} parent=1 // pred_check
      _
    $region39: #{tpu_custom_call.1} parent=1 // pred_check_branch
      %72 = sbr.rel (0) target = $region41
    $region40: #{tpu_custom_call.1} parent=1 // pred_region
      _
    $region41: #{tpu_custom_call.1} parent=1 // pred_fallthru
      _
    // Predicated region
    $region42: #{tpu_custom_call.1} parent=1 // pred_check
      _
    $region43: #{tpu_custom_call.1} parent=1 // pred_check_branch
      %74 = sbr.rel (0) target = $region45
    $region44: #{tpu_custom_call.1} parent=1 // pred_region
      _
    $region45: #{tpu_custom_call.1} parent=1 // pred_fallthru
      _
    // Predicated region
    $region46: #{tpu_custom_call.1} parent=1 // pred_check
      _
    $region47: #{tpu_custom_call.1} parent=1 // pred_check_branch
      %76 = sbr.rel (0) target = $region49
    $region48: #{tpu_custom_call.1} parent=1 // pred_region
      %78 = dma.done [#allocation5], 1536
    $region49: #{tpu_custom_call.1} parent=1 // pred_fallthru
      _
    // Predicated region
    $region50: #{tpu_custom_call.1} parent=1 // pred_check
      _
    $region51: #{tpu_custom_call.1} parent=1 // pred_check_branch
      %80 = sbr.rel (0) target = $region53
    $region52: #{tpu_custom_call.1} parent=1 // pred_region
      %82 = dma.done [#allocation7], 1536
    $region53: #{tpu_custom_call.1} parent=1 // pred_fallthru
      _
    // Predicated region
    $region54: #{tpu_custom_call.1} parent=1 // pred_check
      _
    $region55: #{tpu_custom_call.1} parent=1 // pred_check_branch
      %84 = sbr.rel (0) target = $region57
    $region56: #{tpu_custom_call.1} parent=1 // pred_region
      %86 = dma.done [#allocation7], 1536
    $region57: #{tpu_custom_call.1} parent=1 // pred_fallthru
      _
    %v87 = vld [vmem:[%s0] sm:$0x3]
    %v88 = vld [vmem:[%s0 + $0x2] sm:$0x3]
    %v89 = vld [vmem:[%s0 + $0x4] sm:$0x3]
    %v90 = vld [vmem:[%s0 + $0x6] sm:$0x3]
    %v91 = vld [vmem:[%s0 + $0x8] sm:$0x3]
    %v92 = vld [vmem:[%s0 + $0xa] sm:$0x3]
    %v93 = vld [vmem:[%s0 + $0xc] sm:$0x3]
    %v94 = vld [vmem:[%s0 + $0xe] sm:$0x3]
    %v95 = vld [vmem:[%s1] sm:$0x1]
    %v96 = vld [vmem:[%s3] sm:$0x1]
    %v98 = vperm.slane %v96, 0
    %108 = vst [vmem:[#allocation1] ss:$4 sm:$0xff] %v87
    %s109 = scalar_lea.vmem [#allocation1], 1
    %110 = vst [vmem:[%s109] ss:$4 sm:$0xff] %v88
    %s111 = scalar_lea.vmem [#allocation1], 2
    %112 = vst [vmem:[%s111] ss:$4 sm:$0xff] %v89
    %s113 = scalar_lea.vmem [#allocation1], 3
    %114 = vst [vmem:[%s113] ss:$4 sm:$0xff] %v90
    %s115 = scalar_lea.vmem [#allocation1], 32
    %116 = vst [vmem:[%s115] ss:$4 sm:$0xff] %v91
    %s117 = scalar_lea.vmem [#allocation1], 33
    %118 = vst [vmem:[%s117] ss:$4 sm:$0xff] %v92
    %s119 = scalar_lea.vmem [#allocation1], 34
    %120 = vst [vmem:[%s119] ss:$4 sm:$0xff] %v93
    %s121 = scalar_lea.vmem [#allocation1], 35
    %122 = vst [vmem:[%s121] ss:$4 sm:$0xff] %v94
    %v123 = vld.sshfl [vmem:[#allocation1] sm:$0xff pattern:$0x73625140]
    %v124 = vld.sshfl [vmem:[#allocation1 + $0x20] sm:$0xff pattern:$0x73625140]
    %vm125 = vcmask 7168
    %v126 = vsel %vm125, %v123, 0
    %v128 = vsel %vm125, %v124, 0
    %vm130 = vcmask 1040384
    %v132 = vsel %vm130, %v95, 0
    %134 = vmatpush.msra.mxu0 0.0
    %135 = vmatpush.msra.mxu0 0.0
    %136 = vmatpush.msra.mxu0 0.0
    %137 = vmatpush.msra.mxu0 0.0
    %138 = vmatpush.msra.mxu0 0.0
    %139 = vmatpush.msra.mxu0 0.0
    %140 = vmatpush.msra.mxu0 0.0
    %141 = vmatpush.msra.mxu0 0.0
    %142 = vmatpush.msra.mxu0 0.0
    %143 = vmatpush.msra.mxu0 0.0
    %144 = vmatpush.msra.mxu0 0.0
    %145 = vmatpush.msra.mxu0 0.0
    %146 = vmatpush.msra.mxu0 0.0
    %147 = vmatpush.msra.mxu0 0.0
    %148 = vmatpush.msra.mxu0 0.0
    %149 = vmatpush.msra.mxu0 %v132
    %150 = vmatmul.f32.gmra.mxu0 %v126
    %v151 = vpop.f32.mrf.mxu0
    %v152 = vadd.f32 %v98, %v151
    %153 = vmatmul.f32.gmra.mxu0 %v128
    %v154 = vpop.f32.mrf.mxu0
    %v155 = vadd.f32 %v98, %v154
    %156 = vdwg.mxu0
    %s157 = scalar_lea.vmem %s1, 1
    %v158 = vld [vmem:[%s157] sm:$0x1]
    %s159 = scalar_lea.vmem %s3, 1
    %v160 = vld [vmem:[%s159] sm:$0x1]
    %v162 = vperm.slane %v160, 0
    %164 = vst [vmem:[#allocation1] ss:$4 sm:$0xff] %v87
    %s165 = scalar_lea.vmem [#allocation1], 1
    %166 = vst [vmem:[%s165] ss:$4 sm:$0xff] %v88
    %s167 = scalar_lea.vmem [#allocation1], 2
    %168 = vst [vmem:[%s167] ss:$4 sm:$0xff] %v89
    %s169 = scalar_lea.vmem [#allocation1], 3
    %170 = vst [vmem:[%s169] ss:$4 sm:$0xff] %v90
    %s171 = scalar_lea.vmem [#allocation1], 32
    %172 = vst [vmem:[%s171] ss:$4 sm:$0xff] %v91
    %s173 = scalar_lea.vmem [#allocation1], 33
    %174 = vst [vmem:[%s173] ss:$4 sm:$0xff] %v92
    %s175 = scalar_lea.vmem [#allocation1], 34
    %176 = vst [vmem:[%s175] ss:$4 sm:$0xff] %v93
    %s177 = scalar_lea.vmem [#allocation1], 35
    %178 = vst [vmem:[%s177] ss:$4 sm:$0xff] %v94
    %v179 = vld.sshfl [vmem:[#allocation1] sm:$0xff pattern:$0x73625140]
    %v180 = vld.sshfl [vmem:[#allocation1 + $0x20] sm:$0xff pattern:$0x73625140]
    %v181 = vsel %vm125, %v179, 0
    %v183 = vsel %vm125, %v180, 0
    %v186 = vsel %vm130, %v158, 0
    %188 = vmatpush.msra.mxu0 0.0
    %189 = vmatpush.msra.mxu0 0.0
    %190 = vmatpush.msra.mxu0 0.0
    %191 = vmatpush.msra.mxu0 0.0
    %192 = vmatpush.msra.mxu0 0.0
    %193 = vmatpush.msra.mxu0 0.0
    %194 = vmatpush.msra.mxu0 0.0
    %195 = vmatpush.msra.mxu0 0.0
    %196 = vmatpush.msra.mxu0 0.0
    %197 = vmatpush.msra.mxu0 0.0
    %198 = vmatpush.msra.mxu0 0.0
    %199 = vmatpush.msra.mxu0 0.0
    %200 = vmatpush.msra.mxu0 0.0
    %201 = vmatpush.msra.mxu0 0.0
    %202 = vmatpush.msra.mxu0 0.0
    %203 = vmatpush.msra.mxu0 %v186
    %204 = vmatmul.f32.gmra.mxu0 %v181
    %v205 = vpop.f32.mrf.mxu0
    %v206 = vadd.f32 %v162, %v205
    %207 = vmatmul.f32.gmra.mxu0 %v183
    %v208 = vpop.f32.mrf.mxu0
    %v209 = vadd.f32 %v162, %v208
    %210 = vdwg.mxu0
    %s211 = scalar_lea.vmem %s1, 2
    %v212 = vld [vmem:[%s211] sm:$0x1]
    %s213 = scalar_lea.vmem %s3, 2
    %v214 = vld [vmem:[%s213] sm:$0x1]
    %v216 = vperm.slane %v214, 0
    %218 = vst [vmem:[#allocation1] ss:$4 sm:$0xff] %v87
    %s219 = scalar_lea.vmem [#allocation1], 1
    %220 = vst [vmem:[%s219] ss:$4 sm:$0xff] %v88
    %s221 = scalar_lea.vmem [#allocation1], 2
    %222 = vst [vmem:[%s221] ss:$4 sm:$0xff] %v89
    %s223 = scalar_lea.vmem [#allocation1], 3
    %224 = vst [vmem:[%s223] ss:$4 sm:$0xff] %v90
    %s225 = scalar_lea.vmem [#allocation1], 32
    %226 = vst [vmem:[%s225] ss:$4 sm:$0xff] %v91
    %s227 = scalar_lea.vmem [#allocation1], 33
    %228 = vst [vmem:[%s227] ss:$4 sm:$0xff] %v92
    %s229 = scalar_lea.vmem [#allocation1], 34
    %230 = vst [vmem:[%s229] ss:$4 sm:$0xff] %v93
    %s231 = scalar_lea.vmem [#allocation1], 35
    %232 = vst [vmem:[%s231] ss:$4 sm:$0xff] %v94
    %v233 = vld.sshfl [vmem:[#allocation1] sm:$0xff pattern:$0x73625140]
    %v234 = vld.sshfl [vmem:[#allocation1 + $0x20] sm:$0xff pattern:$0x73625140]
    %v235 = vsel %vm125, %v233, 0
    %v237 = vsel %vm125, %v234, 0
    %v240 = vsel %vm130, %v212, 0
    %242 = vmatpush.msra.mxu0 0.0
    %243 = vmatpush.msra.mxu0 0.0
    %244 = vmatpush.msra.mxu0 0.0
    %245 = vmatpush.msra.mxu0 0.0
    %246 = vmatpush.msra.mxu0 0.0
    %247 = vmatpush.msra.mxu0 0.0
    %248 = vmatpush.msra.mxu0 0.0
    %249 = vmatpush.msra.mxu0 0.0
    %250 = vmatpush.msra.mxu0 0.0
    %251 = vmatpush.msra.mxu0 0.0
    %252 = vmatpush.msra.mxu0 0.0
    %253 = vmatpush.msra.mxu0 0.0
    %254 = vmatpush.msra.mxu0 0.0
    %255 = vmatpush.msra.mxu0 0.0
    %256 = vmatpush.msra.mxu0 0.0
    %257 = vmatpush.msra.mxu0 %v240
    %258 = vmatmul.f32.gmra.mxu0 %v235
    %v259 = vpop.f32.mrf.mxu0
    %v260 = vadd.f32 %v216, %v259
    %261 = vmatmul.f32.gmra.mxu0 %v237
    %v262 = vpop.f32.mrf.mxu0
    %v263 = vadd.f32 %v216, %v262
    %264 = vdwg.mxu0
    %v265 = vld [vmem:[#allocation4] sm:$0xff]
    %v266 = vld [vmem:[#allocation4 + $0x8] sm:$0xff]
    %v267 = vld [vmem:[#allocation4 + $0x10] sm:$0xff]
    %v268 = vld [vmem:[#allocation4 + $0x18] sm:$0xff]
    %v269 = vld [vmem:[%s4] sm:$0x1]
    %v271 = vperm.slane %v269, 0
    %vm273 = vcmask 261120
    %v275 = vsel %vm273, 0.0, 0
    %277 = vmatpush.msra.mxu0 0.0
    %278 = vmatpush.msra.mxu0 0.0
    %279 = vmatpush.msra.mxu0 0.0
    %280 = vmatpush.msra.mxu0 0.0
    %281 = vmatpush.msra.mxu0 0.0
    %282 = vmatpush.msra.mxu0 0.0
    %283 = vmatpush.msra.mxu0 0.0
    %284 = vmatpush.msra.mxu0 0.0
    %285 = vmatpush.msra.mxu0 0.0
    %286 = vmatpush.msra.mxu0 0.0
    %287 = vmatpush.msra.mxu0 0.0
    %288 = vmatpush.msra.mxu0 0.0
    %289 = vmatpush.msra.mxu0 %v268
    %290 = vmatpush.msra.mxu0 %v267
    %291 = vmatpush.msra.mxu0 %v266
    %292 = vmatpush.msra.mxu0 %v265
    %293 = vmatmul.f32.gmra.mxu0 %v275
    %v294 = vpop.f32.mrf.mxu0
    %v295 = vadd.f32 %v271, %v294
    %296 = vdwg.mxu0
    %s297 = scalar_lea.vmem [#allocation4], 32
    %v298 = vld [vmem:[%s297] sm:$0xff]
    %v299 = vld [vmem:[%s297 + $0x8] sm:$0xff]
    %v300 = vld [vmem:[%s297 + $0x10] sm:$0xff]
    %v301 = vld [vmem:[%s297 + $0x18] sm:$0xff]
    %s302 = scalar_lea.vmem %s4, 1
    %v303 = vld [vmem:[%s302] sm:$0x1]
    %v305 = vperm.slane %v303, 0
    %307 = vmatpush.msra.mxu0 0.0
    %308 = vmatpush.msra.mxu0 0.0
    %309 = vmatpush.msra.mxu0 0.0
    %310 = vmatpush.msra.mxu0 0.0
    %311 = vmatpush.msra.mxu0 0.0
    %312 = vmatpush.msra.mxu0 0.0
    %313 = vmatpush.msra.mxu0 0.0
    %314 = vmatpush.msra.mxu0 0.0
    %315 = vmatpush.msra.mxu0 0.0
    %316 = vmatpush.msra.mxu0 0.0
    %317 = vmatpush.msra.mxu0 0.0
    %318 = vmatpush.msra.mxu0 0.0
    %319 = vmatpush.msra.mxu0 %v301
    %320 = vmatpush.msra.mxu0 %v300
    %321 = vmatpush.msra.mxu0 %v299
    %322 = vmatpush.msra.mxu0 %v298
    %323 = vmatmul.f32.gmra.mxu0 %v275
    %v324 = vpop.f32.mrf.mxu0
    %v325 = vadd.f32 %v305, %v324
    %326 = vdwg.mxu0
    %s327 = scalar_lea.vmem [#allocation4], 64
    %v328 = vld [vmem:[%s327] sm:$0xff]
    %v329 = vld [vmem:[%s327 + $0x8] sm:$0xff]
    %v330 = vld [vmem:[%s327 + $0x10] sm:$0xff]
    %v331 = vld [vmem:[%s327 + $0x18] sm:$0xff]
    %s332 = scalar_lea.vmem %s4, 2
    %v333 = vld [vmem:[%s332] sm:$0x1]
    %v335 = vperm.slane %v333, 0
    %337 = vmatpush.msra.mxu0 0.0
    %338 = vmatpush.msra.mxu0 0.0
    %339 = vmatpush.msra.mxu0 0.0
    %340 = vmatpush.msra.mxu0 0.0
    %341 = vmatpush.msra.mxu0 0.0
    %342 = vmatpush.msra.mxu0 0.0
    %343 = vmatpush.msra.mxu0 0.0
    %344 = vmatpush.msra.mxu0 0.0
    %345 = vmatpush.msra.mxu0 0.0
    %346 = vmatpush.msra.mxu0 0.0
    %347 = vmatpush.msra.mxu0 0.0
    %348 = vmatpush.msra.mxu0 0.0
    %349 = vmatpush.msra.mxu0 %v331
    %350 = vmatpush.msra.mxu0 %v330
    %351 = vmatpush.msra.mxu0 %v329
    %352 = vmatpush.msra.mxu0 %v328
    %353 = vmatmul.f32.gmra.mxu0 %v275
    %v354 = vpop.f32.mrf.mxu0
    %v355 = vadd.f32 %v335, %v354
    %356 = vdwg.mxu0
    %v357 = vadd.f32 %v152, %v295
    %v358 = vxor.u32 %v357, 2147483648
    %v359 = vmul.f32 %v358, 1.442695
    %v360 = vpow.pop %v359
    %v361 = vadd.f32 %v360, 1.0
    %v362 = vrcp.pop %v361
    %v363 = vmul.f32 %v361, %v362
    %v364 = vsub.f32 1.0, %v363
    %v365 = vmul.f32 %v362, %v364
    %v366 = vadd.f32 %v362, %v365
    %vm367 = vweird.f32 %v361
    %vm368 = vweird.f32 %v362
    %vm369 = vmor %vm367, %vm368
    %v370 = vsel %vm369, %v362, %v366
    %v371 = vand.u32 2147483647, %v361
    %vm372 = vcmp.eq.f32.partialorder %v371, 8.507059e+37
    %v373 = vand.u32 %v361, 2147483648
    %v374 = vor.u32 1.1754944e-38, %v373
    %v375 = vsel %vm372, %v374, %v370
    %v376 = vmul.f32 1.0, %v375
    %v377 = vadd.f32 %v206, %v325
    %v378 = vxor.u32 %v377, 2147483648
    %v379 = vmul.f32 %v378, 1.442695
    %v380 = vpow.pop %v379
    %v381 = vadd.f32 %v380, 1.0
    %v382 = vrcp.pop %v381
    %v383 = vmul.f32 %v381, %v382
    %v384 = vsub.f32 1.0, %v383
    %v385 = vmul.f32 %v382, %v384
    %v386 = vadd.f32 %v382, %v385
    %vm387 = vweird.f32 %v381
    %vm388 = vweird.f32 %v382
    %vm389 = vmor %vm387, %vm388
    %v390 = vsel %vm389, %v382, %v386
    %v391 = vand.u32 2147483647, %v381
    %vm392 = vcmp.eq.f32.partialorder %v391, 8.507059e+37
    %v393 = vand.u32 %v381, 2147483648
    %v394 = vor.u32 1.1754944e-38, %v393
    %v395 = vsel %vm392, %v394, %v390
    %v396 = vmul.f32 1.0, %v395
    %v397 = vmul.f32 %v376, %v355
    %v398 = vadd.f32 %v260, %v397
    %v399 = vtanh.pop %v398
    %v400 = vsub.f32 1.0, %v396
    %v401 = vmul.f32 %v400, %v399
    %v402 = vmul.f32 %v396, 0.0
    %v403 = vadd.f32 %v401, %v402
    %vm404 = vcmask 254976
    %405 = vst.msk [vmem:[#allocation2] sm:$0x3] %vm404, %v403
    %v406 = vld [vmem:[#allocation4] sm:$0xff]
    %v407 = vld [vmem:[#allocation4 + $0x8] sm:$0xff]
    %v408 = vld [vmem:[#allocation4 + $0x10] sm:$0xff]
    %v409 = vld [vmem:[#allocation4 + $0x18] sm:$0xff]
    %v410 = vld [vmem:[%s4] sm:$0x1]
    %v412 = vperm.slane %v410, 0
    %v415 = vsel %vm273, %v403, 0
    %417 = vmatpush.msra.mxu0 0.0
    %418 = vmatpush.msra.mxu0 0.0
    %419 = vmatpush.msra.mxu0 0.0
    %420 = vmatpush.msra.mxu0 0.0
    %421 = vmatpush.msra.mxu0 0.0
    %422 = vmatpush.msra.mxu0 0.0
    %423 = vmatpush.msra.mxu0 0.0
    %424 = vmatpush.msra.mxu0 0.0
    %425 = vmatpush.msra.mxu0 0.0
    %426 = vmatpush.msra.mxu0 0.0
    %427 = vmatpush.msra.mxu0 0.0
    %428 = vmatpush.msra.mxu0 0.0
    %429 = vmatpush.msra.mxu0 %v409
    %430 = vmatpush.msra.mxu0 %v408
    %431 = vmatpush.msra.mxu0 %v407
    %432 = vmatpush.msra.mxu0 %v406
    %433 = vmatmul.f32.gmra.mxu0 %v415
    %v434 = vpop.f32.mrf.mxu0
    %v435 = vadd.f32 %v412, %v434
    %436 = vdwg.mxu0
    %v437 = vld [vmem:[%s297] sm:$0xff]
    %v438 = vld [vmem:[%s297 + $0x8] sm:$0xff]
    %v439 = vld [vmem:[%s297 + $0x10] sm:$0xff]
    %v440 = vld [vmem:[%s297 + $0x18] sm:$0xff]
    %v441 = vld [vmem:[%s302] sm:$0x1]
    %v443 = vperm.slane %v441, 0
    %445 = vmatpush.msra.mxu0 0.0
    %446 = vmatpush.msra.mxu0 0.0
    %447 = vmatpush.msra.mxu0 0.0
    %448 = vmatpush.msra.mxu0 0.0
    %449 = vmatpush.msra.mxu0 0.0
    %450 = vmatpush.msra.mxu0 0.0
    %451 = vmatpush.msra.mxu0 0.0
    %452 = vmatpush.msra.mxu0 0.0
    %453 = vmatpush.msra.mxu0 0.0
    %454 = vmatpush.msra.mxu0 0.0
    %455 = vmatpush.msra.mxu0 0.0
    %456 = vmatpush.msra.mxu0 0.0
    %457 = vmatpush.msra.mxu0 %v440
    %458 = vmatpush.msra.mxu0 %v439
    %459 = vmatpush.msra.mxu0 %v438
    %460 = vmatpush.msra.mxu0 %v437
    %461 = vmatmul.f32.gmra.mxu0 %v415
    %v462 = vpop.f32.mrf.mxu0
    %v463 = vadd.f32 %v443, %v462
    %464 = vdwg.mxu0
    %v465 = vld [vmem:[%s327] sm:$0xff]
    %v466 = vld [vmem:[%s327 + $0x8] sm:$0xff]
    %v467 = vld [vmem:[%s327 + $0x10] sm:$0xff]
    %v468 = vld [vmem:[%s327 + $0x18] sm:$0xff]
    %v469 = vld [vmem:[%s332] sm:$0x1]
    %v471 = vperm.slane %v469, 0
    %473 = vmatpush.msra.mxu0 0.0
    %474 = vmatpush.msra.mxu0 0.0
    %475 = vmatpush.msra.mxu0 0.0
    %476 = vmatpush.msra.mxu0 0.0
    %477 = vmatpush.msra.mxu0 0.0
    %478 = vmatpush.msra.mxu0 0.0
    %479 = vmatpush.msra.mxu0 0.0
    %480 = vmatpush.msra.mxu0 0.0
    %481 = vmatpush.msra.mxu0 0.0
    %482 = vmatpush.msra.mxu0 0.0
    %483 = vmatpush.msra.mxu0 0.0
    %484 = vmatpush.msra.mxu0 0.0
    %485 = vmatpush.msra.mxu0 %v468
    %486 = vmatpush.msra.mxu0 %v467
    %487 = vmatpush.msra.mxu0 %v466
    %488 = vmatpush.msra.mxu0 %v465
    %489 = vmatmul.f32.gmra.mxu0 %v415
    %v490 = vpop.f32.mrf.mxu0
    %v491 = vadd.f32 %v471, %v490
    %492 = vdwg.mxu0
    %v494 = vrot.slane %v435, 6
    %v496 = vadd.f32 %v152, %v494
    %v497 = vxor.u32 %v496, 2147483648
    %v498 = vmul.f32 %v497, 1.442695
    %v499 = vpow.pop %v498
    %v500 = vadd.f32 %v499, 1.0
    %v501 = vrcp.pop %v500
    %v502 = vmul.f32 %v500, %v501
    %v503 = vsub.f32 1.0, %v502
    %v504 = vmul.f32 %v501, %v503
    %v505 = vadd.f32 %v501, %v504
    %vm506 = vweird.f32 %v500
    %vm507 = vweird.f32 %v501
    %vm508 = vmor %vm506, %vm507
    %v509 = vsel %vm508, %v501, %v505
    %v510 = vand.u32 2147483647, %v500
    %vm511 = vcmp.eq.f32.partialorder %v510, 8.507059e+37
    %v512 = vand.u32 %v500, 2147483648
    %v513 = vor.u32 1.1754944e-38, %v512
    %v514 = vsel %vm511, %v513, %v509
    %v515 = vmul.f32 1.0, %v514
    %v517 = vrot.slane %v463, 6
    %v519 = vadd.f32 %v206, %v517
    %v520 = vxor.u32 %v519, 2147483648
    %v521 = vmul.f32 %v520, 1.442695
    %v522 = vpow.pop %v521
    %v523 = vadd.f32 %v522, 1.0
    %v524 = vrcp.pop %v523
    %v525 = vmul.f32 %v523, %v524
    %v526 = vsub.f32 1.0, %v525
    %v527 = vmul.f32 %v524, %v526
    %v528 = vadd.f32 %v524, %v527
    %vm529 = vweird.f32 %v523
    %vm530 = vweird.f32 %v524
    %vm531 = vmor %vm529, %vm530
    %v532 = vsel %vm531, %v524, %v528
    %v533 = vand.u32 2147483647, %v523
    %vm534 = vcmp.eq.f32.partialorder %v533, 8.507059e+37
    %v535 = vand.u32 %v523, 2147483648
    %v536 = vor.u32 1.1754944e-38, %v535
    %v537 = vsel %vm534, %v536, %v532
    %v538 = vmul.f32 1.0, %v537
    %v540 = vrot.slane %v491, 6
    %v542 = vmul.f32 %v515, %v540
    %v543 = vadd.f32 %v260, %v542
    %v544 = vtanh.pop %v543
    %v545 = vsub.f32 1.0, %v538
    %v546 = vmul.f32 %v545, %v544
    %v547 = vrot.slane %v403, 6
    %v549 = vmul.f32 %v538, %v547
    %v550 = vadd.f32 %v546, %v549
    %vm551 = vcmask 257026
    %552 = vst.msk [vmem:[#allocation2] sm:$0xc] %vm551, %v550
    %v553 = vld [vmem:[#allocation4] sm:$0xff]
    %v554 = vld [vmem:[#allocation4 + $0x8] sm:$0xff]
    %v555 = vld [vmem:[#allocation4 + $0x10] sm:$0xff]
    %v556 = vld [vmem:[#allocation4 + $0x18] sm:$0xff]
    %v557 = vld [vmem:[%s4] sm:$0x1]
    %v559 = vperm.slane %v557, 0
    %v562 = vrot.slane %v550, 2
    %v563 = vsel %vm273, %v562, 0
    %565 = vmatpush.msra.mxu0 0.0
    %566 = vmatpush.msra.mxu0 0.0
    %567 = vmatpush.msra.mxu0 0.0
    %568 = vmatpush.msra.mxu0 0.0
    %569 = vmatpush.msra.mxu0 0.0
    %570 = vmatpush.msra.mxu0 0.0
    %571 = vmatpush.msra.mxu0 0.0
    %572 = vmatpush.msra.mxu0 0.0
    %573 = vmatpush.msra.mxu0 0.0
    %574 = vmatpush.msra.mxu0 0.0
    %575 = vmatpush.msra.mxu0 0.0
    %576 = vmatpush.msra.mxu0 0.0
    %577 = vmatpush.msra.mxu0 %v556
    %578 = vmatpush.msra.mxu0 %v555
    %579 = vmatpush.msra.mxu0 %v554
    %580 = vmatpush.msra.mxu0 %v553
    %581 = vmatmul.f32.gmra.mxu0 %v563
    %v582 = vpop.f32.mrf.mxu0
    %v583 = vadd.f32 %v559, %v582
    %584 = vdwg.mxu0
    %v585 = vld [vmem:[%s297] sm:$0xff]
    %v586 = vld [vmem:[%s297 + $0x8] sm:$0xff]
    %v587 = vld [vmem:[%s297 + $0x10] sm:$0xff]
    %v588 = vld [vmem:[%s297 + $0x18] sm:$0xff]
    %v589 = vld [vmem:[%s302] sm:$0x1]
    %v591 = vperm.slane %v589, 0
    %593 = vmatpush.msra.mxu0 0.0
    %594 = vmatpush.msra.mxu0 0.0
    %595 = vmatpush.msra.mxu0 0.0
    %596 = vmatpush.msra.mxu0 0.0
    %597 = vmatpush.msra.mxu0 0.0
    %598 = vmatpush.msra.mxu0 0.0
    %599 = vmatpush.msra.mxu0 0.0
    %600 = vmatpush.msra.mxu0 0.0
    %601 = vmatpush.msra.mxu0 0.0
    %602 = vmatpush.msra.mxu0 0.0
    %603 = vmatpush.msra.mxu0 0.0
    %604 = vmatpush.msra.mxu0 0.0
    %605 = vmatpush.msra.mxu0 %v588
    %606 = vmatpush.msra.mxu0 %v587
    %607 = vmatpush.msra.mxu0 %v586
    %608 = vmatpush.msra.mxu0 %v585
    %609 = vmatmul.f32.gmra.mxu0 %v563
    %v610 = vpop.f32.mrf.mxu0
    %v611 = vadd.f32 %v591, %v610
    %612 = vdwg.mxu0
    %v613 = vld [vmem:[%s327] sm:$0xff]
    %v614 = vld [vmem:[%s327 + $0x8] sm:$0xff]
    %v615 = vld [vmem:[%s327 + $0x10] sm:$0xff]
    %v616 = vld [vmem:[%s327 + $0x18] sm:$0xff]
    %v617 = vld [vmem:[%s332] sm:$0x1]
    %v619 = vperm.slane %v617, 0
    %621 = vmatpush.msra.mxu0 0.0
    %622 = vmatpush.msra.mxu0 0.0
    %623 = vmatpush.msra.mxu0 0.0
    %624 = vmatpush.msra.mxu0 0.0
    %625 = vmatpush.msra.mxu0 0.0
    %626 = vmatpush.msra.mxu0 0.0
    %627 = vmatpush.msra.mxu0 0.0
    %628 = vmatpush.msra.mxu0 0.0
    %629 = vmatpush.msra.mxu0 0.0
    %630 = vmatpush.msra.mxu0 0.0
    %631 = vmatpush.msra.mxu0 0.0
    %632 = vmatpush.msra.mxu0 0.0
    %633 = vmatpush.msra.mxu0 %v616
    %634 = vmatpush.msra.mxu0 %v615
    %635 = vmatpush.msra.mxu0 %v614
    %636 = vmatpush.msra.mxu0 %v613
    %637 = vmatmul.f32.gmra.mxu0 %v563
    %v638 = vpop.f32.mrf.mxu0
    %v639 = vadd.f32 %v619, %v638
    %640 = vdwg.mxu0
    %v642 = vrot.slane %v583, 4
    %v644 = vadd.f32 %v152, %v642
    %v645 = vxor.u32 %v644, 2147483648
    %v646 = vmul.f32 %v645, 1.442695
    %v647 = vpow.pop %v646
    %v648 = vadd.f32 %v647, 1.0
    %v649 = vrcp.pop %v648
    %v650 = vmul.f32 %v648, %v649
    %v651 = vsub.f32 1.0, %v650
    %v652 = vmul.f32 %v649, %v651
    %v653 = vadd.f32 %v649, %v652
    %vm654 = vweird.f32 %v648
    %vm655 = vweird.f32 %v649
    %vm656 = vmor %vm654, %vm655
    %v657 = vsel %vm656, %v649, %v653
    %v658 = vand.u32 2147483647, %v648
    %vm659 = vcmp.eq.f32.partialorder %v658, 8.507059e+37
    %v660 = vand.u32 %v648, 2147483648
    %v661 = vor.u32 1.1754944e-38, %v660
    %v662 = vsel %vm659, %v661, %v657
    %v663 = vmul.f32 1.0, %v662
    %v665 = vrot.slane %v611, 4
    %v667 = vadd.f32 %v206, %v665
    %v668 = vxor.u32 %v667, 2147483648
    %v669 = vmul.f32 %v668, 1.442695
    %v670 = vpow.pop %v669
    %v671 = vadd.f32 %v670, 1.0
    %v672 = vrcp.pop %v671
    %v673 = vmul.f32 %v671, %v672
    %v674 = vsub.f32 1.0, %v673
    %v675 = vmul.f32 %v672, %v674
    %v676 = vadd.f32 %v672, %v675
    %vm677 = vweird.f32 %v671
    %vm678 = vweird.f32 %v672
    %vm679 = vmor %vm677, %vm678
    %v680 = vsel %vm679, %v672, %v676
    %v681 = vand.u32 2147483647, %v671
    %vm682 = vcmp.eq.f32.partialorder %v681, 8.507059e+37
    %v683 = vand.u32 %v671, 2147483648
    %v684 = vor.u32 1.1754944e-38, %v683
    %v685 = vsel %vm682, %v684, %v680
    %v686 = vmul.f32 1.0, %v685
    %v688 = vrot.slane %v639, 4
    %v690 = vmul.f32 %v663, %v688
    %v691 = vadd.f32 %v260, %v690
    %v692 = vtanh.pop %v691
    %v693 = vsub.f32 1.0, %v686
    %v694 = vmul.f32 %v693, %v692
    %v695 = vrot.slane %v550, 6
    %v697 = vmul.f32 %v686, %v695
    %v698 = vadd.f32 %v694, %v697
    %vm699 = vcmask 259076
    %700 = vst.msk [vmem:[#allocation2] sm:$0x30] %vm699, %v698
    %v701 = vld [vmem:[#allocation4] sm:$0xff]
    %v702 = vld [vmem:[#allocation4 + $0x8] sm:$0xff]
    %v703 = vld [vmem:[#allocation4 + $0x10] sm:$0xff]
    %v704 = vld [vmem:[#allocation4 + $0x18] sm:$0xff]
    %v705 = vld [vmem:[%s4] sm:$0x1]
    %v707 = vperm.slane %v705, 0
    %v710 = vrot.slane %v698, 4
    %v711 = vsel %vm273, %v710, 0
    %713 = vmatpush.msra.mxu0 0.0
    %714 = vmatpush.msra.mxu0 0.0
    %715 = vmatpush.msra.mxu0 0.0
    %716 = vmatpush.msra.mxu0 0.0
    %717 = vmatpush.msra.mxu0 0.0
    %718 = vmatpush.msra.mxu0 0.0
    %719 = vmatpush.msra.mxu0 0.0
    %720 = vmatpush.msra.mxu0 0.0
    %721 = vmatpush.msra.mxu0 0.0
    %722 = vmatpush.msra.mxu0 0.0
    %723 = vmatpush.msra.mxu0 0.0
    %724 = vmatpush.msra.mxu0 0.0
    %725 = vmatpush.msra.mxu0 %v704
    %726 = vmatpush.msra.mxu0 %v703
    %727 = vmatpush.msra.mxu0 %v702
    %728 = vmatpush.msra.mxu0 %v701
    %729 = vmatmul.f32.gmra.mxu0 %v711
    %v730 = vpop.f32.mrf.mxu0
    %v731 = vadd.f32 %v707, %v730
    %732 = vdwg.mxu0
    %v733 = vld [vmem:[%s297] sm:$0xff]
    %v734 = vld [vmem:[%s297 + $0x8] sm:$0xff]
    %v735 = vld [vmem:[%s297 + $0x10] sm:$0xff]
    %v736 = vld [vmem:[%s297 + $0x18] sm:$0xff]
    %v737 = vld [vmem:[%s302] sm:$0x1]
    %v739 = vperm.slane %v737, 0
    %741 = vmatpush.msra.mxu0 0.0
    %742 = vmatpush.msra.mxu0 0.0
    %743 = vmatpush.msra.mxu0 0.0
    %744 = vmatpush.msra.mxu0 0.0
    %745 = vmatpush.msra.mxu0 0.0
    %746 = vmatpush.msra.mxu0 0.0
    %747 = vmatpush.msra.mxu0 0.0
    %748 = vmatpush.msra.mxu0 0.0
    %749 = vmatpush.msra.mxu0 0.0
    %750 = vmatpush.msra.mxu0 0.0
    %751 = vmatpush.msra.mxu0 0.0
    %752 = vmatpush.msra.mxu0 0.0
    %753 = vmatpush.msra.mxu0 %v736
    %754 = vmatpush.msra.mxu0 %v735
    %755 = vmatpush.msra.mxu0 %v734
    %756 = vmatpush.msra.mxu0 %v733
    %757 = vmatmul.f32.gmra.mxu0 %v711
    %v758 = vpop.f32.mrf.mxu0
    %v759 = vadd.f32 %v739, %v758
    %760 = vdwg.mxu0
    %v761 = vld [vmem:[%s327] sm:$0xff]
    %v762 = vld [vmem:[%s327 + $0x8] sm:$0xff]
    %v763 = vld [vmem:[%s327 + $0x10] sm:$0xff]
    %v764 = vld [vmem:[%s327 + $0x18] sm:$0xff]
    %v765 = vld [vmem:[%s332] sm:$0x1]
    %v767 = vperm.slane %v765, 0
    %769 = vmatpush.msra.mxu0 0.0
    %770 = vmatpush.msra.mxu0 0.0
    %771 = vmatpush.msra.mxu0 0.0
    %772 = vmatpush.msra.mxu0 0.0
    %773 = vmatpush.msra.mxu0 0.0
    %774 = vmatpush.msra.mxu0 0.0
    %775 = vmatpush.msra.mxu0 0.0
    %776 = vmatpush.msra.mxu0 0.0
    %777 = vmatpush.msra.mxu0 0.0
    %778 = vmatpush.msra.mxu0 0.0
    %779 = vmatpush.msra.mxu0 0.0
    %780 = vmatpush.msra.mxu0 0.0
    %781 = vmatpush.msra.mxu0 %v764
    %782 = vmatpush.msra.mxu0 %v763
    %783 = vmatpush.msra.mxu0 %v762
    %784 = vmatpush.msra.mxu0 %v761
    %785 = vmatmul.f32.gmra.mxu0 %v711
    %v786 = vpop.f32.mrf.mxu0
    %v787 = vadd.f32 %v767, %v786
    %788 = vdwg.mxu0
    %v790 = vrot.slane %v731, 2
    %v792 = vadd.f32 %v152, %v790
    %v793 = vxor.u32 %v792, 2147483648
    %v794 = vmul.f32 %v793, 1.442695
    %v795 = vpow.pop %v794
    %v796 = vadd.f32 %v795, 1.0
    %v797 = vrcp.pop %v796
    %v798 = vmul.f32 %v796, %v797
    %v799 = vsub.f32 1.0, %v798
    %v800 = vmul.f32 %v797, %v799
    %v801 = vadd.f32 %v797, %v800
    %vm802 = vweird.f32 %v796
    %vm803 = vweird.f32 %v797
    %vm804 = vmor %vm802, %vm803
    %v805 = vsel %vm804, %v797, %v801
    %v806 = vand.u32 2147483647, %v796
    %vm807 = vcmp.eq.f32.partialorder %v806, 8.507059e+37
    %v808 = vand.u32 %v796, 2147483648
    %v809 = vor.u32 1.1754944e-38, %v808
    %v810 = vsel %vm807, %v809, %v805
    %v811 = vmul.f32 1.0, %v810
    %v813 = vrot.slane %v759, 2
    %v815 = vadd.f32 %v206, %v813
    %v816 = vxor.u32 %v815, 2147483648
    %v817 = vmul.f32 %v816, 1.442695
    %v818 = vpow.pop %v817
    %v819 = vadd.f32 %v818, 1.0
    %v820 = vrcp.pop %v819
    %v821 = vmul.f32 %v819, %v820
    %v822 = vsub.f32 1.0, %v821
    %v823 = vmul.f32 %v820, %v822
    %v824 = vadd.f32 %v820, %v823
    %vm825 = vweird.f32 %v819
    %vm826 = vweird.f32 %v820
    %vm827 = vmor %vm825, %vm826
    %v828 = vsel %vm827, %v820, %v824
    %v829 = vand.u32 2147483647, %v819
    %vm830 = vcmp.eq.f32.partialorder %v829, 8.507059e+37
    %v831 = vand.u32 %v819, 2147483648
    %v832 = vor.u32 1.1754944e-38, %v831
    %v833 = vsel %vm830, %v832, %v828
    %v834 = vmul.f32 1.0, %v833
    %v836 = vrot.slane %v787, 2
    %v838 = vmul.f32 %v811, %v836
    %v839 = vadd.f32 %v260, %v838
    %v840 = vtanh.pop %v839
    %v841 = vsub.f32 1.0, %v834
    %v842 = vmul.f32 %v841, %v840
    %v843 = vrot.slane %v698, 6
    %v845 = vmul.f32 %v834, %v843
    %v846 = vadd.f32 %v842, %v845
    %vm847 = vcmask 261126
    %848 = vst.msk [vmem:[#allocation2] sm:$0xc0] %vm847, %v846
    %v849 = vld [vmem:[#allocation4] sm:$0xff]
    %v850 = vld [vmem:[#allocation4 + $0x8] sm:$0xff]
    %v851 = vld [vmem:[#allocation4 + $0x10] sm:$0xff]
    %v852 = vld [vmem:[#allocation4 + $0x18] sm:$0xff]
    %v853 = vld [vmem:[%s4] sm:$0x1]
    %v855 = vperm.slane %v853, 0
    %v858 = vrot.slane %v846, 6
    %v859 = vsel %vm273, %v858, 0
    %861 = vmatpush.msra.mxu0 0.0
    %862 = vmatpush.msra.mxu0 0.0
    %863 = vmatpush.msra.mxu0 0.0
    %864 = vmatpush.msra.mxu0 0.0
    %865 = vmatpush.msra.mxu0 0.0
    %866 = vmatpush.msra.mxu0 0.0
    %867 = vmatpush.msra.mxu0 0.0
    %868 = vmatpush.msra.mxu0 0.0
    %869 = vmatpush.msra.mxu0 0.0
    %870 = vmatpush.msra.mxu0 0.0
    %871 = vmatpush.msra.mxu0 0.0
    %872 = vmatpush.msra.mxu0 0.0
    %873 = vmatpush.msra.mxu0 %v852
    %874 = vmatpush.msra.mxu0 %v851
    %875 = vmatpush.msra.mxu0 %v850
    %876 = vmatpush.msra.mxu0 %v849
    %877 = vmatmul.f32.gmra.mxu0 %v859
    %v878 = vpop.f32.mrf.mxu0
    %v879 = vadd.f32 %v855, %v878
    %880 = vdwg.mxu0
    %v881 = vld [vmem:[%s297] sm:$0xff]
    %v882 = vld [vmem:[%s297 + $0x8] sm:$0xff]
    %v883 = vld [vmem:[%s297 + $0x10] sm:$0xff]
    %v884 = vld [vmem:[%s297 + $0x18] sm:$0xff]
    %v885 = vld [vmem:[%s302] sm:$0x1]
    %v887 = vperm.slane %v885, 0
    %889 = vmatpush.msra.mxu0 0.0
    %890 = vmatpush.msra.mxu0 0.0
    %891 = vmatpush.msra.mxu0 0.0
    %892 = vmatpush.msra.mxu0 0.0
    %893 = vmatpush.msra.mxu0 0.0
    %894 = vmatpush.msra.mxu0 0.0
    %895 = vmatpush.msra.mxu0 0.0
    %896 = vmatpush.msra.mxu0 0.0
    %897 = vmatpush.msra.mxu0 0.0
    %898 = vmatpush.msra.mxu0 0.0
    %899 = vmatpush.msra.mxu0 0.0
    %900 = vmatpush.msra.mxu0 0.0
    %901 = vmatpush.msra.mxu0 %v884
    %902 = vmatpush.msra.mxu0 %v883
    %903 = vmatpush.msra.mxu0 %v882
    %904 = vmatpush.msra.mxu0 %v881
    %905 = vmatmul.f32.gmra.mxu0 %v859
    %v906 = vpop.f32.mrf.mxu0
    %v907 = vadd.f32 %v887, %v906
    %908 = vdwg.mxu0
    %v909 = vld [vmem:[%s327] sm:$0xff]
    %v910 = vld [vmem:[%s327 + $0x8] sm:$0xff]
    %v911 = vld [vmem:[%s327 + $0x10] sm:$0xff]
    %v912 = vld [vmem:[%s327 + $0x18] sm:$0xff]
    %v913 = vld [vmem:[%s332] sm:$0x1]
    %v915 = vperm.slane %v913, 0
    %917 = vmatpush.msra.mxu0 0.0
    %918 = vmatpush.msra.mxu0 0.0
    %919 = vmatpush.msra.mxu0 0.0
    %920 = vmatpush.msra.mxu0 0.0
    %921 = vmatpush.msra.mxu0 0.0
    %922 = vmatpush.msra.mxu0 0.0
    %923 = vmatpush.msra.mxu0 0.0
    %924 = vmatpush.msra.mxu0 0.0
    %925 = vmatpush.msra.mxu0 0.0
    %926 = vmatpush.msra.mxu0 0.0
    %927 = vmatpush.msra.mxu0 0.0
    %928 = vmatpush.msra.mxu0 0.0
    %929 = vmatpush.msra.mxu0 %v912
    %930 = vmatpush.msra.mxu0 %v911
    %931 = vmatpush.msra.mxu0 %v910
    %932 = vmatpush.msra.mxu0 %v909
    %933 = vmatmul.f32.gmra.mxu0 %v859
    %v934 = vpop.f32.mrf.mxu0
    %v935 = vadd.f32 %v915, %v934
    %936 = vdwg.mxu0
    %v937 = vadd.f32 %v155, %v879
    %v938 = vxor.u32 %v937, 2147483648
    %v939 = vmul.f32 %v938, 1.442695
    %v940 = vpow.pop %v939
    %v941 = vadd.f32 %v940, 1.0
    %v942 = vrcp.pop %v941
    %v943 = vmul.f32 %v941, %v942
    %v944 = vsub.f32 1.0, %v943
    %v945 = vmul.f32 %v942, %v944
    %v946 = vadd.f32 %v942, %v945
    %vm947 = vweird.f32 %v941
    %vm948 = vweird.f32 %v942
    %vm949 = vmor %vm947, %vm948
    %v950 = vsel %vm949, %v942, %v946
    %v951 = vand.u32 2147483647, %v941
    %vm952 = vcmp.eq.f32.partialorder %v951, 8.507059e+37
    %v953 = vand.u32 %v941, 2147483648
    %v954 = vor.u32 1.1754944e-38, %v953
    %v955 = vsel %vm952, %v954, %v950
    %v956 = vmul.f32 1.0, %v955
    %v957 = vadd.f32 %v209, %v907
    %v958 = vxor.u32 %v957, 2147483648
    %v959 = vmul.f32 %v958, 1.442695
    %v960 = vpow.pop %v959
    %v961 = vadd.f32 %v960, 1.0
    %v962 = vrcp.pop %v961
    %v963 = vmul.f32 %v961, %v962
    %v964 = vsub.f32 1.0, %v963
    %v965 = vmul.f32 %v962, %v964
    %v966 = vadd.f32 %v962, %v965
    %vm967 = vweird.f32 %v961
    %vm968 = vweird.f32 %v962
    %vm969 = vmor %vm967, %vm968
    %v970 = vsel %vm969, %v962, %v966
    %v971 = vand.u32 2147483647, %v961
    %vm972 = vcmp.eq.f32.partialorder %v971, 8.507059e+37
    %v973 = vand.u32 %v961, 2147483648
    %v974 = vor.u32 1.1754944e-38, %v973
    %v975 = vsel %vm972, %v974, %v970
    %v976 = vmul.f32 1.0, %v975
    %v977 = vmul.f32 %v956, %v935
    %v978 = vadd.f32 %v263, %v977
    %v979 = vtanh.pop %v978
    %v980 = vsub.f32 1.0, %v976
    %v981 = vmul.f32 %v980, %v979
    %v983 = vmul.f32 %v976, %v858
    %v984 = vadd.f32 %v981, %v983
    %985 = vst.msk [vmem:[#allocation2 + $0x8] sm:$0x3] %vm404, %v984
    %v986 = vld [vmem:[#allocation4] sm:$0xff]
    %v987 = vld [vmem:[#allocation4 + $0x8] sm:$0xff]
    %v988 = vld [vmem:[#allocation4 + $0x10] sm:$0xff]
    %v989 = vld [vmem:[#allocation4 + $0x18] sm:$0xff]
    %v990 = vld [vmem:[%s4] sm:$0x1]
    %v992 = vperm.slane %v990, 0
    %v995 = vsel %vm273, %v984, 0
    %997 = vmatpush.msra.mxu0 0.0
    %998 = vmatpush.msra.mxu0 0.0
    %999 = vmatpush.msra.mxu0 0.0
    %1000 = vmatpush.msra.mxu0 0.0
    %1001 = vmatpush.msra.mxu0 0.0
    %1002 = vmatpush.msra.mxu0 0.0
    %1003 = vmatpush.msra.mxu0 0.0
    %1004 = vmatpush.msra.mxu0 0.0
    %1005 = vmatpush.msra.mxu0 0.0
    %1006 = vmatpush.msra.mxu0 0.0
    %1007 = vmatpush.msra.mxu0 0.0
    %1008 = vmatpush.msra.mxu0 0.0
    %1009 = vmatpush.msra.mxu0 %v989
    %1010 = vmatpush.msra.mxu0 %v988
    %1011 = vmatpush.msra.mxu0 %v987
    %1012 = vmatpush.msra.mxu0 %v986
    %1013 = vmatmul.f32.gmra.mxu0 %v995
    %v1014 = vpop.f32.mrf.mxu0
    %v1015 = vadd.f32 %v992, %v1014
    %1016 = vdwg.mxu0
    %v1017 = vld [vmem:[%s297] sm:$0xff]
    %v1018 = vld [vmem:[%s297 + $0x8] sm:$0xff]
    %v1019 = vld [vmem:[%s297 + $0x10] sm:$0xff]
    %v1020 = vld [vmem:[%s297 + $0x18] sm:$0xff]
    %v1021 = vld [vmem:[%s302] sm:$0x1]
    %v1023 = vperm.slane %v1021, 0
    %1025 = vmatpush.msra.mxu0 0.0
    %1026 = vmatpush.msra.mxu0 0.0
    %1027 = vmatpush.msra.mxu0 0.0
    %1028 = vmatpush.msra.mxu0 0.0
    %1029 = vmatpush.msra.mxu0 0.0
    %1030 = vmatpush.msra.mxu0 0.0
    %1031 = vmatpush.msra.mxu0 0.0
    %1032 = vmatpush.msra.mxu0 0.0
    %1033 = vmatpush.msra.mxu0 0.0
    %1034 = vmatpush.msra.mxu0 0.0
    %1035 = vmatpush.msra.mxu0 0.0
    %1036 = vmatpush.msra.mxu0 0.0
    %1037 = vmatpush.msra.mxu0 %v1020
    %1038 = vmatpush.msra.mxu0 %v1019
    %1039 = vmatpush.msra.mxu0 %v1018
    %1040 = vmatpush.msra.mxu0 %v1017
    %1041 = vmatmul.f32.gmra.mxu0 %v995
    %v1042 = vpop.f32.mrf.mxu0
    %v1043 = vadd.f32 %v1023, %v1042
    %1044 = vdwg.mxu0
    %v1045 = vld [vmem:[%s327] sm:$0xff]
    %v1046 = vld [vmem:[%s327 + $0x8] sm:$0xff]
    %v1047 = vld [vmem:[%s327 + $0x10] sm:$0xff]
    %v1048 = vld [vmem:[%s327 + $0x18] sm:$0xff]
    %v1049 = vld [vmem:[%s332] sm:$0x1]
    %v1051 = vperm.slane %v1049, 0
    %1053 = vmatpush.msra.mxu0 0.0
    %1054 = vmatpush.msra.mxu0 0.0
    %1055 = vmatpush.msra.mxu0 0.0
    %1056 = vmatpush.msra.mxu0 0.0
    %1057 = vmatpush.msra.mxu0 0.0
    %1058 = vmatpush.msra.mxu0 0.0
    %1059 = vmatpush.msra.mxu0 0.0
    %1060 = vmatpush.msra.mxu0 0.0
    %1061 = vmatpush.msra.mxu0 0.0
    %1062 = vmatpush.msra.mxu0 0.0
    %1063 = vmatpush.msra.mxu0 0.0
    %1064 = vmatpush.msra.mxu0 0.0
    %1065 = vmatpush.msra.mxu0 %v1048
    %1066 = vmatpush.msra.mxu0 %v1047
    %1067 = vmatpush.msra.mxu0 %v1046
    %1068 = vmatpush.msra.mxu0 %v1045
    %1069 = vmatmul.f32.gmra.mxu0 %v995
    %v1070 = vpop.f32.mrf.mxu0
    %v1071 = vadd.f32 %v1051, %v1070
    %1072 = vdwg.mxu0
    %v1074 = vrot.slane %v1015, 6
    %v1076 = vadd.f32 %v155, %v1074
    %v1077 = vxor.u32 %v1076, 2147483648
    %v1078 = vmul.f32 %v1077, 1.442695
    %v1079 = vpow.pop %v1078
    %v1080 = vadd.f32 %v1079, 1.0
    %v1081 = vrcp.pop %v1080
    %v1082 = vmul.f32 %v1080, %v1081
    %v1083 = vsub.f32 1.0, %v1082
    %v1084 = vmul.f32 %v1081, %v1083
    %v1085 = vadd.f32 %v1081, %v1084
    %vm1086 = vweird.f32 %v1080
    %vm1087 = vweird.f32 %v1081
    %vm1088 = vmor %vm1086, %vm1087
    %v1089 = vsel %vm1088, %v1081, %v1085
    %v1090 = vand.u32 2147483647, %v1080
    %vm1091 = vcmp.eq.f32.partialorder %v1090, 8.507059e+37
    %v1092 = vand.u32 %v1080, 2147483648
    %v1093 = vor.u32 1.1754944e-38, %v1092
    %v1094 = vsel %vm1091, %v1093, %v1089
    %v1095 = vmul.f32 1.0, %v1094
    %v1097 = vrot.slane %v1043, 6
    %v1099 = vadd.f32 %v209, %v1097
    %v1100 = vxor.u32 %v1099, 2147483648
    %v1101 = vmul.f32 %v1100, 1.442695
    %v1102 = vpow.pop %v1101
    %v1103 = vadd.f32 %v1102, 1.0
    %v1104 = vrcp.pop %v1103
    %v1105 = vmul.f32 %v1103, %v1104
    %v1106 = vsub.f32 1.0, %v1105
    %v1107 = vmul.f32 %v1104, %v1106
    %v1108 = vadd.f32 %v1104, %v1107
    %vm1109 = vweird.f32 %v1103
    %vm1110 = vweird.f32 %v1104
    %vm1111 = vmor %vm1109, %vm1110
    %v1112 = vsel %vm1111, %v1104, %v1108
    %v1113 = vand.u32 2147483647, %v1103
    %vm1114 = vcmp.eq.f32.partialorder %v1113, 8.507059e+37
    %v1115 = vand.u32 %v1103, 2147483648
    %v1116 = vor.u32 1.1754944e-38, %v1115
    %v1117 = vsel %vm1114, %v1116, %v1112
    %v1118 = vmul.f32 1.0, %v1117
    %v1120 = vrot.slane %v1071, 6
    %v1122 = vmul.f32 %v1095, %v1120
    %v1123 = vadd.f32 %v263, %v1122
    %v1124 = vtanh.pop %v1123
    %v1125 = vsub.f32 1.0, %v1118
    %v1126 = vmul.f32 %v1125, %v1124
    %v1127 = vrot.slane %v984, 6
    %v1129 = vmul.f32 %v1118, %v1127
    %v1130 = vadd.f32 %v1126, %v1129
    %1131 = vst.msk [vmem:[#allocation2 + $0x8] sm:$0xc] %vm551, %v1130
    %v1132 = vld [vmem:[#allocation4] sm:$0xff]
    %v1133 = vld [vmem:[#allocation4 + $0x8] sm:$0xff]
    %v1134 = vld [vmem:[#allocation4 + $0x10] sm:$0xff]
    %v1135 = vld [vmem:[#allocation4 + $0x18] sm:$0xff]
    %v1136 = vld [vmem:[%s4] sm:$0x1]
    %v1138 = vperm.slane %v1136, 0
    %v1141 = vrot.slane %v1130, 2
    %v1142 = vsel %vm273, %v1141, 0
    %1144 = vmatpush.msra.mxu0 0.0
    %1145 = vmatpush.msra.mxu0 0.0
    %1146 = vmatpush.msra.mxu0 0.0
    %1147 = vmatpush.msra.mxu0 0.0
    %1148 = vmatpush.msra.mxu0 0.0
    %1149 = vmatpush.msra.mxu0 0.0
    %1150 = vmatpush.msra.mxu0 0.0
    %1151 = vmatpush.msra.mxu0 0.0
    %1152 = vmatpush.msra.mxu0 0.0
    %1153 = vmatpush.msra.mxu0 0.0
    %1154 = vmatpush.msra.mxu0 0.0
    %1155 = vmatpush.msra.mxu0 0.0
    %1156 = vmatpush.msra.mxu0 %v1135
    %1157 = vmatpush.msra.mxu0 %v1134
    %1158 = vmatpush.msra.mxu0 %v1133
    %1159 = vmatpush.msra.mxu0 %v1132
    %1160 = vmatmul.f32.gmra.mxu0 %v1142
    %v1161 = vpop.f32.mrf.mxu0
    %v1162 = vadd.f32 %v1138, %v1161
    %1163 = vdwg.mxu0
    %v1164 = vld [vmem:[%s297] sm:$0xff]
    %v1165 = vld [vmem:[%s297 + $0x8] sm:$0xff]
    %v1166 = vld [vmem:[%s297 + $0x10] sm:$0xff]
    %v1167 = vld [vmem:[%s297 + $0x18] sm:$0xff]
    %v1168 = vld [vmem:[%s302] sm:$0x1]
    %v1170 = vperm.slane %v1168, 0
    %1172 = vmatpush.msra.mxu0 0.0
    %1173 = vmatpush.msra.mxu0 0.0
    %1174 = vmatpush.msra.mxu0 0.0
    %1175 = vmatpush.msra.mxu0 0.0
    %1176 = vmatpush.msra.mxu0 0.0
    %1177 = vmatpush.msra.mxu0 0.0
    %1178 = vmatpush.msra.mxu0 0.0
    %1179 = vmatpush.msra.mxu0 0.0
    %1180 = vmatpush.msra.mxu0 0.0
    %1181 = vmatpush.msra.mxu0 0.0
    %1182 = vmatpush.msra.mxu0 0.0
    %1183 = vmatpush.msra.mxu0 0.0
    %1184 = vmatpush.msra.mxu0 %v1167
    %1185 = vmatpush.msra.mxu0 %v1166
    %1186 = vmatpush.msra.mxu0 %v1165
    %1187 = vmatpush.msra.mxu0 %v1164
    %1188 = vmatmul.f32.gmra.mxu0 %v1142
    %v1189 = vpop.f32.mrf.mxu0
    %v1190 = vadd.f32 %v1170, %v1189
    %1191 = vdwg.mxu0
    %v1192 = vld [vmem:[%s327] sm:$0xff]
    %v1193 = vld [vmem:[%s327 + $0x8] sm:$0xff]
    %v1194 = vld [vmem:[%s327 + $0x10] sm:$0xff]
    %v1195 = vld [vmem:[%s327 + $0x18] sm:$0xff]
    %v1196 = vld [vmem:[%s332] sm:$0x1]
    %v1198 = vperm.slane %v1196, 0
    %1200 = vmatpush.msra.mxu0 0.0
    %1201 = vmatpush.msra.mxu0 0.0
    %1202 = vmatpush.msra.mxu0 0.0
    %1203 = vmatpush.msra.mxu0 0.0
    %1204 = vmatpush.msra.mxu0 0.0
    %1205 = vmatpush.msra.mxu0 0.0
    %1206 = vmatpush.msra.mxu0 0.0
    %1207 = vmatpush.msra.mxu0 0.0
    %1208 = vmatpush.msra.mxu0 0.0
    %1209 = vmatpush.msra.mxu0 0.0
    %1210 = vmatpush.msra.mxu0 0.0
    %1211 = vmatpush.msra.mxu0 0.0
    %1212 = vmatpush.msra.mxu0 %v1195
    %1213 = vmatpush.msra.mxu0 %v1194
    %1214 = vmatpush.msra.mxu0 %v1193
    %1215 = vmatpush.msra.mxu0 %v1192
    %1216 = vmatmul.f32.gmra.mxu0 %v1142
    %v1217 = vpop.f32.mrf.mxu0
    %v1218 = vadd.f32 %v1198, %v1217
    %1219 = vdwg.mxu0
    %v1221 = vrot.slane %v1162, 4
    %v1223 = vadd.f32 %v155, %v1221
    %v1224 = vxor.u32 %v1223, 2147483648
    %v1225 = vmul.f32 %v1224, 1.442695
    %v1226 = vpow.pop %v1225
    %v1227 = vadd.f32 %v1226, 1.0
    %v1228 = vrcp.pop %v1227
    %v1229 = vmul.f32 %v1227, %v1228
    %v1230 = vsub.f32 1.0, %v1229
    %v1231 = vmul.f32 %v1228, %v1230
    %v1232 = vadd.f32 %v1228, %v1231
    %vm1233 = vweird.f32 %v1227
    %vm1234 = vweird.f32 %v1228
    %vm1235 = vmor %vm1233, %vm1234
    %v1236 = vsel %vm1235, %v1228, %v1232
    %v1237 = vand.u32 2147483647, %v1227
    %vm1238 = vcmp.eq.f32.partialorder %v1237, 8.507059e+37
    %v1239 = vand.u32 %v1227, 2147483648
    %v1240 = vor.u32 1.1754944e-38, %v1239
    %v1241 = vsel %vm1238, %v1240, %v1236
    %v1242 = vmul.f32 1.0, %v1241
    %v1244 = vrot.slane %v1190, 4
    %v1246 = vadd.f32 %v209, %v1244
    %v1247 = vxor.u32 %v1246, 2147483648
    %v1248 = vmul.f32 %v1247, 1.442695
    %v1249 = vpow.pop %v1248
    %v1250 = vadd.f32 %v1249, 1.0
    %v1251 = vrcp.pop %v1250
    %v1252 = vmul.f32 %v1250, %v1251
    %v1253 = vsub.f32 1.0, %v1252
    %v1254 = vmul.f32 %v1251, %v1253
    %v1255 = vadd.f32 %v1251, %v1254
    %vm1256 = vweird.f32 %v1250
    %vm1257 = vweird.f32 %v1251
    %vm1258 = vmor %vm1256, %vm1257
    %v1259 = vsel %vm1258, %v1251, %v1255
    %v1260 = vand.u32 2147483647, %v1250
    %vm1261 = vcmp.eq.f32.partialorder %v1260, 8.507059e+37
    %v1262 = vand.u32 %v1250, 2147483648
    %v1263 = vor.u32 1.1754944e-38, %v1262
    %v1264 = vsel %vm1261, %v1263, %v1259
    %v1265 = vmul.f32 1.0, %v1264
    %v1267 = vrot.slane %v1218, 4
    %v1269 = vmul.f32 %v1242, %v1267
    %v1270 = vadd.f32 %v263, %v1269
    %v1271 = vtanh.pop %v1270
    %v1272 = vsub.f32 1.0, %v1265
    %v1273 = vmul.f32 %v1272, %v1271
    %v1274 = vrot.slane %v1130, 6
    %v1276 = vmul.f32 %v1265, %v1274
    %v1277 = vadd.f32 %v1273, %v1276
    %1278 = vst.msk [vmem:[#allocation2 + $0x8] sm:$0x30] %vm699, %v1277
    %v1279 = vld [vmem:[#allocation4] sm:$0xff]
    %v1280 = vld [vmem:[#allocation4 + $0x8] sm:$0xff]
    %v1281 = vld [vmem:[#allocation4 + $0x10] sm:$0xff]
    %v1282 = vld [vmem:[#allocation4 + $0x18] sm:$0xff]
    %v1283 = vld [vmem:[%s4] sm:$0x1]
    %v1285 = vperm.slane %v1283, 0
    %v1288 = vrot.slane %v1277, 4
    %v1289 = vsel %vm273, %v1288, 0
    %1291 = vmatpush.msra.mxu0 0.0
    %1292 = vmatpush.msra.mxu0 0.0
    %1293 = vmatpush.msra.mxu0 0.0
    %1294 = vmatpush.msra.mxu0 0.0
    %1295 = vmatpush.msra.mxu0 0.0
    %1296 = vmatpush.msra.mxu0 0.0
    %1297 = vmatpush.msra.mxu0 0.0
    %1298 = vmatpush.msra.mxu0 0.0
    %1299 = vmatpush.msra.mxu0 0.0
    %1300 = vmatpush.msra.mxu0 0.0
    %1301 = vmatpush.msra.mxu0 0.0
    %1302 = vmatpush.msra.mxu0 0.0
    %1303 = vmatpush.msra.mxu0 %v1282
    %1304 = vmatpush.msra.mxu0 %v1281
    %1305 = vmatpush.msra.mxu0 %v1280
    %1306 = vmatpush.msra.mxu0 %v1279
    %1307 = vmatmul.f32.gmra.mxu0 %v1289
    %v1308 = vpop.f32.mrf.mxu0
    %v1309 = vadd.f32 %v1285, %v1308
    %1310 = vdwg.mxu0
    %v1311 = vld [vmem:[%s297] sm:$0xff]
    %v1312 = vld [vmem:[%s297 + $0x8] sm:$0xff]
    %v1313 = vld [vmem:[%s297 + $0x10] sm:$0xff]
    %v1314 = vld [vmem:[%s297 + $0x18] sm:$0xff]
    %v1315 = vld [vmem:[%s302] sm:$0x1]
    %v1317 = vperm.slane %v1315, 0
    %1319 = vmatpush.msra.mxu0 0.0
    %1320 = vmatpush.msra.mxu0 0.0
    %1321 = vmatpush.msra.mxu0 0.0
    %1322 = vmatpush.msra.mxu0 0.0
    %1323 = vmatpush.msra.mxu0 0.0
    %1324 = vmatpush.msra.mxu0 0.0
    %1325 = vmatpush.msra.mxu0 0.0
    %1326 = vmatpush.msra.mxu0 0.0
    %1327 = vmatpush.msra.mxu0 0.0
    %1328 = vmatpush.msra.mxu0 0.0
    %1329 = vmatpush.msra.mxu0 0.0
    %1330 = vmatpush.msra.mxu0 0.0
    %1331 = vmatpush.msra.mxu0 %v1314
    %1332 = vmatpush.msra.mxu0 %v1313
    %1333 = vmatpush.msra.mxu0 %v1312
    %1334 = vmatpush.msra.mxu0 %v1311
    %1335 = vmatmul.f32.gmra.mxu0 %v1289
    %v1336 = vpop.f32.mrf.mxu0
    %v1337 = vadd.f32 %v1317, %v1336
    %1338 = vdwg.mxu0
    %v1339 = vld [vmem:[%s327] sm:$0xff]
    %v1340 = vld [vmem:[%s327 + $0x8] sm:$0xff]
    %v1341 = vld [vmem:[%s327 + $0x10] sm:$0xff]
    %v1342 = vld [vmem:[%s327 + $0x18] sm:$0xff]
    %v1343 = vld [vmem:[%s332] sm:$0x1]
    %v1345 = vperm.slane %v1343, 0
    %1347 = vmatpush.msra.mxu0 0.0
    %1348 = vmatpush.msra.mxu0 0.0
    %1349 = vmatpush.msra.mxu0 0.0
    %1350 = vmatpush.msra.mxu0 0.0
    %1351 = vmatpush.msra.mxu0 0.0
    %1352 = vmatpush.msra.mxu0 0.0
    %1353 = vmatpush.msra.mxu0 0.0
    %1354 = vmatpush.msra.mxu0 0.0
    %1355 = vmatpush.msra.mxu0 0.0
    %1356 = vmatpush.msra.mxu0 0.0
    %1357 = vmatpush.msra.mxu0 0.0
    %1358 = vmatpush.msra.mxu0 0.0
    %1359 = vmatpush.msra.mxu0 %v1342
    %1360 = vmatpush.msra.mxu0 %v1341
    %1361 = vmatpush.msra.mxu0 %v1340
    %1362 = vmatpush.msra.mxu0 %v1339
    %1363 = vmatmul.f32.gmra.mxu0 %v1289
    %v1364 = vpop.f32.mrf.mxu0
    %v1365 = vadd.f32 %v1345, %v1364
    %1366 = vdwg.mxu0
    %v1368 = vrot.slane %v1309, 2
    %v1370 = vadd.f32 %v155, %v1368
    %v1371 = vxor.u32 %v1370, 2147483648
    %v1372 = vmul.f32 %v1371, 1.442695
    %v1373 = vpow.pop %v1372
    %v1374 = vadd.f32 %v1373, 1.0
    %v1375 = vrcp.pop %v1374
    %v1376 = vmul.f32 %v1374, %v1375
    %v1377 = vsub.f32 1.0, %v1376
    %v1378 = vmul.f32 %v1375, %v1377
    %v1379 = vadd.f32 %v1375, %v1378
    %vm1380 = vweird.f32 %v1374
    %vm1381 = vweird.f32 %v1375
    %vm1382 = vmor %vm1380, %vm1381
    %v1383 = vsel %vm1382, %v1375, %v1379
    %v1384 = vand.u32 2147483647, %v1374
    %vm1385 = vcmp.eq.f32.partialorder %v1384, 8.507059e+37
    %v1386 = vand.u32 %v1374, 2147483648
    %v1387 = vor.u32 1.1754944e-38, %v1386
    %v1388 = vsel %vm1385, %v1387, %v1383
    %v1389 = vmul.f32 1.0, %v1388
    %v1391 = vrot.slane %v1337, 2
    %v1393 = vadd.f32 %v209, %v1391
    %v1394 = vxor.u32 %v1393, 2147483648
    %v1395 = vmul.f32 %v1394, 1.442695
    %v1396 = vpow.pop %v1395
    %v1397 = vadd.f32 %v1396, 1.0
    %v1398 = vrcp.pop %v1397
    %v1399 = vmul.f32 %v1397, %v1398
    %v1400 = vsub.f32 1.0, %v1399
    %v1401 = vmul.f32 %v1398, %v1400
    %v1402 = vadd.f32 %v1398, %v1401
    %vm1403 = vweird.f32 %v1397
    %vm1404 = vweird.f32 %v1398
    %vm1405 = vmor %vm1403, %vm1404
    %v1406 = vsel %vm1405, %v1398, %v1402
    %v1407 = vand.u32 2147483647, %v1397
    %vm1408 = vcmp.eq.f32.partialorder %v1407, 8.507059e+37
    %v1409 = vand.u32 %v1397, 2147483648
    %v1410 = vor.u32 1.1754944e-38, %v1409
    %v1411 = vsel %vm1408, %v1410, %v1406
    %v1412 = vmul.f32 1.0, %v1411
    %v1414 = vrot.slane %v1365, 2
    %v1416 = vmul.f32 %v1389, %v1414
    %v1417 = vadd.f32 %v263, %v1416
    %v1418 = vtanh.pop %v1417
    %v1419 = vsub.f32 1.0, %v1412
    %v1420 = vmul.f32 %v1419, %v1418
    %v1421 = vrot.slane %v1277, 6
    %v1423 = vmul.f32 %v1412, %v1421
    %v1424 = vadd.f32 %v1420, %v1423
    %1425 = vst.msk [vmem:[#allocation2 + $0x8] sm:$0xc0] %vm847, %v1424
    %v1426 = vld [vmem:[#allocation2] sm:$0xff]
    %v1427 = vld [vmem:[#allocation2 + $0x8] sm:$0xff]
    %v1428 = vld [vmem:[#allocation6] sm:$0xff]
    %v1429 = vld [vmem:[#allocation6 + $0x8] sm:$0xff]
    %v1430 = vld [vmem:[#allocation6 + $0x10] sm:$0xff]
    %v1431 = vld [vmem:[#allocation6 + $0x18] sm:$0xff]
    %v1432 = vld [vmem:[%s7] sm:$0x1]
    %v1434 = vperm.slane %v1432, 0
    %v1437 = vsel %vm273, %v1426, 0
    %v1440 = vsel %vm273, %v1427, 0
    %1442 = vmatpush.msra.mxu0 0.0
    %1443 = vmatpush.msra.mxu0 0.0
    %1444 = vmatpush.msra.mxu0 0.0
    %1445 = vmatpush.msra.mxu0 0.0
    %1446 = vmatpush.msra.mxu0 0.0
    %1447 = vmatpush.msra.mxu0 0.0
    %1448 = vmatpush.msra.mxu0 0.0
    %1449 = vmatpush.msra.mxu0 0.0
    %1450 = vmatpush.msra.mxu0 0.0
    %1451 = vmatpush.msra.mxu0 0.0
    %1452 = vmatpush.msra.mxu0 0.0
    %1453 = vmatpush.msra.mxu0 0.0
    %1454 = vmatpush.msra.mxu0 %v1431
    %1455 = vmatpush.msra.mxu0 %v1430
    %1456 = vmatpush.msra.mxu0 %v1429
    %1457 = vmatpush.msra.mxu0 %v1428
    %1458 = vmatmul.f32.gmra.mxu0 %v1437
    %v1459 = vpop.f32.mrf.mxu0
    %v1460 = vadd.f32 %v1434, %v1459
    %1461 = vmatmul.f32.gmra.mxu0 %v1440
    %v1462 = vpop.f32.mrf.mxu0
    %v1463 = vadd.f32 %v1434, %v1462
    %1464 = vdwg.mxu0
    %s1465 = scalar_lea.vmem [#allocation6], 32
    %v1466 = vld [vmem:[%s1465] sm:$0xff]
    %v1467 = vld [vmem:[%s1465 + $0x8] sm:$0xff]
    %v1468 = vld [vmem:[%s1465 + $0x10] sm:$0xff]
    %v1469 = vld [vmem:[%s1465 + $0x18] sm:$0xff]
    %s1470 = scalar_lea.vmem %s7, 1
    %v1471 = vld [vmem:[%s1470] sm:$0x1]
    %v1473 = vperm.slane %v1471, 0
    %1475 = vmatpush.msra.mxu0 0.0
    %1476 = vmatpush.msra.mxu0 0.0
    %1477 = vmatpush.msra.mxu0 0.0
    %1478 = vmatpush.msra.mxu0 0.0
    %1479 = vmatpush.msra.mxu0 0.0
    %1480 = vmatpush.msra.mxu0 0.0
    %1481 = vmatpush.msra.mxu0 0.0
    %1482 = vmatpush.msra.mxu0 0.0
    %1483 = vmatpush.msra.mxu0 0.0
    %1484 = vmatpush.msra.mxu0 0.0
    %1485 = vmatpush.msra.mxu0 0.0
    %1486 = vmatpush.msra.mxu0 0.0
    %1487 = vmatpush.msra.mxu0 %v1469
    %1488 = vmatpush.msra.mxu0 %v1468
    %1489 = vmatpush.msra.mxu0 %v1467
    %1490 = vmatpush.msra.mxu0 %v1466
    %1491 = vmatmul.f32.gmra.mxu0 %v1437
    %v1492 = vpop.f32.mrf.mxu0
    %v1493 = vadd.f32 %v1473, %v1492
    %1494 = vmatmul.f32.gmra.mxu0 %v1440
    %v1495 = vpop.f32.mrf.mxu0
    %v1496 = vadd.f32 %v1473, %v1495
    %1497 = vdwg.mxu0
    %s1498 = scalar_lea.vmem [#allocation6], 64
    %v1499 = vld [vmem:[%s1498] sm:$0xff]
    %v1500 = vld [vmem:[%s1498 + $0x8] sm:$0xff]
    %v1501 = vld [vmem:[%s1498 + $0x10] sm:$0xff]
    %v1502 = vld [vmem:[%s1498 + $0x18] sm:$0xff]
    %s1503 = scalar_lea.vmem %s7, 2
    %v1504 = vld [vmem:[%s1503] sm:$0x1]
    %v1506 = vperm.slane %v1504, 0
    %1508 = vmatpush.msra.mxu0 0.0
    %1509 = vmatpush.msra.mxu0 0.0
    %1510 = vmatpush.msra.mxu0 0.0
    %1511 = vmatpush.msra.mxu0 0.0
    %1512 = vmatpush.msra.mxu0 0.0
    %1513 = vmatpush.msra.mxu0 0.0
    %1514 = vmatpush.msra.mxu0 0.0
    %1515 = vmatpush.msra.mxu0 0.0
    %1516 = vmatpush.msra.mxu0 0.0
    %1517 = vmatpush.msra.mxu0 0.0
    %1518 = vmatpush.msra.mxu0 0.0
    %1519 = vmatpush.msra.mxu0 0.0
    %1520 = vmatpush.msra.mxu0 %v1502
    %1521 = vmatpush.msra.mxu0 %v1501
    %1522 = vmatpush.msra.mxu0 %v1500
    %1523 = vmatpush.msra.mxu0 %v1499
    %1524 = vmatmul.f32.gmra.mxu0 %v1437
    %v1525 = vpop.f32.mrf.mxu0
    %v1526 = vadd.f32 %v1506, %v1525
    %1527 = vmatmul.f32.gmra.mxu0 %v1440
    %v1528 = vpop.f32.mrf.mxu0
    %v1529 = vadd.f32 %v1506, %v1528
    %1530 = vdwg.mxu0
    %v1531 = vld [vmem:[#allocation8] sm:$0xff]
    %v1532 = vld [vmem:[#allocation8 + $0x8] sm:$0xff]
    %v1533 = vld [vmem:[#allocation8 + $0x10] sm:$0xff]
    %v1534 = vld [vmem:[#allocation8 + $0x18] sm:$0xff]
    %v1535 = vld [vmem:[%s8] sm:$0x1]
    %v1537 = vperm.slane %v1535, 0
    %1539 = vmatpush.msra.mxu0 0.0
    %1540 = vmatpush.msra.mxu0 0.0
    %1541 = vmatpush.msra.mxu0 0.0
    %1542 = vmatpush.msra.mxu0 0.0
    %1543 = vmatpush.msra.mxu0 0.0
    %1544 = vmatpush.msra.mxu0 0.0
    %1545 = vmatpush.msra.mxu0 0.0
    %1546 = vmatpush.msra.mxu0 0.0
    %1547 = vmatpush.msra.mxu0 0.0
    %1548 = vmatpush.msra.mxu0 0.0
    %1549 = vmatpush.msra.mxu0 0.0
    %1550 = vmatpush.msra.mxu0 0.0
    %1551 = vmatpush.msra.mxu0 %v1534
    %1552 = vmatpush.msra.mxu0 %v1533
    %1553 = vmatpush.msra.mxu0 %v1532
    %1554 = vmatpush.msra.mxu0 %v1531
    %1555 = vmatmul.f32.gmra.mxu0 %v275
    %v1556 = vpop.f32.mrf.mxu0
    %v1557 = vadd.f32 %v1537, %v1556
    %1558 = vdwg.mxu0
    %s1559 = scalar_lea.vmem [#allocation8], 32
    %v1560 = vld [vmem:[%s1559] sm:$0xff]
    %v1561 = vld [vmem:[%s1559 + $0x8] sm:$0xff]
    %v1562 = vld [vmem:[%s1559 + $0x10] sm:$0xff]
    %v1563 = vld [vmem:[%s1559 + $0x18] sm:$0xff]
    %s1564 = scalar_lea.vmem %s8, 1
    %v1565 = vld [vmem:[%s1564] sm:$0x1]
    %v1567 = vperm.slane %v1565, 0
    %1569 = vmatpush.msra.mxu0 0.0
    %1570 = vmatpush.msra.mxu0 0.0
    %1571 = vmatpush.msra.mxu0 0.0
    %1572 = vmatpush.msra.mxu0 0.0
    %1573 = vmatpush.msra.mxu0 0.0
    %1574 = vmatpush.msra.mxu0 0.0
    %1575 = vmatpush.msra.mxu0 0.0
    %1576 = vmatpush.msra.mxu0 0.0
    %1577 = vmatpush.msra.mxu0 0.0
    %1578 = vmatpush.msra.mxu0 0.0
    %1579 = vmatpush.msra.mxu0 0.0
    %1580 = vmatpush.msra.mxu0 0.0
    %1581 = vmatpush.msra.mxu0 %v1563
    %1582 = vmatpush.msra.mxu0 %v1562
    %1583 = vmatpush.msra.mxu0 %v1561
    %1584 = vmatpush.msra.mxu0 %v1560
    %1585 = vmatmul.f32.gmra.mxu0 %v275
    %v1586 = vpop.f32.mrf.mxu0
    %v1587 = vadd.f32 %v1567, %v1586
    %1588 = vdwg.mxu0
    %s1589 = scalar_lea.vmem [#allocation8], 64
    %v1590 = vld [vmem:[%s1589] sm:$0xff]
    %v1591 = vld [vmem:[%s1589 + $0x8] sm:$0xff]
    %v1592 = vld [vmem:[%s1589 + $0x10] sm:$0xff]
    %v1593 = vld [vmem:[%s1589 + $0x18] sm:$0xff]
    %s1594 = scalar_lea.vmem %s8, 2
    %v1595 = vld [vmem:[%s1594] sm:$0x1]
    %v1597 = vperm.slane %v1595, 0
    %1599 = vmatpush.msra.mxu0 0.0
    %1600 = vmatpush.msra.mxu0 0.0
    %1601 = vmatpush.msra.mxu0 0.0
    %1602 = vmatpush.msra.mxu0 0.0
    %1603 = vmatpush.msra.mxu0 0.0
    %1604 = vmatpush.msra.mxu0 0.0
    %1605 = vmatpush.msra.mxu0 0.0
    %1606 = vmatpush.msra.mxu0 0.0
    %1607 = vmatpush.msra.mxu0 0.0
    %1608 = vmatpush.msra.mxu0 0.0
    %1609 = vmatpush.msra.mxu0 0.0
    %1610 = vmatpush.msra.mxu0 0.0
    %1611 = vmatpush.msra.mxu0 %v1593
    %1612 = vmatpush.msra.mxu0 %v1592
    %1613 = vmatpush.msra.mxu0 %v1591
    %1614 = vmatpush.msra.mxu0 %v1590
    %1615 = vmatmul.f32.gmra.mxu0 %v275
    %v1616 = vpop.f32.mrf.mxu0
    %v1617 = vadd.f32 %v1597, %v1616
    %1618 = vdwg.mxu0
    %v1619 = vadd.f32 %v1460, %v1557
    %v1620 = vxor.u32 %v1619, 2147483648
    %v1621 = vmul.f32 %v1620, 1.442695
    %v1622 = vpow.pop %v1621
    %v1623 = vadd.f32 %v1622, 1.0
    %v1624 = vrcp.pop %v1623
    %v1625 = vmul.f32 %v1623, %v1624
    %v1626 = vsub.f32 1.0, %v1625
    %v1627 = vmul.f32 %v1624, %v1626
    %v1628 = vadd.f32 %v1624, %v1627
    %vm1629 = vweird.f32 %v1623
    %vm1630 = vweird.f32 %v1624
    %vm1631 = vmor %vm1629, %vm1630
    %v1632 = vsel %vm1631, %v1624, %v1628
    %v1633 = vand.u32 2147483647, %v1623
    %vm1634 = vcmp.eq.f32.partialorder %v1633, 8.507059e+37
    %v1635 = vand.u32 %v1623, 2147483648
    %v1636 = vor.u32 1.1754944e-38, %v1635
    %v1637 = vsel %vm1634, %v1636, %v1632
    %v1638 = vmul.f32 1.0, %v1637
    %v1639 = vadd.f32 %v1493, %v1587
    %v1640 = vxor.u32 %v1639, 2147483648
    %v1641 = vmul.f32 %v1640, 1.442695
    %v1642 = vpow.pop %v1641
    %v1643 = vadd.f32 %v1642, 1.0
    %v1644 = vrcp.pop %v1643
    %v1645 = vmul.f32 %v1643, %v1644
    %v1646 = vsub.f32 1.0, %v1645
    %v1647 = vmul.f32 %v1644, %v1646
    %v1648 = vadd.f32 %v1644, %v1647
    %vm1649 = vweird.f32 %v1643
    %vm1650 = vweird.f32 %v1644
    %vm1651 = vmor %vm1649, %vm1650
    %v1652 = vsel %vm1651, %v1644, %v1648
    %v1653 = vand.u32 2147483647, %v1643
    %vm1654 = vcmp.eq.f32.partialorder %v1653, 8.507059e+37
    %v1655 = vand.u32 %v1643, 2147483648
    %v1656 = vor.u32 1.1754944e-38, %v1655
    %v1657 = vsel %vm1654, %v1656, %v1652
    %v1658 = vmul.f32 1.0, %v1657
    %v1659 = vmul.f32 %v1638, %v1617
    %v1660 = vadd.f32 %v1526, %v1659
    %v1661 = vtanh.pop %v1660
    %v1662 = vsub.f32 1.0, %v1658
    %v1663 = vmul.f32 %v1662, %v1661
    %v1664 = vmul.f32 %v1658, 0.0
    %v1665 = vadd.f32 %v1663, %v1664
    %v1667 = vsel %vm273, %v1665, 0
    %1669 = vmatpush.msra.mxu0 0.0
    %1670 = vmatpush.msra.mxu0 0.0
    %1671 = vmatpush.msra.mxu0 0.0
    %1672 = vmatpush.msra.mxu0 0.0
    %1673 = vmatpush.msra.mxu0 0.0
    %1674 = vmatpush.msra.mxu0 0.0
    %1675 = vmatpush.msra.mxu0 0.0
    %1676 = vmatpush.msra.mxu0 0.0
    %1677 = vmatpush.msra.mxu0 0.0
    %1678 = vmatpush.msra.mxu0 0.0
    %1679 = vmatpush.msra.mxu0 0.0
    %1680 = vmatpush.msra.mxu0 0.0
    %1681 = vmatpush.msra.mxu0 %v1534
    %1682 = vmatpush.msra.mxu0 %v1533
    %1683 = vmatpush.msra.mxu0 %v1532
    %1684 = vmatpush.msra.mxu0 %v1531
    %1685 = vmatmul.f32.gmra.mxu0 %v1667
    %v1686 = vpop.f32.mrf.mxu0
    %v1687 = vadd.f32 %v1537, %v1686
    %1688 = vdwg.mxu0
    %1689 = vmatpush.msra.mxu0 0.0
    %1690 = vmatpush.msra.mxu0 0.0
    %1691 = vmatpush.msra.mxu0 0.0
    %1692 = vmatpush.msra.mxu0 0.0
    %1693 = vmatpush.msra.mxu0 0.0
    %1694 = vmatpush.msra.mxu0 0.0
    %1695 = vmatpush.msra.mxu0 0.0
    %1696 = vmatpush.msra.mxu0 0.0
    %1697 = vmatpush.msra.mxu0 0.0
    %1698 = vmatpush.msra.mxu0 0.0
    %1699 = vmatpush.msra.mxu0 0.0
    %1700 = vmatpush.msra.mxu0 0.0
    %1701 = vmatpush.msra.mxu0 %v1563
    %1702 = vmatpush.msra.mxu0 %v1562
    %1703 = vmatpush.msra.mxu0 %v1561
    %1704 = vmatpush.msra.mxu0 %v1560
    %1705 = vmatmul.f32.gmra.mxu0 %v1667
    %v1706 = vpop.f32.mrf.mxu0
    %v1707 = vadd.f32 %v1567, %v1706
    %1708 = vdwg.mxu0
    %1709 = vmatpush.msra.mxu0 0.0
    %1710 = vmatpush.msra.mxu0 0.0
    %1711 = vmatpush.msra.mxu0 0.0
    %1712 = vmatpush.msra.mxu0 0.0
    %1713 = vmatpush.msra.mxu0 0.0
    %1714 = vmatpush.msra.mxu0 0.0
    %1715 = vmatpush.msra.mxu0 0.0
    %1716 = vmatpush.msra.mxu0 0.0
    %1717 = vmatpush.msra.mxu0 0.0
    %1718 = vmatpush.msra.mxu0 0.0
    %1719 = vmatpush.msra.mxu0 0.0
    %1720 = vmatpush.msra.mxu0 0.0
    %1721 = vmatpush.msra.mxu0 %v1593
    %1722 = vmatpush.msra.mxu0 %v1592
    %1723 = vmatpush.msra.mxu0 %v1591
    %1724 = vmatpush.msra.mxu0 %v1590
    %1725 = vmatmul.f32.gmra.mxu0 %v1667
    %v1726 = vpop.f32.mrf.mxu0
    %v1727 = vadd.f32 %v1597, %v1726
    %1728 = vdwg.mxu0
    %v1730 = vrot.slane %v1687, 6
    %v1732 = vadd.f32 %v1460, %v1730
    %v1733 = vxor.u32 %v1732, 2147483648
    %v1734 = vmul.f32 %v1733, 1.442695
    %v1735 = vpow.pop %v1734
    %v1736 = vadd.f32 %v1735, 1.0
    %v1737 = vrcp.pop %v1736
    %v1738 = vmul.f32 %v1736, %v1737
    %v1739 = vsub.f32 1.0, %v1738
    %v1740 = vmul.f32 %v1737, %v1739
    %v1741 = vadd.f32 %v1737, %v1740
    %vm1742 = vweird.f32 %v1736
    %vm1743 = vweird.f32 %v1737
    %vm1744 = vmor %vm1742, %vm1743
    %v1745 = vsel %vm1744, %v1737, %v1741
    %v1746 = vand.u32 2147483647, %v1736
    %vm1747 = vcmp.eq.f32.partialorder %v1746, 8.507059e+37
    %v1748 = vand.u32 %v1736, 2147483648
    %v1749 = vor.u32 1.1754944e-38, %v1748
    %v1750 = vsel %vm1747, %v1749, %v1745
    %v1751 = vmul.f32 1.0, %v1750
    %v1753 = vrot.slane %v1707, 6
    %v1755 = vadd.f32 %v1493, %v1753
    %v1756 = vxor.u32 %v1755, 2147483648
    %v1757 = vmul.f32 %v1756, 1.442695
    %v1758 = vpow.pop %v1757
    %v1759 = vadd.f32 %v1758, 1.0
    %v1760 = vrcp.pop %v1759
    %v1761 = vmul.f32 %v1759, %v1760
    %v1762 = vsub.f32 1.0, %v1761
    %v1763 = vmul.f32 %v1760, %v1762
    %v1764 = vadd.f32 %v1760, %v1763
    %vm1765 = vweird.f32 %v1759
    %vm1766 = vweird.f32 %v1760
    %vm1767 = vmor %vm1765, %vm1766
    %v1768 = vsel %vm1767, %v1760, %v1764
    %v1769 = vand.u32 2147483647, %v1759
    %vm1770 = vcmp.eq.f32.partialorder %v1769, 8.507059e+37
    %v1771 = vand.u32 %v1759, 2147483648
    %v1772 = vor.u32 1.1754944e-38, %v1771
    %v1773 = vsel %vm1770, %v1772, %v1768
    %v1774 = vmul.f32 1.0, %v1773
    %v1776 = vrot.slane %v1727, 6
    %v1778 = vmul.f32 %v1751, %v1776
    %v1779 = vadd.f32 %v1526, %v1778
    %v1780 = vtanh.pop %v1779
    %v1781 = vsub.f32 1.0, %v1774
    %v1782 = vmul.f32 %v1781, %v1780
    %v1783 = vrot.slane %v1665, 6
    %v1785 = vmul.f32 %v1774, %v1783
    %v1786 = vadd.f32 %v1782, %v1785
    %v1788 = vrot.slane %v1786, 2
    %v1789 = vsel %vm273, %v1788, 0
    %1791 = vmatpush.msra.mxu0 0.0
    %1792 = vmatpush.msra.mxu0 0.0
    %1793 = vmatpush.msra.mxu0 0.0
    %1794 = vmatpush.msra.mxu0 0.0
    %1795 = vmatpush.msra.mxu0 0.0
    %1796 = vmatpush.msra.mxu0 0.0
    %1797 = vmatpush.msra.mxu0 0.0
    %1798 = vmatpush.msra.mxu0 0.0
    %1799 = vmatpush.msra.mxu0 0.0
    %1800 = vmatpush.msra.mxu0 0.0
    %1801 = vmatpush.msra.mxu0 0.0
    %1802 = vmatpush.msra.mxu0 0.0
    %1803 = vmatpush.msra.mxu0 %v1534
    %1804 = vmatpush.msra.mxu0 %v1533
    %1805 = vmatpush.msra.mxu0 %v1532
    %1806 = vmatpush.msra.mxu0 %v1531
    %1807 = vmatmul.f32.gmra.mxu0 %v1789
    %v1808 = vpop.f32.mrf.mxu0
    %v1809 = vadd.f32 %v1537, %v1808
    %1810 = vdwg.mxu0
    %1811 = vmatpush.msra.mxu0 0.0
    %1812 = vmatpush.msra.mxu0 0.0
    %1813 = vmatpush.msra.mxu0 0.0
    %1814 = vmatpush.msra.mxu0 0.0
    %1815 = vmatpush.msra.mxu0 0.0
    %1816 = vmatpush.msra.mxu0 0.0
    %1817 = vmatpush.msra.mxu0 0.0
    %1818 = vmatpush.msra.mxu0 0.0
    %1819 = vmatpush.msra.mxu0 0.0
    %1820 = vmatpush.msra.mxu0 0.0
    %1821 = vmatpush.msra.mxu0 0.0
    %1822 = vmatpush.msra.mxu0 0.0
    %1823 = vmatpush.msra.mxu0 %v1563
    %1824 = vmatpush.msra.mxu0 %v1562
    %1825 = vmatpush.msra.mxu0 %v1561
    %1826 = vmatpush.msra.mxu0 %v1560
    %1827 = vmatmul.f32.gmra.mxu0 %v1789
    %v1828 = vpop.f32.mrf.mxu0
    %v1829 = vadd.f32 %v1567, %v1828
    %1830 = vdwg.mxu0
    %1831 = vmatpush.msra.mxu0 0.0
    %1832 = vmatpush.msra.mxu0 0.0
    %1833 = vmatpush.msra.mxu0 0.0
    %1834 = vmatpush.msra.mxu0 0.0
    %1835 = vmatpush.msra.mxu0 0.0
    %1836 = vmatpush.msra.mxu0 0.0
    %1837 = vmatpush.msra.mxu0 0.0
    %1838 = vmatpush.msra.mxu0 0.0
    %1839 = vmatpush.msra.mxu0 0.0
    %1840 = vmatpush.msra.mxu0 0.0
    %1841 = vmatpush.msra.mxu0 0.0
    %1842 = vmatpush.msra.mxu0 0.0
    %1843 = vmatpush.msra.mxu0 %v1593
    %1844 = vmatpush.msra.mxu0 %v1592
    %1845 = vmatpush.msra.mxu0 %v1591
    %1846 = vmatpush.msra.mxu0 %v1590
    %1847 = vmatmul.f32.gmra.mxu0 %v1789
    %v1848 = vpop.f32.mrf.mxu0
    %v1849 = vadd.f32 %v1597, %v1848
    %1850 = vdwg.mxu0
    %v1852 = vrot.slane %v1809, 4
    %v1854 = vadd.f32 %v1460, %v1852
    %v1855 = vxor.u32 %v1854, 2147483648
    %v1856 = vmul.f32 %v1855, 1.442695
    %v1857 = vpow.pop %v1856
    %v1858 = vadd.f32 %v1857, 1.0
    %v1859 = vrcp.pop %v1858
    %v1860 = vmul.f32 %v1858, %v1859
    %v1861 = vsub.f32 1.0, %v1860
    %v1862 = vmul.f32 %v1859, %v1861
    %v1863 = vadd.f32 %v1859, %v1862
    %vm1864 = vweird.f32 %v1858
    %vm1865 = vweird.f32 %v1859
    %vm1866 = vmor %vm1864, %vm1865
    %v1867 = vsel %vm1866, %v1859, %v1863
    %v1868 = vand.u32 2147483647, %v1858
    %vm1869 = vcmp.eq.f32.partialorder %v1868, 8.507059e+37
    %v1870 = vand.u32 %v1858, 2147483648
    %v1871 = vor.u32 1.1754944e-38, %v1870
    %v1872 = vsel %vm1869, %v1871, %v1867
    %v1873 = vmul.f32 1.0, %v1872
    %v1875 = vrot.slane %v1829, 4
    %v1877 = vadd.f32 %v1493, %v1875
    %v1878 = vxor.u32 %v1877, 2147483648
    %v1879 = vmul.f32 %v1878, 1.442695
    %v1880 = vpow.pop %v1879
    %v1881 = vadd.f32 %v1880, 1.0
    %v1882 = vrcp.pop %v1881
    %v1883 = vmul.f32 %v1881, %v1882
    %v1884 = vsub.f32 1.0, %v1883
    %v1885 = vmul.f32 %v1882, %v1884
    %v1886 = vadd.f32 %v1882, %v1885
    %vm1887 = vweird.f32 %v1881
    %vm1888 = vweird.f32 %v1882
    %vm1889 = vmor %vm1887, %vm1888
    %v1890 = vsel %vm1889, %v1882, %v1886
    %v1891 = vand.u32 2147483647, %v1881
    %vm1892 = vcmp.eq.f32.partialorder %v1891, 8.507059e+37
    %v1893 = vand.u32 %v1881, 2147483648
    %v1894 = vor.u32 1.1754944e-38, %v1893
    %v1895 = vsel %vm1892, %v1894, %v1890
    %v1896 = vmul.f32 1.0, %v1895
    %v1898 = vrot.slane %v1849, 4
    %v1900 = vmul.f32 %v1873, %v1898
    %v1901 = vadd.f32 %v1526, %v1900
    %v1902 = vtanh.pop %v1901
    %v1903 = vsub.f32 1.0, %v1896
    %v1904 = vmul.f32 %v1903, %v1902
    %v1905 = vrot.slane %v1786, 6
    %v1907 = vmul.f32 %v1896, %v1905
    %v1908 = vadd.f32 %v1904, %v1907
    %v1910 = vrot.slane %v1908, 4
    %v1911 = vsel %vm273, %v1910, 0
    %1913 = vmatpush.msra.mxu0 0.0
    %1914 = vmatpush.msra.mxu0 0.0
    %1915 = vmatpush.msra.mxu0 0.0
    %1916 = vmatpush.msra.mxu0 0.0
    %1917 = vmatpush.msra.mxu0 0.0
    %1918 = vmatpush.msra.mxu0 0.0
    %1919 = vmatpush.msra.mxu0 0.0
    %1920 = vmatpush.msra.mxu0 0.0
    %1921 = vmatpush.msra.mxu0 0.0
    %1922 = vmatpush.msra.mxu0 0.0
    %1923 = vmatpush.msra.mxu0 0.0
    %1924 = vmatpush.msra.mxu0 0.0
    %1925 = vmatpush.msra.mxu0 %v1534
    %1926 = vmatpush.msra.mxu0 %v1533
    %1927 = vmatpush.msra.mxu0 %v1532
    %1928 = vmatpush.msra.mxu0 %v1531
    %1929 = vmatmul.f32.gmra.mxu0 %v1911
    %v1930 = vpop.f32.mrf.mxu0
    %v1931 = vadd.f32 %v1537, %v1930
    %1932 = vdwg.mxu0
    %1933 = vmatpush.msra.mxu0 0.0
    %1934 = vmatpush.msra.mxu0 0.0
    %1935 = vmatpush.msra.mxu0 0.0
    %1936 = vmatpush.msra.mxu0 0.0
    %1937 = vmatpush.msra.mxu0 0.0
    %1938 = vmatpush.msra.mxu0 0.0
    %1939 = vmatpush.msra.mxu0 0.0
    %1940 = vmatpush.msra.mxu0 0.0
    %1941 = vmatpush.msra.mxu0 0.0
    %1942 = vmatpush.msra.mxu0 0.0
    %1943 = vmatpush.msra.mxu0 0.0
    %1944 = vmatpush.msra.mxu0 0.0
    %1945 = vmatpush.msra.mxu0 %v1563
    %1946 = vmatpush.msra.mxu0 %v1562
    %1947 = vmatpush.msra.mxu0 %v1561
    %1948 = vmatpush.msra.mxu0 %v1560
    %1949 = vmatmul.f32.gmra.mxu0 %v1911
    %v1950 = vpop.f32.mrf.mxu0
    %v1951 = vadd.f32 %v1567, %v1950
    %1952 = vdwg.mxu0
    %1953 = vmatpush.msra.mxu0 0.0
    %1954 = vmatpush.msra.mxu0 0.0
    %1955 = vmatpush.msra.mxu0 0.0
    %1956 = vmatpush.msra.mxu0 0.0
    %1957 = vmatpush.msra.mxu0 0.0
    %1958 = vmatpush.msra.mxu0 0.0
    %1959 = vmatpush.msra.mxu0 0.0
    %1960 = vmatpush.msra.mxu0 0.0
    %1961 = vmatpush.msra.mxu0 0.0
    %1962 = vmatpush.msra.mxu0 0.0
    %1963 = vmatpush.msra.mxu0 0.0
    %1964 = vmatpush.msra.mxu0 0.0
    %1965 = vmatpush.msra.mxu0 %v1593
    %1966 = vmatpush.msra.mxu0 %v1592
    %1967 = vmatpush.msra.mxu0 %v1591
    %1968 = vmatpush.msra.mxu0 %v1590
    %1969 = vmatmul.f32.gmra.mxu0 %v1911
    %v1970 = vpop.f32.mrf.mxu0
    %v1971 = vadd.f32 %v1597, %v1970
    %1972 = vdwg.mxu0
    %v1974 = vrot.slane %v1931, 2
    %v1976 = vadd.f32 %v1460, %v1974
    %v1977 = vxor.u32 %v1976, 2147483648
    %v1978 = vmul.f32 %v1977, 1.442695
    %v1979 = vpow.pop %v1978
    %v1980 = vadd.f32 %v1979, 1.0
    %v1981 = vrcp.pop %v1980
    %v1982 = vmul.f32 %v1980, %v1981
    %v1983 = vsub.f32 1.0, %v1982
    %v1984 = vmul.f32 %v1981, %v1983
    %v1985 = vadd.f32 %v1981, %v1984
    %vm1986 = vweird.f32 %v1980
    %vm1987 = vweird.f32 %v1981
    %vm1988 = vmor %vm1986, %vm1987
    %v1989 = vsel %vm1988, %v1981, %v1985
    %v1990 = vand.u32 2147483647, %v1980
    %vm1991 = vcmp.eq.f32.partialorder %v1990, 8.507059e+37
    %v1992 = vand.u32 %v1980, 2147483648
    %v1993 = vor.u32 1.1754944e-38, %v1992
    %v1994 = vsel %vm1991, %v1993, %v1989
    %v1995 = vmul.f32 1.0, %v1994
    %v1997 = vrot.slane %v1951, 2
    %v1999 = vadd.f32 %v1493, %v1997
    %v2000 = vxor.u32 %v1999, 2147483648
    %v2001 = vmul.f32 %v2000, 1.442695
    %v2002 = vpow.pop %v2001
    %v2003 = vadd.f32 %v2002, 1.0
    %v2004 = vrcp.pop %v2003
    %v2005 = vmul.f32 %v2003, %v2004
    %v2006 = vsub.f32 1.0, %v2005
    %v2007 = vmul.f32 %v2004, %v2006
    %v2008 = vadd.f32 %v2004, %v2007
    %vm2009 = vweird.f32 %v2003
    %vm2010 = vweird.f32 %v2004
    %vm2011 = vmor %vm2009, %vm2010
    %v2012 = vsel %vm2011, %v2004, %v2008
    %v2013 = vand.u32 2147483647, %v2003
    %vm2014 = vcmp.eq.f32.partialorder %v2013, 8.507059e+37
    %v2015 = vand.u32 %v2003, 2147483648
    %v2016 = vor.u32 1.1754944e-38, %v2015
    %v2017 = vsel %vm2014, %v2016, %v2012
    %v2018 = vmul.f32 1.0, %v2017
    %v2020 = vrot.slane %v1971, 2
    %v2022 = vmul.f32 %v1995, %v2020
    %v2023 = vadd.f32 %v1526, %v2022
    %v2024 = vtanh.pop %v2023
    %v2025 = vsub.f32 1.0, %v2018
    %v2026 = vmul.f32 %v2025, %v2024
    %v2027 = vrot.slane %v1908, 6
    %v2029 = vmul.f32 %v2018, %v2027
    %v2030 = vadd.f32 %v2026, %v2029
    %v2032 = vrot.slane %v2030, 6
    %v2033 = vsel %vm273, %v2032, 0
    %2035 = vmatpush.msra.mxu0 0.0
    %2036 = vmatpush.msra.mxu0 0.0
    %2037 = vmatpush.msra.mxu0 0.0
    %2038 = vmatpush.msra.mxu0 0.0
    %2039 = vmatpush.msra.mxu0 0.0
    %2040 = vmatpush.msra.mxu0 0.0
    %2041 = vmatpush.msra.mxu0 0.0
    %2042 = vmatpush.msra.mxu0 0.0
    %2043 = vmatpush.msra.mxu0 0.0
    %2044 = vmatpush.msra.mxu0 0.0
    %2045 = vmatpush.msra.mxu0 0.0
    %2046 = vmatpush.msra.mxu0 0.0
    %2047 = vmatpush.msra.mxu0 %v1534
    %2048 = vmatpush.msra.mxu0 %v1533
    %2049 = vmatpush.msra.mxu0 %v1532
    %2050 = vmatpush.msra.mxu0 %v1531
    %2051 = vmatmul.f32.gmra.mxu0 %v2033
    %v2052 = vpop.f32.mrf.mxu0
    %v2053 = vadd.f32 %v1537, %v2052
    %2054 = vdwg.mxu0
    %2055 = vmatpush.msra.mxu0 0.0
    %2056 = vmatpush.msra.mxu0 0.0
    %2057 = vmatpush.msra.mxu0 0.0
    %2058 = vmatpush.msra.mxu0 0.0
    %2059 = vmatpush.msra.mxu0 0.0
    %2060 = vmatpush.msra.mxu0 0.0
    %2061 = vmatpush.msra.mxu0 0.0
    %2062 = vmatpush.msra.mxu0 0.0
    %2063 = vmatpush.msra.mxu0 0.0
    %2064 = vmatpush.msra.mxu0 0.0
    %2065 = vmatpush.msra.mxu0 0.0
    %2066 = vmatpush.msra.mxu0 0.0
    %2067 = vmatpush.msra.mxu0 %v1563
    %2068 = vmatpush.msra.mxu0 %v1562
    %2069 = vmatpush.msra.mxu0 %v1561
    %2070 = vmatpush.msra.mxu0 %v1560
    %2071 = vmatmul.f32.gmra.mxu0 %v2033
    %v2072 = vpop.f32.mrf.mxu0
    %v2073 = vadd.f32 %v1567, %v2072
    %2074 = vdwg.mxu0
    %2075 = vmatpush.msra.mxu0 0.0
    %2076 = vmatpush.msra.mxu0 0.0
    %2077 = vmatpush.msra.mxu0 0.0
    %2078 = vmatpush.msra.mxu0 0.0
    %2079 = vmatpush.msra.mxu0 0.0
    %2080 = vmatpush.msra.mxu0 0.0
    %2081 = vmatpush.msra.mxu0 0.0
    %2082 = vmatpush.msra.mxu0 0.0
    %2083 = vmatpush.msra.mxu0 0.0
    %2084 = vmatpush.msra.mxu0 0.0
    %2085 = vmatpush.msra.mxu0 0.0
    %2086 = vmatpush.msra.mxu0 0.0
    %2087 = vmatpush.msra.mxu0 %v1593
    %2088 = vmatpush.msra.mxu0 %v1592
    %2089 = vmatpush.msra.mxu0 %v1591
    %2090 = vmatpush.msra.mxu0 %v1590
    %2091 = vmatmul.f32.gmra.mxu0 %v2033
    %v2092 = vpop.f32.mrf.mxu0
    %v2093 = vadd.f32 %v1597, %v2092
    %2094 = vdwg.mxu0
    %v2095 = vadd.f32 %v1463, %v2053
    %v2096 = vxor.u32 %v2095, 2147483648
    %v2097 = vmul.f32 %v2096, 1.442695
    %v2098 = vpow.pop %v2097
    %v2099 = vadd.f32 %v2098, 1.0
    %v2100 = vrcp.pop %v2099
    %v2101 = vmul.f32 %v2099, %v2100
    %v2102 = vsub.f32 1.0, %v2101
    %v2103 = vmul.f32 %v2100, %v2102
    %v2104 = vadd.f32 %v2100, %v2103
    %vm2105 = vweird.f32 %v2099
    %vm2106 = vweird.f32 %v2100
    %vm2107 = vmor %vm2105, %vm2106
    %v2108 = vsel %vm2107, %v2100, %v2104
    %v2109 = vand.u32 2147483647, %v2099
    %vm2110 = vcmp.eq.f32.partialorder %v2109, 8.507059e+37
    %v2111 = vand.u32 %v2099, 2147483648
    %v2112 = vor.u32 1.1754944e-38, %v2111
    %v2113 = vsel %vm2110, %v2112, %v2108
    %v2114 = vmul.f32 1.0, %v2113
    %v2115 = vadd.f32 %v1496, %v2073
    %v2116 = vxor.u32 %v2115, 2147483648
    %v2117 = vmul.f32 %v2116, 1.442695
    %v2118 = vpow.pop %v2117
    %v2119 = vadd.f32 %v2118, 1.0
    %v2120 = vrcp.pop %v2119
    %v2121 = vmul.f32 %v2119, %v2120
    %v2122 = vsub.f32 1.0, %v2121
    %v2123 = vmul.f32 %v2120, %v2122
    %v2124 = vadd.f32 %v2120, %v2123
    %vm2125 = vweird.f32 %v2119
    %vm2126 = vweird.f32 %v2120
    %vm2127 = vmor %vm2125, %vm2126
    %v2128 = vsel %vm2127, %v2120, %v2124
    %v2129 = vand.u32 2147483647, %v2119
    %vm2130 = vcmp.eq.f32.partialorder %v2129, 8.507059e+37
    %v2131 = vand.u32 %v2119, 2147483648
    %v2132 = vor.u32 1.1754944e-38, %v2131
    %v2133 = vsel %vm2130, %v2132, %v2128
    %v2134 = vmul.f32 1.0, %v2133
    %v2135 = vmul.f32 %v2114, %v2093
    %v2136 = vadd.f32 %v1529, %v2135
    %v2137 = vtanh.pop %v2136
    %v2138 = vsub.f32 1.0, %v2134
    %v2139 = vmul.f32 %v2138, %v2137
    %v2141 = vmul.f32 %v2134, %v2032
    %v2142 = vadd.f32 %v2139, %v2141
    %v2144 = vsel %vm273, %v2142, 0
    %2146 = vmatpush.msra.mxu0 0.0
    %2147 = vmatpush.msra.mxu0 0.0
    %2148 = vmatpush.msra.mxu0 0.0
    %2149 = vmatpush.msra.mxu0 0.0
    %2150 = vmatpush.msra.mxu0 0.0
    %2151 = vmatpush.msra.mxu0 0.0
    %2152 = vmatpush.msra.mxu0 0.0
    %2153 = vmatpush.msra.mxu0 0.0
    %2154 = vmatpush.msra.mxu0 0.0
    %2155 = vmatpush.msra.mxu0 0.0
    %2156 = vmatpush.msra.mxu0 0.0
    %2157 = vmatpush.msra.mxu0 0.0
    %2158 = vmatpush.msra.mxu0 %v1534
    %2159 = vmatpush.msra.mxu0 %v1533
    %2160 = vmatpush.msra.mxu0 %v1532
    %2161 = vmatpush.msra.mxu0 %v1531
    %2162 = vmatmul.f32.gmra.mxu0 %v2144
    %v2163 = vpop.f32.mrf.mxu0
    %v2164 = vadd.f32 %v1537, %v2163
    %2165 = vdwg.mxu0
    %2166 = vmatpush.msra.mxu0 0.0
    %2167 = vmatpush.msra.mxu0 0.0
    %2168 = vmatpush.msra.mxu0 0.0
    %2169 = vmatpush.msra.mxu0 0.0
    %2170 = vmatpush.msra.mxu0 0.0
    %2171 = vmatpush.msra.mxu0 0.0
    %2172 = vmatpush.msra.mxu0 0.0
    %2173 = vmatpush.msra.mxu0 0.0
    %2174 = vmatpush.msra.mxu0 0.0
    %2175 = vmatpush.msra.mxu0 0.0
    %2176 = vmatpush.msra.mxu0 0.0
    %2177 = vmatpush.msra.mxu0 0.0
    %2178 = vmatpush.msra.mxu0 %v1563
    %2179 = vmatpush.msra.mxu0 %v1562
    %2180 = vmatpush.msra.mxu0 %v1561
    %2181 = vmatpush.msra.mxu0 %v1560
    %2182 = vmatmul.f32.gmra.mxu0 %v2144
    %v2183 = vpop.f32.mrf.mxu0
    %v2184 = vadd.f32 %v1567, %v2183
    %2185 = vdwg.mxu0
    %2186 = vmatpush.msra.mxu0 0.0
    %2187 = vmatpush.msra.mxu0 0.0
    %2188 = vmatpush.msra.mxu0 0.0
    %2189 = vmatpush.msra.mxu0 0.0
    %2190 = vmatpush.msra.mxu0 0.0
    %2191 = vmatpush.msra.mxu0 0.0
    %2192 = vmatpush.msra.mxu0 0.0
    %2193 = vmatpush.msra.mxu0 0.0
    %2194 = vmatpush.msra.mxu0 0.0
    %2195 = vmatpush.msra.mxu0 0.0
    %2196 = vmatpush.msra.mxu0 0.0
    %2197 = vmatpush.msra.mxu0 0.0
    %2198 = vmatpush.msra.mxu0 %v1593
    %2199 = vmatpush.msra.mxu0 %v1592
    %2200 = vmatpush.msra.mxu0 %v1591
    %2201 = vmatpush.msra.mxu0 %v1590
    %2202 = vmatmul.f32.gmra.mxu0 %v2144
    %v2203 = vpop.f32.mrf.mxu0
    %v2204 = vadd.f32 %v1597, %v2203
    %2205 = vdwg.mxu0
    %v2207 = vrot.slane %v2164, 6
    %v2209 = vadd.f32 %v1463, %v2207
    %v2210 = vxor.u32 %v2209, 2147483648
    %v2211 = vmul.f32 %v2210, 1.442695
    %v2212 = vpow.pop %v2211
    %v2213 = vadd.f32 %v2212, 1.0
    %v2214 = vrcp.pop %v2213
    %v2215 = vmul.f32 %v2213, %v2214
    %v2216 = vsub.f32 1.0, %v2215
    %v2217 = vmul.f32 %v2214, %v2216
    %v2218 = vadd.f32 %v2214, %v2217
    %vm2219 = vweird.f32 %v2213
    %vm2220 = vweird.f32 %v2214
    %vm2221 = vmor %vm2219, %vm2220
    %v2222 = vsel %vm2221, %v2214, %v2218
    %v2223 = vand.u32 2147483647, %v2213
    %vm2224 = vcmp.eq.f32.partialorder %v2223, 8.507059e+37
    %v2225 = vand.u32 %v2213, 2147483648
    %v2226 = vor.u32 1.1754944e-38, %v2225
    %v2227 = vsel %vm2224, %v2226, %v2222
    %v2228 = vmul.f32 1.0, %v2227
    %v2230 = vrot.slane %v2184, 6
    %v2232 = vadd.f32 %v1496, %v2230
    %v2233 = vxor.u32 %v2232, 2147483648
    %v2234 = vmul.f32 %v2233, 1.442695
    %v2235 = vpow.pop %v2234
    %v2236 = vadd.f32 %v2235, 1.0
    %v2237 = vrcp.pop %v2236
    %v2238 = vmul.f32 %v2236, %v2237
    %v2239 = vsub.f32 1.0, %v2238
    %v2240 = vmul.f32 %v2237, %v2239
    %v2241 = vadd.f32 %v2237, %v2240
    %vm2242 = vweird.f32 %v2236
    %vm2243 = vweird.f32 %v2237
    %vm2244 = vmor %vm2242, %vm2243
    %v2245 = vsel %vm2244, %v2237, %v2241
    %v2246 = vand.u32 2147483647, %v2236
    %vm2247 = vcmp.eq.f32.partialorder %v2246, 8.507059e+37
    %v2248 = vand.u32 %v2236, 2147483648
    %v2249 = vor.u32 1.1754944e-38, %v2248
    %v2250 = vsel %vm2247, %v2249, %v2245
    %v2251 = vmul.f32 1.0, %v2250
    %v2253 = vrot.slane %v2204, 6
    %v2255 = vmul.f32 %v2228, %v2253
    %v2256 = vadd.f32 %v1529, %v2255
    %v2257 = vtanh.pop %v2256
    %v2258 = vsub.f32 1.0, %v2251
    %v2259 = vmul.f32 %v2258, %v2257
    %v2260 = vrot.slane %v2142, 6
    %v2262 = vmul.f32 %v2251, %v2260
    %v2263 = vadd.f32 %v2259, %v2262
    %v2265 = vrot.slane %v2263, 2
    %v2266 = vsel %vm273, %v2265, 0
    %2268 = vmatpush.msra.mxu0 0.0
    %2269 = vmatpush.msra.mxu0 0.0
    %2270 = vmatpush.msra.mxu0 0.0
    %2271 = vmatpush.msra.mxu0 0.0
    %2272 = vmatpush.msra.mxu0 0.0
    %2273 = vmatpush.msra.mxu0 0.0
    %2274 = vmatpush.msra.mxu0 0.0
    %2275 = vmatpush.msra.mxu0 0.0
    %2276 = vmatpush.msra.mxu0 0.0
    %2277 = vmatpush.msra.mxu0 0.0
    %2278 = vmatpush.msra.mxu0 0.0
    %2279 = vmatpush.msra.mxu0 0.0
    %2280 = vmatpush.msra.mxu0 %v1534
    %2281 = vmatpush.msra.mxu0 %v1533
    %2282 = vmatpush.msra.mxu0 %v1532
    %2283 = vmatpush.msra.mxu0 %v1531
    %2284 = vmatmul.f32.gmra.mxu0 %v2266
    %v2285 = vpop.f32.mrf.mxu0
    %v2286 = vadd.f32 %v1537, %v2285
    %2287 = vdwg.mxu0
    %2288 = vmatpush.msra.mxu0 0.0
    %2289 = vmatpush.msra.mxu0 0.0
    %2290 = vmatpush.msra.mxu0 0.0
    %2291 = vmatpush.msra.mxu0 0.0
    %2292 = vmatpush.msra.mxu0 0.0
    %2293 = vmatpush.msra.mxu0 0.0
    %2294 = vmatpush.msra.mxu0 0.0
    %2295 = vmatpush.msra.mxu0 0.0
    %2296 = vmatpush.msra.mxu0 0.0
    %2297 = vmatpush.msra.mxu0 0.0
    %2298 = vmatpush.msra.mxu0 0.0
    %2299 = vmatpush.msra.mxu0 0.0
    %2300 = vmatpush.msra.mxu0 %v1563
    %2301 = vmatpush.msra.mxu0 %v1562
    %2302 = vmatpush.msra.mxu0 %v1561
    %2303 = vmatpush.msra.mxu0 %v1560
    %2304 = vmatmul.f32.gmra.mxu0 %v2266
    %v2305 = vpop.f32.mrf.mxu0
    %v2306 = vadd.f32 %v1567, %v2305
    %2307 = vdwg.mxu0
    %2308 = vmatpush.msra.mxu0 0.0
    %2309 = vmatpush.msra.mxu0 0.0
    %2310 = vmatpush.msra.mxu0 0.0
    %2311 = vmatpush.msra.mxu0 0.0
    %2312 = vmatpush.msra.mxu0 0.0
    %2313 = vmatpush.msra.mxu0 0.0
    %2314 = vmatpush.msra.mxu0 0.0
    %2315 = vmatpush.msra.mxu0 0.0
    %2316 = vmatpush.msra.mxu0 0.0
    %2317 = vmatpush.msra.mxu0 0.0
    %2318 = vmatpush.msra.mxu0 0.0
    %2319 = vmatpush.msra.mxu0 0.0
    %2320 = vmatpush.msra.mxu0 %v1593
    %2321 = vmatpush.msra.mxu0 %v1592
    %2322 = vmatpush.msra.mxu0 %v1591
    %2323 = vmatpush.msra.mxu0 %v1590
    %2324 = vmatmul.f32.gmra.mxu0 %v2266
    %v2325 = vpop.f32.mrf.mxu0
    %v2326 = vadd.f32 %v1597, %v2325
    %2327 = vdwg.mxu0
    %v2329 = vrot.slane %v2286, 4
    %v2331 = vadd.f32 %v1463, %v2329
    %v2332 = vxor.u32 %v2331, 2147483648
    %v2333 = vmul.f32 %v2332, 1.442695
    %v2334 = vpow.pop %v2333
    %v2335 = vadd.f32 %v2334, 1.0
    %v2336 = vrcp.pop %v2335
    %v2337 = vmul.f32 %v2335, %v2336
    %v2338 = vsub.f32 1.0, %v2337
    %v2339 = vmul.f32 %v2336, %v2338
    %v2340 = vadd.f32 %v2336, %v2339
    %vm2341 = vweird.f32 %v2335
    %vm2342 = vweird.f32 %v2336
    %vm2343 = vmor %vm2341, %vm2342
    %v2344 = vsel %vm2343, %v2336, %v2340
    %v2345 = vand.u32 2147483647, %v2335
    %vm2346 = vcmp.eq.f32.partialorder %v2345, 8.507059e+37
    %v2347 = vand.u32 %v2335, 2147483648
    %v2348 = vor.u32 1.1754944e-38, %v2347
    %v2349 = vsel %vm2346, %v2348, %v2344
    %v2350 = vmul.f32 1.0, %v2349
    %v2352 = vrot.slane %v2306, 4
    %v2354 = vadd.f32 %v1496, %v2352
    %v2355 = vxor.u32 %v2354, 2147483648
    %v2356 = vmul.f32 %v2355, 1.442695
    %v2357 = vpow.pop %v2356
    %v2358 = vadd.f32 %v2357, 1.0
    %v2359 = vrcp.pop %v2358
    %v2360 = vmul.f32 %v2358, %v2359
    %v2361 = vsub.f32 1.0, %v2360
    %v2362 = vmul.f32 %v2359, %v2361
    %v2363 = vadd.f32 %v2359, %v2362
    %vm2364 = vweird.f32 %v2358
    %vm2365 = vweird.f32 %v2359
    %vm2366 = vmor %vm2364, %vm2365
    %v2367 = vsel %vm2366, %v2359, %v2363
    %v2368 = vand.u32 2147483647, %v2358
    %vm2369 = vcmp.eq.f32.partialorder %v2368, 8.507059e+37
    %v2370 = vand.u32 %v2358, 2147483648
    %v2371 = vor.u32 1.1754944e-38, %v2370
    %v2372 = vsel %vm2369, %v2371, %v2367
    %v2373 = vmul.f32 1.0, %v2372
    %v2375 = vrot.slane %v2326, 4
    %v2377 = vmul.f32 %v2350, %v2375
    %v2378 = vadd.f32 %v1529, %v2377
    %v2379 = vtanh.pop %v2378
    %v2380 = vsub.f32 1.0, %v2373
    %v2381 = vmul.f32 %v2380, %v2379
    %v2382 = vrot.slane %v2263, 6
    %v2384 = vmul.f32 %v2373, %v2382
    %v2385 = vadd.f32 %v2381, %v2384
    %v2387 = vrot.slane %v2385, 4
    %v2388 = vsel %vm273, %v2387, 0
    %2390 = vmatpush.msra.mxu0 0.0
    %2391 = vmatpush.msra.mxu0 0.0
    %2392 = vmatpush.msra.mxu0 0.0
    %2393 = vmatpush.msra.mxu0 0.0
    %2394 = vmatpush.msra.mxu0 0.0
    %2395 = vmatpush.msra.mxu0 0.0
    %2396 = vmatpush.msra.mxu0 0.0
    %2397 = vmatpush.msra.mxu0 0.0
    %2398 = vmatpush.msra.mxu0 0.0
    %2399 = vmatpush.msra.mxu0 0.0
    %2400 = vmatpush.msra.mxu0 0.0
    %2401 = vmatpush.msra.mxu0 0.0
    %2402 = vmatpush.msra.mxu0 %v1534
    %2403 = vmatpush.msra.mxu0 %v1533
    %2404 = vmatpush.msra.mxu0 %v1532
    %2405 = vmatpush.msra.mxu0 %v1531
    %2406 = vmatmul.f32.gmra.mxu0 %v2388
    %v2407 = vpop.f32.mrf.mxu0
    %v2408 = vadd.f32 %v1537, %v2407
    %2409 = vdwg.mxu0
    %2410 = vmatpush.msra.mxu0 0.0
    %2411 = vmatpush.msra.mxu0 0.0
    %2412 = vmatpush.msra.mxu0 0.0
    %2413 = vmatpush.msra.mxu0 0.0
    %2414 = vmatpush.msra.mxu0 0.0
    %2415 = vmatpush.msra.mxu0 0.0
    %2416 = vmatpush.msra.mxu0 0.0
    %2417 = vmatpush.msra.mxu0 0.0
    %2418 = vmatpush.msra.mxu0 0.0
    %2419 = vmatpush.msra.mxu0 0.0
    %2420 = vmatpush.msra.mxu0 0.0
    %2421 = vmatpush.msra.mxu0 0.0
    %2422 = vmatpush.msra.mxu0 %v1563
    %2423 = vmatpush.msra.mxu0 %v1562
    %2424 = vmatpush.msra.mxu0 %v1561
    %2425 = vmatpush.msra.mxu0 %v1560
    %2426 = vmatmul.f32.gmra.mxu0 %v2388
    %v2427 = vpop.f32.mrf.mxu0
    %v2428 = vadd.f32 %v1567, %v2427
    %2429 = vdwg.mxu0
    %2430 = vmatpush.msra.mxu0 0.0
    %2431 = vmatpush.msra.mxu0 0.0
    %2432 = vmatpush.msra.mxu0 0.0
    %2433 = vmatpush.msra.mxu0 0.0
    %2434 = vmatpush.msra.mxu0 0.0
    %2435 = vmatpush.msra.mxu0 0.0
    %2436 = vmatpush.msra.mxu0 0.0
    %2437 = vmatpush.msra.mxu0 0.0
    %2438 = vmatpush.msra.mxu0 0.0
    %2439 = vmatpush.msra.mxu0 0.0
    %2440 = vmatpush.msra.mxu0 0.0
    %2441 = vmatpush.msra.mxu0 0.0
    %2442 = vmatpush.msra.mxu0 %v1593
    %2443 = vmatpush.msra.mxu0 %v1592
    %2444 = vmatpush.msra.mxu0 %v1591
    %2445 = vmatpush.msra.mxu0 %v1590
    %2446 = vmatmul.f32.gmra.mxu0 %v2388
    %v2447 = vpop.f32.mrf.mxu0
    %v2448 = vadd.f32 %v1597, %v2447
    %2449 = vdwg.mxu0
    %v2451 = vrot.slane %v2408, 2
    %v2453 = vadd.f32 %v1463, %v2451
    %v2454 = vxor.u32 %v2453, 2147483648
    %v2455 = vmul.f32 %v2454, 1.442695
    %v2456 = vpow.pop %v2455
    %v2457 = vadd.f32 %v2456, 1.0
    %v2458 = vrcp.pop %v2457
    %v2459 = vmul.f32 %v2457, %v2458
    %v2460 = vsub.f32 1.0, %v2459
    %v2461 = vmul.f32 %v2458, %v2460
    %v2462 = vadd.f32 %v2458, %v2461
    %vm2463 = vweird.f32 %v2457
    %vm2464 = vweird.f32 %v2458
    %vm2465 = vmor %vm2463, %vm2464
    %v2466 = vsel %vm2465, %v2458, %v2462
    %v2467 = vand.u32 2147483647, %v2457
    %vm2468 = vcmp.eq.f32.partialorder %v2467, 8.507059e+37
    %v2469 = vand.u32 %v2457, 2147483648
    %v2470 = vor.u32 1.1754944e-38, %v2469
    %v2471 = vsel %vm2468, %v2470, %v2466
    %v2472 = vmul.f32 1.0, %v2471
    %v2474 = vrot.slane %v2428, 2
    %v2476 = vadd.f32 %v1496, %v2474
    %v2477 = vxor.u32 %v2476, 2147483648
    %v2478 = vmul.f32 %v2477, 1.442695
    %v2479 = vpow.pop %v2478
    %v2480 = vadd.f32 %v2479, 1.0
    %v2481 = vrcp.pop %v2480
    %v2482 = vmul.f32 %v2480, %v2481
    %v2483 = vsub.f32 1.0, %v2482
    %v2484 = vmul.f32 %v2481, %v2483
    %v2485 = vadd.f32 %v2481, %v2484
    %vm2486 = vweird.f32 %v2480
    %vm2487 = vweird.f32 %v2481
    %vm2488 = vmor %vm2486, %vm2487
    %v2489 = vsel %vm2488, %v2481, %v2485
    %v2490 = vand.u32 2147483647, %v2480
    %vm2491 = vcmp.eq.f32.partialorder %v2490, 8.507059e+37
    %v2492 = vand.u32 %v2480, 2147483648
    %v2493 = vor.u32 1.1754944e-38, %v2492
    %v2494 = vsel %vm2491, %v2493, %v2489
    %v2495 = vmul.f32 1.0, %v2494
    %v2497 = vrot.slane %v2448, 2
    %v2499 = vmul.f32 %v2472, %v2497
    %v2500 = vadd.f32 %v1529, %v2499
    %v2501 = vtanh.pop %v2500
    %v2502 = vsub.f32 1.0, %v2495
    %v2503 = vmul.f32 %v2502, %v2501
    %v2504 = vrot.slane %v2385, 6
    %v2506 = vmul.f32 %v2495, %v2504
    %v2507 = vadd.f32 %v2503, %v2506
    %v2508 = vld [vmem:[%s9] sm:$0xff]
    %v2509 = vld [vmem:[%s9 + $0x8] sm:$0xff]
    %v2510 = vld [vmem:[%s9 + $0x10] sm:$0xff]
    %v2511 = vld [vmem:[%s9 + $0x18] sm:$0xff]
    %v2512 = vld [vmem:[#allocation3] sm:$0x1]
    %v2514 = vperm.slane %v2512, 0
    %v2517 = vrot.slane %v2507, 6
    %v2518 = vsel %vm273, %v2517, 0
    %2520 = vmatpush.msra.mxu0 0.0
    %2521 = vmatpush.msra.mxu0 0.0
    %2522 = vmatpush.msra.mxu0 0.0
    %2523 = vmatpush.msra.mxu0 0.0
    %2524 = vmatpush.msra.mxu0 0.0
    %2525 = vmatpush.msra.mxu0 0.0
    %2526 = vmatpush.msra.mxu0 0.0
    %2527 = vmatpush.msra.mxu0 0.0
    %2528 = vmatpush.msra.mxu0 0.0
    %2529 = vmatpush.msra.mxu0 0.0
    %2530 = vmatpush.msra.mxu0 0.0
    %2531 = vmatpush.msra.mxu0 0.0
    %2532 = vmatpush.msra.mxu0 %v2511
    %2533 = vmatpush.msra.mxu0 %v2510
    %2534 = vmatpush.msra.mxu0 %v2509
    %2535 = vmatpush.msra.mxu0 %v2508
    %2536 = vmatmul.f32.gmra.mxu0 %v2518
    %v2537 = vpop.f32.mrf.mxu0
    %v2538 = vadd.f32 %v2514, %v2537
    %2539 = vdwg.mxu0
    %vm2540 = vcmask 1024
    %2541 = vst.msk [vmem:[%s11] sm:$0x3] %vm2540, %v2538
    // Predicated region
    $region58: #{tpu_custom_call.1} parent=1 // pred_check
      _
    $region59: #{tpu_custom_call.1} parent=1 // pred_check_branch
      %2543 = sbr.rel (0) target = $region61
    $region60: #{tpu_custom_call.1} parent=1 // pred_region
      _
    $region61: #{tpu_custom_call.1} parent=1 // pred_fallthru
      _
    // Predicated region
    $region62: #{tpu_custom_call.1} parent=1 // pred_check
      _
    $region63: #{tpu_custom_call.1} parent=1 // pred_check_branch
      %2545 = sbr.rel (0) target = $region65
    $region64: #{tpu_custom_call.1} parent=1 // pred_region
      _
    $region65: #{tpu_custom_call.1} parent=1 // pred_fallthru
      _
    %2546 = vsyncpa [#allocation5], 1
    %2547 = vsyncpa [#allocation7], 1

</llo_original>
